<compile_context>
chip_gen: v5e
topology: v5e:2x2
jax: 0.10.0
libtpu: 0.0.40
codegen_flags: <defaults>
</compile_context>

<pallas_src>
import jax
import jax.numpy as jnp
import numpy as np
from jax.experimental import pallas as pl
from jax.experimental.pallas import tpu as pltpu


def _fold_params(prm, mxu_dtype=jnp.bfloat16):
    """Fold eval-mode BN scales into the conv weights (exact rewrite)."""
    w_exp = (prm["w_expand"] * prm["bn_expand"][0][None, :]).astype(mxu_dtype)
    b_exp = prm["bn_expand"][1:2].astype(jnp.float32)            # (1, C_exp)
    w_dw = (prm["w_dw"] * prm["bn_dw"][0][None, :]).astype(jnp.float32)
    b_dw = prm["bn_dw"][1:2].astype(jnp.float32)                 # (1, C_exp)
    # Project weight in bf16 so the biggest MXU op runs at full bf16 rate.
    w_proj = (prm["w_proj"] * prm["bn_proj"][0][None, :]).astype(mxu_dtype)
    b_proj = prm["bn_proj"][1:2].astype(jnp.float32)             # (1, C_out)
    return (w_exp, b_exp, w_dw, b_dw,
            prm["w_se_reduce"].astype(jnp.float32),
            prm["b_se_reduce"].astype(jnp.float32),
            prm["w_se_expand"].astype(jnp.float32),
            prm["b_se_expand"].astype(jnp.float32),
            w_proj, b_proj)


def mbconv_pallas(x, prm, *, kernel_size, stride, has_shortcut, batch_block=None):
    """x: (N, H, W, C_in) NHWC.  Returns (N, H_out, W_out, C_out) in bf16."""
    N, H, W, C_in = x.shape
    K = kernel_size
    p = (K - 1) // 2
    C_exp = prm["w_expand"].shape[1]
    C_sq = prm["w_se_reduce"].shape[1]
    C_out = prm["w_proj"].shape[1]
    if stride == 1:
        H_out, W_out = H, W
    else:
        assert stride == 2 and H % 2 == 0 and W % 2 == 0
        H_out, W_out = H // 2, W // 2
    Hp, Wp = H + 2 * p, W + 2 * p

    # Block Nb images per grid step so each 1x1 conv sees M = Nb*H*W rows, but
    # cap it so the 'parallel' grid has >= 2 steps (v7x megacore + pipelining).
    if batch_block is None:
        target = max(1, 512 // (H * W))
        batch_block = min(N, target)
        if N >= 2:
            batch_block = min(batch_block, max(1, N // 2))
        while N % batch_block:
            batch_block -= 1
    Nb = batch_block
    assert N % Nb == 0

    # Strip height for the register-resident depthwise accumulation.
    strip_h = 1
    for cand in range(min(8, H_out), 0, -1):
        if H_out % cand == 0:
            strip_h = cand
            break
    n_strips = H_out // strip_h

    # Lane-dense output slab: last dim a big multiple of 128 -> unmasked stores.
    lane_dense_out = (H_out % 8 == 0) and ((W_out * C_out) % 128 == 0)

    # bf16 scratch halves vld/vst traffic on v6e/v7x; still correct on v5e.
    # TODO(synk): switch to f32 scratch on v5e (no bf16 VPU) if it matters there.
    scratch_dtype = jnp.bfloat16

    folded = _fold_params(prm)
    x = x.astype(jnp.bfloat16)

    def kernel(x_ref, w_exp_ref, b_exp_ref, w_dw_ref, b_dw_ref,
               w_ser_ref, b_ser_ref, w_see_ref, b_see_ref,
               w_proj_ref, b_proj_ref, out_ref, pad_ref, dw_ref, pool_ref):
        xin = x_ref[...]                                         # (Nb,H,W,C_in) bf16

        # ---- expand 1x1 conv (BN scale folded into weight) + bias + SiLU ----
        t = jnp.dot(xin.reshape(Nb * H * W, C_in), w_exp_ref[...],
                    preferred_element_type=jnp.float32)          # bf16 MXU, f32 acc
        t = t + b_exp_ref[0, :]
        t = t * jax.nn.sigmoid(t)                                # SiLU in f32

        # ---- stage into padded depthwise scratch (bf16) ----
        # Zero only the border, every step (stays correct if the parallel batch
        # axis is sharded across cores); the interior is fully overwritten.
        if p > 0:
            zrow = jnp.zeros((Nb, p, Wp, C_exp), scratch_dtype)
            pad_ref[:, 0:p, :, :] = zrow
            pad_ref[:, p + H:Hp, :, :] = zrow
            zcol = jnp.zeros((Nb, H, p, C_exp), scratch_dtype)
            pad_ref[:, p:p + H, 0:p, :] = zcol
            pad_ref[:, p:p + H, p + W:Wp, :] = zcol
        pad_ref[:, p:p + H, p:p + W, :] = (
            t.reshape(Nb, H, W, C_exp).astype(scratch_dtype))

        # ---- depthwise KxK conv (BN scale folded in), strip-wise in registers ----
        w_dw = w_dw_ref[...]                                     # (K*K, C_exp) f32
        w_taps = [w_dw[ti, :] for ti in range(K * K)]            # hoisted tap rows
        b_dw = b_dw_ref[0, :]                                    # (C_exp,)
        pool_ref[...] = jnp.zeros((Nb, C_exp), jnp.float32)

        @pl.loop(0, n_strips)
        def _(s):
            oh0 = pl.multiple_of(s * strip_h, strip_h)
            acc = None
            for ki in range(K):
                if stride == 1:
                    # one row-strip load per ki; kj shifts are value slices
                    row = pad_ref[:, pl.ds(oh0 + ki, strip_h), :, :].astype(jnp.float32)
                for kj in range(K):
                    if stride == 1:
                        win = row[:, :, kj:kj + W_out, :]
                    else:  # strided windows: compute only the kept outputs
                        win = pad_ref[:, pl.ds(2 * oh0 + ki, strip_h, stride=2),
                                      pl.ds(kj, W_out, stride=2), :].astype(jnp.float32)
                    term = win * w_taps[ki * K + kj]
                    # init from first tap + folded BN bias (no zeros pass)
                    acc = (term + b_dw) if acc is None else (acc + term)
            dws = acc * jax.nn.sigmoid(acc)                      # SiLU, f32 registers
            dw_ref[:, pl.ds(oh0, strip_h), :, :] = dws.astype(scratch_dtype)
            pool_ref[...] += jnp.sum(dws, axis=(1, 2))           # SE pooling partial

        # ---- Squeeze-Excite gate (tiny matmuls, f32) ----
        pooled = pool_ref[...] * (1.0 / (H_out * W_out))         # (Nb, C_exp)
        red = jnp.dot(pooled, w_ser_ref[...],
                      preferred_element_type=jnp.float32) + b_ser_ref[0, :]
        red = red * jax.nn.sigmoid(red)                          # (Nb, C_sq)
        gate = jax.nn.sigmoid(
            jnp.dot(red, w_see_ref[...],
                    preferred_element_type=jnp.float32) + b_see_ref[0, :])

        # ---- project 1x1 conv: bf16 MXU with f32 accumulation ----
        dw_all = dw_ref[...].reshape(Nb, H_out * W_out, C_exp)   # bf16
        # gate stays lane-aligned with the channel axis (no relayout needed)
        scaled = dw_all * gate.astype(jnp.bfloat16)[:, None, :]
        proj = jnp.dot(scaled.reshape(Nb * H_out * W_out, C_exp), w_proj_ref[...],
                       preferred_element_type=jnp.float32)
        proj = proj + b_proj_ref[0, :]
        res = proj.reshape(Nb, H_out, W_out, C_out)

        if has_shortcut:
            res = res + xin.astype(jnp.float32)  # DropPath == identity in eval

        res = res.astype(out_ref.dtype)
        if lane_dense_out:
            out_ref[...] = res.reshape(Nb, H_out, W_out * C_out)
        else:
            out_ref[...] = res

    if lane_dense_out:
        out_shape_flat = (N, H_out, W_out * C_out)
        out_spec = pl.BlockSpec((Nb, H_out, W_out * C_out), lambda b: (b, 0, 0))
    else:
        out_shape_flat = (N, H_out, W_out, C_out)
        out_spec = pl.BlockSpec((Nb, H_out, W_out, C_out), lambda b: (b, 0, 0, 0))

    grid_spec = pltpu.PrefetchScalarGridSpec(
        num_scalar_prefetch=0,
        grid=(N // Nb,),
        in_specs=[
            pl.BlockSpec((Nb, H, W, C_in), lambda b: (b, 0, 0, 0)),
            pl.BlockSpec((C_in, C_exp), lambda b: (0, 0)),
            pl.BlockSpec((1, C_exp), lambda b: (0, 0)),
            pl.BlockSpec((K * K, C_exp), lambda b: (0, 0)),
            pl.BlockSpec((1, C_exp), lambda b: (0, 0)),
            pl.BlockSpec((C_exp, C_sq), lambda b: (0, 0)),
            pl.BlockSpec((1, C_sq), lambda b: (0, 0)),
            pl.BlockSpec((C_sq, C_exp), lambda b: (0, 0)),
            pl.BlockSpec((1, C_exp), lambda b: (0, 0)),
            pl.BlockSpec((C_exp, C_out), lambda b: (0, 0)),
            pl.BlockSpec((1, C_out), lambda b: (0, 0)),
        ],
        out_specs=out_spec,
        scratch_shapes=[
            pltpu.VMEM((Nb, Hp, Wp, C_exp), scratch_dtype),       # padded expand out
            pltpu.VMEM((Nb, H_out, W_out, C_exp), scratch_dtype), # dw output
            pltpu.VMEM((Nb, C_exp), jnp.float32),                 # SE pooling partials
        ],
    )

    out = pl.pallas_call(
        kernel,
        out_shape=jax.ShapeDtypeStruct(out_shape_flat, x.dtype),
        grid_spec=grid_spec,
        compiler_params=pltpu.CompilerParams(
            dimension_semantics=("parallel",),
            # 32 MiB is safe on v5e/v6e (128 MiB) and v7x (64 MiB); far above
            # this kernel's actual footprint at these shapes.
            vmem_limit_bytes=32 * 1024 * 1024),
    )(x, *folded)
    return out.reshape(N, H_out, W_out, C_out)


def mbconv_ref(x, prm, kernel_size, stride, has_shortcut):
    """Pure-JAX f32 reference (same math as the PyTorch module in eval mode)."""
    x = x.astype(jnp.float32)
    N, H, W, C_in = x.shape
    K = kernel_size
    p = (K - 1) // 2
    t = jnp.einsum("nhwc,cd->nhwd", x, prm["w_expand"])
    t = t * prm["bn_expand"][0] + prm["bn_expand"][1]
    t = t * jax.nn.sigmoid(t)
    C_exp = t.shape[-1]
    tp = jnp.pad(t, ((0, 0), (p, p), (p, p), (0, 0)))
    H_out = (H + 2 * p - K) // stride + 1
    W_out = (W + 2 * p - K) // stride + 1
    acc = jnp.zeros((N, H_out, W_out, C_exp), jnp.float32)
    for ki in range(K):
        for kj in range(K):
            win = tp[:, ki:ki + stride * (H_out - 1) + 1:stride,
                     kj:kj + stride * (W_out - 1) + 1:stride, :]
            acc = acc + win * prm["w_dw"][ki * K + kj]
    dw = acc * prm["bn_dw"][0] + prm["bn_dw"][1]
    dw = dw * jax.nn.sigmoid(dw)
    pooled = dw.mean(axis=(1, 2))
    red = pooled @ prm["w_se_reduce"] + prm["b_se_reduce"][0]
    red = red * jax.nn.sigmoid(red)
    gate = jax.nn.sigmoid(red @ prm["w_se_expand"] + prm["b_se_expand"][0])
    out = dw * gate[:, None, None, :]
    out = jnp.einsum("nhwc,cd->nhwd", out, prm["w_proj"])
    out = out * prm["bn_proj"][0] + prm["bn_proj"][1]
    if has_shortcut:
        out = out + x
    return out


def make_params(key, *, C_in, C_out, expand_ratio, kernel_size, se_ratio):
    C_exp = C_in * expand_ratio
    C_sq = int(C_in * se_ratio)
    K = kernel_size
    eps = 1e-5
    ks = jax.random.split(key, 10)

    def bn_fold(k, C):
        k1, k2, k3, k4 = jax.random.split(k, 4)
        gamma = jax.random.uniform(k1, (C,), jnp.float32, 0.8, 1.2)
        beta = 0.1 * jax.random.normal(k2, (C,), jnp.float32)
        mean = 0.1 * jax.random.normal(k3, (C,), jnp.float32)
        var = jax.random.uniform(k4, (C,), jnp.float32, 0.5, 1.5)
        scale = gamma / jnp.sqrt(var + eps)
        bias = beta - mean * scale
        return jnp.stack([scale, bias], axis=0)                  # (2, C)

    prm = {
        "w_expand": 0.1 * jax.random.normal(ks[0], (C_in, C_exp), jnp.float32),
        "bn_expand": bn_fold(ks[1], C_exp),
        "w_dw": 0.1 * jax.random.normal(ks[2], (K * K, C_exp), jnp.float32),
        "bn_dw": bn_fold(ks[3], C_exp),
        "w_se_reduce": 0.1 * jax.random.normal(ks[4], (C_exp, C_sq), jnp.float32),
        "b_se_reduce": 0.05 * jax.random.normal(ks[5], (1, C_sq), jnp.float32),
        "w_se_expand": 0.1 * jax.random.normal(ks[6], (C_sq, C_exp), jnp.float32),
        "b_se_expand": 0.05 * jax.random.normal(ks[7], (1, C_exp), jnp.float32),
        "w_proj": 0.1 * jax.random.normal(ks[8], (C_exp, C_out), jnp.float32),
        "bn_proj": bn_fold(ks[9], C_out),
    }
    return prm


if __name__ == "__main__":
    # MBConv config: kernel_size=3, input_c=16, out_c=16, expand_ratio=4,
    # stride=1, se_ratio=0.25, drop_rate=0.2 (eval => DropPath identity).
    N, H, W = 2, 16, 16
    C_in, C_out, expand_ratio, K, stride, se_ratio = 16, 16, 4, 3, 1, 0.25
    has_shortcut = (stride == 1 and C_in == C_out)

    key = jax.random.PRNGKey(0)
    kx, kp = jax.random.split(key)
    # Activations stored in bf16 (DMA-light); accumulation is f32 in-kernel.
    x = jax.random.normal(kx, (N, H, W, C_in), jnp.float32).astype(jnp.bfloat16)
    prm = make_params(kp, C_in=C_in, C_out=C_out, expand_ratio=expand_ratio,
                      kernel_size=K, se_ratio=se_ratio)

    out = mbconv_pallas(x, prm, kernel_size=K, stride=stride,
                        has_shortcut=has_shortcut)
    out = jax.block_until_ready(out)

    ref = mbconv_ref(x, prm, K, stride, has_shortcut)
    np.testing.assert_allclose(np.asarray(out.astype(jnp.float32)),
                               np.asarray(ref), rtol=1e-2, atol=1e-2)
    print("KERNEL_OK")
</pallas_src>

<mosaic_0001>
module attributes {stable_mosaic.version = 11 : i64} {
  func.func @kernel(%arg0: i32, %arg1: memref<1x16x16x16xbf16, #tpu.memory_space<vmem>>, %arg2: memref<16x64xbf16, #tpu.memory_space<vmem>>, %arg3: memref<1x64xf32, #tpu.memory_space<vmem>>, %arg4: memref<9x64xf32, #tpu.memory_space<vmem>>, %arg5: memref<1x64xf32, #tpu.memory_space<vmem>>, %arg6: memref<64x4xf32, #tpu.memory_space<vmem>>, %arg7: memref<1x4xf32, #tpu.memory_space<vmem>>, %arg8: memref<4x64xf32, #tpu.memory_space<vmem>>, %arg9: memref<1x64xf32, #tpu.memory_space<vmem>>, %arg10: memref<64x16xbf16, #tpu.memory_space<vmem>>, %arg11: memref<1x16xf32, #tpu.memory_space<vmem>>, %arg12: memref<1x16x256xbf16, #tpu.memory_space<vmem>>, %arg13: memref<1x18x18x64xbf16, #tpu.memory_space<vmem>>, %arg14: memref<1x16x16x64xbf16, #tpu.memory_space<vmem>>, %arg15: memref<1x64xf32, #tpu.memory_space<vmem>>) attributes {dimension_semantics = [#tpu.dimension_semantics<parallel>], iteration_bounds = array<i64: 2>, scalar_prefetch = 0 : i64, scratch_operands = 3 : i64, tpu.core_type = #tpu.core_type<tc>, window_params = [{transform_indices = @transform_0, window_bounds = array<i64: 1, 16, 16, 16>}, {pipeline_mode = #tpu.pipeline_mode<synchronous>, transform_indices = @transform_1, window_bounds = array<i64: 16, 64>}, {pipeline_mode = #tpu.pipeline_mode<synchronous>, transform_indices = @transform_2, window_bounds = array<i64: 1, 64>}, {pipeline_mode = #tpu.pipeline_mode<synchronous>, transform_indices = @transform_3, window_bounds = array<i64: 9, 64>}, {pipeline_mode = #tpu.pipeline_mode<synchronous>, transform_indices = @transform_4, window_bounds = array<i64: 1, 64>}, {pipeline_mode = #tpu.pipeline_mode<synchronous>, transform_indices = @transform_5, window_bounds = array<i64: 64, 4>}, {pipeline_mode = #tpu.pipeline_mode<synchronous>, transform_indices = @transform_6, window_bounds = array<i64: 1, 4>}, {pipeline_mode = #tpu.pipeline_mode<synchronous>, transform_indices = @transform_7, window_bounds = array<i64: 4, 64>}, {pipeline_mode = #tpu.pipeline_mode<synchronous>, transform_indices = @transform_8, window_bounds = array<i64: 1, 64>}, {pipeline_mode = #tpu.pipeline_mode<synchronous>, transform_indices = @transform_9, window_bounds = array<i64: 64, 16>}, {pipeline_mode = #tpu.pipeline_mode<synchronous>, transform_indices = @transform_10, window_bounds = array<i64: 1, 16>}, {transform_indices = @transform_11, window_bounds = array<i64: 1, 16, 256>}]} {
    %c0 = arith.constant 0 : index
    %c0_0 = arith.constant 0 : index
    %c0_1 = arith.constant 0 : index
    %c0_2 = arith.constant 0 : index
    %0 = vector.load %arg1[%c0, %c0_0, %c0_1, %c0_2] : memref<1x16x16x16xbf16, #tpu.memory_space<vmem>>, vector<1x16x16x16xbf16>
    %1 = vector.shape_cast %0 : vector<1x16x16x16xbf16> to vector<256x16xbf16>
    %c0_3 = arith.constant 0 : index
    %c0_4 = arith.constant 0 : index
    %2 = vector.load %arg2[%c0_3, %c0_4] : memref<16x64xbf16, #tpu.memory_space<vmem>>, vector<16x64xbf16>
    %cst = arith.constant dense<0.000000e+00> : vector<256x64xf32>
    %3 = tpu.matmul %1, %2, %cst {dimension_numbers = #tpu.dot_dimension_numbers<[1], [0], [0], [1], [0, 0, 1, 1], [], []>} : vector<256x16xbf16>, vector<16x64xbf16>, vector<256x64xf32> -> vector<256x64xf32>
    %c0_5 = arith.constant 0 : index
    %c0_6 = arith.constant 0 : index
    %4 = vector.load %arg3[%c0_5, %c0_6] : memref<1x64xf32, #tpu.memory_space<vmem>>, vector<1x64xf32>
    %5 = vector.shape_cast %4 : vector<1x64xf32> to vector<64xf32>
    %6 = vector.shape_cast %5 : vector<64xf32> to vector<1x64xf32>
    %7 = vector.broadcast %6 : vector<1x64xf32> to vector<256x64xf32>
    %8 = arith.addf %3, %7 : vector<256x64xf32>
    %9 = arith.negf %8 : vector<256x64xf32>
    %10 = math.exp %9 : vector<256x64xf32>
    %cst_7 = arith.constant 1.000000e+00 : f32
    %11 = vector.broadcast %cst_7 : f32 to vector<256x64xf32>
    %12 = arith.addf %11, %10 : vector<256x64xf32>
    %13 = arith.divf %11, %12 : vector<256x64xf32>
    %14 = arith.mulf %8, %13 : vector<256x64xf32>
    %cst_8 = arith.constant 0.000000e+00 : bf16
    %15 = vector.broadcast %cst_8 : bf16 to vector<1x1x18x64xbf16>
    %c0_9 = arith.constant 0 : index
    %c0_10 = arith.constant 0 : index
    %c0_11 = arith.constant 0 : index
    %c0_12 = arith.constant 0 : index
    %16 = vector.load %arg13[%c0_9, %c0_10, %c0_11, %c0_12] : memref<1x18x18x64xbf16, #tpu.memory_space<vmem>>, vector<1x1x18x64xbf16>
    tpu.vector_store %arg13[%c0_9, %c0_10, %c0_11, %c0_12], %15 {strides = array<i32>} : memref<1x18x18x64xbf16, #tpu.memory_space<vmem>>, vector<1x1x18x64xbf16>,
    %c0_13 = arith.constant 0 : index
    %c17 = arith.constant 17 : index
    %c0_14 = arith.constant 0 : index
    %c0_15 = arith.constant 0 : index
    %17 = vector.load %arg13[%c0_13, %c17, %c0_14, %c0_15] : memref<1x18x18x64xbf16, #tpu.memory_space<vmem>>, vector<1x1x18x64xbf16>
    tpu.vector_store %arg13[%c0_13, %c17, %c0_14, %c0_15], %15 {strides = array<i32>} : memref<1x18x18x64xbf16, #tpu.memory_space<vmem>>, vector<1x1x18x64xbf16>,
    %cst_16 = arith.constant 0.000000e+00 : bf16
    %18 = vector.broadcast %cst_16 : bf16 to vector<1x16x1x64xbf16>
    %c0_17 = arith.constant 0 : index
    %c1 = arith.constant 1 : index
    %c0_18 = arith.constant 0 : index
    %c0_19 = arith.constant 0 : index
    %19 = vector.load %arg13[%c0_17, %c1, %c0_18, %c0_19] : memref<1x18x18x64xbf16, #tpu.memory_space<vmem>>, vector<1x16x1x64xbf16>
    tpu.vector_store %arg13[%c0_17, %c1, %c0_18, %c0_19], %18 {strides = array<i32>} : memref<1x18x18x64xbf16, #tpu.memory_space<vmem>>, vector<1x16x1x64xbf16>,
    %c0_20 = arith.constant 0 : index
    %c1_21 = arith.constant 1 : index
    %c17_22 = arith.constant 17 : index
    %c0_23 = arith.constant 0 : index
    %20 = vector.load %arg13[%c0_20, %c1_21, %c17_22, %c0_23] : memref<1x18x18x64xbf16, #tpu.memory_space<vmem>>, vector<1x16x1x64xbf16>
    tpu.vector_store %arg13[%c0_20, %c1_21, %c17_22, %c0_23], %18 {strides = array<i32>} : memref<1x18x18x64xbf16, #tpu.memory_space<vmem>>, vector<1x16x1x64xbf16>,
    %21 = vector.shape_cast %14 : vector<256x64xf32> to vector<1x16x16x64xf32>
    %22 = arith.truncf %21 : vector<1x16x16x64xf32> to vector<1x16x16x64xbf16>
    %c0_24 = arith.constant 0 : index
    %c1_25 = arith.constant 1 : index
    %c1_26 = arith.constant 1 : index
    %c0_27 = arith.constant 0 : index
    %23 = vector.load %arg13[%c0_24, %c1_25, %c1_26, %c0_27] : memref<1x18x18x64xbf16, #tpu.memory_space<vmem>>, vector<1x16x16x64xbf16>
    tpu.vector_store %arg13[%c0_24, %c1_25, %c1_26, %c0_27], %22 {strides = array<i32>} : memref<1x18x18x64xbf16, #tpu.memory_space<vmem>>, vector<1x16x16x64xbf16>,
    %c0_28 = arith.constant 0 : index
    %c0_29 = arith.constant 0 : index
    %24 = vector.load %arg4[%c0_28, %c0_29] : memref<9x64xf32, #tpu.memory_space<vmem>>, vector<9x64xf32>
    %25 = vector.extract_strided_slice %24 {offsets = [0, 0], sizes = [1, 64], strides = [1, 1]} : vector<9x64xf32> to vector<1x64xf32>
    %26 = vector.shape_cast %25 : vector<1x64xf32> to vector<64xf32>
    %27 = vector.extract_strided_slice %24 {offsets = [1, 0], sizes = [1, 64], strides = [1, 1]} : vector<9x64xf32> to vector<1x64xf32>
    %28 = vector.shape_cast %27 : vector<1x64xf32> to vector<64xf32>
    %29 = vector.extract_strided_slice %24 {offsets = [2, 0], sizes = [1, 64], strides = [1, 1]} : vector<9x64xf32> to vector<1x64xf32>
    %30 = vector.shape_cast %29 : vector<1x64xf32> to vector<64xf32>
    %31 = vector.extract_strided_slice %24 {offsets = [3, 0], sizes = [1, 64], strides = [1, 1]} : vector<9x64xf32> to vector<1x64xf32>
    %32 = vector.shape_cast %31 : vector<1x64xf32> to vector<64xf32>
    %33 = vector.extract_strided_slice %24 {offsets = [4, 0], sizes = [1, 64], strides = [1, 1]} : vector<9x64xf32> to vector<1x64xf32>
    %34 = vector.shape_cast %33 : vector<1x64xf32> to vector<64xf32>
    %35 = vector.extract_strided_slice %24 {offsets = [5, 0], sizes = [1, 64], strides = [1, 1]} : vector<9x64xf32> to vector<1x64xf32>
    %36 = vector.shape_cast %35 : vector<1x64xf32> to vector<64xf32>
    %37 = vector.extract_strided_slice %24 {offsets = [6, 0], sizes = [1, 64], strides = [1, 1]} : vector<9x64xf32> to vector<1x64xf32>
    %38 = vector.shape_cast %37 : vector<1x64xf32> to vector<64xf32>
    %39 = vector.extract_strided_slice %24 {offsets = [7, 0], sizes = [1, 64], strides = [1, 1]} : vector<9x64xf32> to vector<1x64xf32>
    %40 = vector.shape_cast %39 : vector<1x64xf32> to vector<64xf32>
    %41 = vector.extract_strided_slice %24 {offsets = [8, 0], sizes = [1, 64], strides = [1, 1]} : vector<9x64xf32> to vector<1x64xf32>
    %42 = vector.shape_cast %41 : vector<1x64xf32> to vector<64xf32>
    %c0_30 = arith.constant 0 : index
    %c0_31 = arith.constant 0 : index
    %43 = vector.load %arg5[%c0_30, %c0_31] : memref<1x64xf32, #tpu.memory_space<vmem>>, vector<1x64xf32>
    %44 = vector.shape_cast %43 : vector<1x64xf32> to vector<64xf32>
    %cst_32 = arith.constant 0.000000e+00 : f32
    %45 = vector.broadcast %cst_32 : f32 to vector<1x64xf32>
    %c0_33 = arith.constant 0 : index
    %c0_34 = arith.constant 0 : index
    %46 = vector.load %arg15[%c0_33, %c0_34] : memref<1x64xf32, #tpu.memory_space<vmem>>, vector<1x64xf32>
    tpu.vector_store %arg15[%c0_33, %c0_34], %45 {strides = array<i32>} : memref<1x64xf32, #tpu.memory_space<vmem>>, vector<1x64xf32>,
    %c0_i32 = arith.constant 0 : i32
    %c2_i32 = arith.constant 2 : i32
    %47 = arith.addi %c0_i32, %c2_i32 : i32
    %c1_i32 = arith.constant 1 : i32
    scf.for %arg16 = %c0_i32 to %47 step %c1_i32  : i32 {
      %c1_i32_63 = arith.constant 1 : i32
      %94 = arith.muli %arg16, %c1_i32_63 : i32
      %c0_i32_64 = arith.constant 0 : i32
      %95 = arith.addi %c0_i32_64, %94 : i32
      %c8_i32 = arith.constant 8 : i32
      %96 = arith.muli %95, %c8_i32 : i32
      %97 = tpu.assume_multiple %96, 8 : i32
      %c0_i32_65 = arith.constant 0 : i32
      %98 = arith.addi %97, %c0_i32_65 : i32
      %c0_66 = arith.constant 0 : index
      %99 = arith.index_cast %98 : i32 to index
      %c0_67 = arith.constant 0 : index
      %c0_68 = arith.constant 0 : index
      %100 = vector.load %arg13[%c0_66, %99, %c0_67, %c0_68] : memref<1x18x18x64xbf16, #tpu.memory_space<vmem>>, vector<1x8x18x64xbf16>
      %101 = arith.extf %100 : vector<1x8x18x64xbf16> to vector<1x8x18x64xf32>
      %102 = vector.extract_strided_slice %101 {offsets = [0, 0, 0, 0], sizes = [1, 8, 16, 64], strides = [1, 1, 1, 1]} : vector<1x8x18x64xf32> to vector<1x8x16x64xf32>
      %103 = vector.shape_cast %26 : vector<64xf32> to vector<1x1x1x64xf32>
      %104 = vector.broadcast %103 : vector<1x1x1x64xf32> to vector<1x8x16x64xf32>
      %105 = arith.mulf %102, %104 : vector<1x8x16x64xf32>
      %106 = vector.shape_cast %44 : vector<64xf32> to vector<1x1x1x64xf32>
      %107 = vector.broadcast %106 : vector<1x1x1x64xf32> to vector<1x8x16x64xf32>
      %108 = arith.addf %105, %107 : vector<1x8x16x64xf32>
      %109 = vector.extract_strided_slice %101 {offsets = [0, 0, 1, 0], sizes = [1, 8, 16, 64], strides = [1, 1, 1, 1]} : vector<1x8x18x64xf32> to vector<1x8x16x64xf32>
      %110 = vector.shape_cast %28 : vector<64xf32> to vector<1x1x1x64xf32>
      %111 = vector.broadcast %110 : vector<1x1x1x64xf32> to vector<1x8x16x64xf32>
      %112 = arith.mulf %109, %111 : vector<1x8x16x64xf32>
      %113 = arith.addf %108, %112 : vector<1x8x16x64xf32>
      %114 = vector.extract_strided_slice %101 {offsets = [0, 0, 2, 0], sizes = [1, 8, 16, 64], strides = [1, 1, 1, 1]} : vector<1x8x18x64xf32> to vector<1x8x16x64xf32>
      %115 = vector.shape_cast %30 : vector<64xf32> to vector<1x1x1x64xf32>
      %116 = vector.broadcast %115 : vector<1x1x1x64xf32> to vector<1x8x16x64xf32>
      %117 = arith.mulf %114, %116 : vector<1x8x16x64xf32>
      %118 = arith.addf %113, %117 : vector<1x8x16x64xf32>
      %c1_i32_69 = arith.constant 1 : i32
      %119 = arith.addi %97, %c1_i32_69 : i32
      %c0_70 = arith.constant 0 : index
      %120 = arith.index_cast %119 : i32 to index
      %c0_71 = arith.constant 0 : index
      %c0_72 = arith.constant 0 : index
      %121 = vector.load %arg13[%c0_70, %120, %c0_71, %c0_72] : memref<1x18x18x64xbf16, #tpu.memory_space<vmem>>, vector<1x8x18x64xbf16>
      %122 = arith.extf %121 : vector<1x8x18x64xbf16> to vector<1x8x18x64xf32>
      %123 = vector.extract_strided_slice %122 {offsets = [0, 0, 0, 0], sizes = [1, 8, 16, 64], strides = [1, 1, 1, 1]} : vector<1x8x18x64xf32> to vector<1x8x16x64xf32>
      %124 = vector.shape_cast %32 : vector<64xf32> to vector<1x1x1x64xf32>
      %125 = vector.broadcast %124 : vector<1x1x1x64xf32> to vector<1x8x16x64xf32>
      %126 = arith.mulf %123, %125 : vector<1x8x16x64xf32>
      %127 = arith.addf %118, %126 : vector<1x8x16x64xf32>
      %128 = vector.extract_strided_slice %122 {offsets = [0, 0, 1, 0], sizes = [1, 8, 16, 64], strides = [1, 1, 1, 1]} : vector<1x8x18x64xf32> to vector<1x8x16x64xf32>
      %129 = vector.shape_cast %34 : vector<64xf32> to vector<1x1x1x64xf32>
      %130 = vector.broadcast %129 : vector<1x1x1x64xf32> to vector<1x8x16x64xf32>
      %131 = arith.mulf %128, %130 : vector<1x8x16x64xf32>
      %132 = arith.addf %127, %131 : vector<1x8x16x64xf32>
      %133 = vector.extract_strided_slice %122 {offsets = [0, 0, 2, 0], sizes = [1, 8, 16, 64], strides = [1, 1, 1, 1]} : vector<1x8x18x64xf32> to vector<1x8x16x64xf32>
      %134 = vector.shape_cast %36 : vector<64xf32> to vector<1x1x1x64xf32>
      %135 = vector.broadcast %134 : vector<1x1x1x64xf32> to vector<1x8x16x64xf32>
      %136 = arith.mulf %133, %135 : vector<1x8x16x64xf32>
      %137 = arith.addf %132, %136 : vector<1x8x16x64xf32>
      %c2_i32_73 = arith.constant 2 : i32
      %138 = arith.addi %97, %c2_i32_73 : i32
      %c0_74 = arith.constant 0 : index
      %139 = arith.index_cast %138 : i32 to index
      %c0_75 = arith.constant 0 : index
      %c0_76 = arith.constant 0 : index
      %140 = vector.load %arg13[%c0_74, %139, %c0_75, %c0_76] : memref<1x18x18x64xbf16, #tpu.memory_space<vmem>>, vector<1x8x18x64xbf16>
      %141 = arith.extf %140 : vector<1x8x18x64xbf16> to vector<1x8x18x64xf32>
      %142 = vector.extract_strided_slice %141 {offsets = [0, 0, 0, 0], sizes = [1, 8, 16, 64], strides = [1, 1, 1, 1]} : vector<1x8x18x64xf32> to vector<1x8x16x64xf32>
      %143 = vector.shape_cast %38 : vector<64xf32> to vector<1x1x1x64xf32>
      %144 = vector.broadcast %143 : vector<1x1x1x64xf32> to vector<1x8x16x64xf32>
      %145 = arith.mulf %142, %144 : vector<1x8x16x64xf32>
      %146 = arith.addf %137, %145 : vector<1x8x16x64xf32>
      %147 = vector.extract_strided_slice %141 {offsets = [0, 0, 1, 0], sizes = [1, 8, 16, 64], strides = [1, 1, 1, 1]} : vector<1x8x18x64xf32> to vector<1x8x16x64xf32>
      %148 = vector.shape_cast %40 : vector<64xf32> to vector<1x1x1x64xf32>
      %149 = vector.broadcast %148 : vector<1x1x1x64xf32> to vector<1x8x16x64xf32>
      %150 = arith.mulf %147, %149 : vector<1x8x16x64xf32>
      %151 = arith.addf %146, %150 : vector<1x8x16x64xf32>
      %152 = vector.extract_strided_slice %141 {offsets = [0, 0, 2, 0], sizes = [1, 8, 16, 64], strides = [1, 1, 1, 1]} : vector<1x8x18x64xf32> to vector<1x8x16x64xf32>
      %153 = vector.shape_cast %42 : vector<64xf32> to vector<1x1x1x64xf32>
      %154 = vector.broadcast %153 : vector<1x1x1x64xf32> to vector<1x8x16x64xf32>
      %155 = arith.mulf %152, %154 : vector<1x8x16x64xf32>
      %156 = arith.addf %151, %155 : vector<1x8x16x64xf32>
      %157 = arith.negf %156 : vector<1x8x16x64xf32>
      %158 = math.exp %157 : vector<1x8x16x64xf32>
      %cst_77 = arith.constant 1.000000e+00 : f32
      %159 = vector.broadcast %cst_77 : f32 to vector<1x8x16x64xf32>
      %160 = arith.addf %159, %158 : vector<1x8x16x64xf32>
      %161 = arith.divf %159, %160 : vector<1x8x16x64xf32>
      %162 = arith.mulf %156, %161 : vector<1x8x16x64xf32>
      %163 = arith.truncf %162 : vector<1x8x16x64xf32> to vector<1x8x16x64xbf16>
      %c0_78 = arith.constant 0 : index
      %164 = arith.index_cast %97 : i32 to index
      %c0_79 = arith.constant 0 : index
      %c0_80 = arith.constant 0 : index
      %165 = vector.load %arg14[%c0_78, %164, %c0_79, %c0_80] : memref<1x16x16x64xbf16, #tpu.memory_space<vmem>>, vector<1x8x16x64xbf16>
      tpu.vector_store %arg14[%c0_78, %164, %c0_79, %c0_80], %163 {strides = array<i32>} : memref<1x16x16x64xbf16, #tpu.memory_space<vmem>>, vector<1x8x16x64xbf16>,
      %c0_81 = arith.constant 0 : index
      %c0_82 = arith.constant 0 : index
      %166 = vector.load %arg15[%c0_81, %c0_82] : memref<1x64xf32, #tpu.memory_space<vmem>>, vector<1x64xf32>
      %cst_83 = arith.constant dense<0.000000e+00> : vector<1x64xf32>
      %167 = vector.multi_reduction <add>, %162, %cst_83 [1, 2] : vector<1x8x16x64xf32> to vector<1x64xf32>
      %168 = arith.addf %166, %167 : vector<1x64xf32>
      %c0_84 = arith.constant 0 : index
      %c0_85 = arith.constant 0 : index
      %169 = vector.load %arg15[%c0_84, %c0_85] : memref<1x64xf32, #tpu.memory_space<vmem>>, vector<1x64xf32>
      tpu.vector_store %arg15[%c0_84, %c0_85], %168 {strides = array<i32>} : memref<1x64xf32, #tpu.memory_space<vmem>>, vector<1x64xf32>,
    }
    %c2_i32_35 = arith.constant 2 : i32
    %c0_36 = arith.constant 0 : index
    %c0_37 = arith.constant 0 : index
    %48 = vector.load %arg15[%c0_36, %c0_37] : memref<1x64xf32, #tpu.memory_space<vmem>>, vector<1x64xf32>
    %cst_38 = arith.constant 3.906250e-03 : f32
    %49 = vector.broadcast %cst_38 : f32 to vector<1x64xf32>
    %50 = arith.mulf %48, %49 : vector<1x64xf32>
    %c0_39 = arith.constant 0 : index
    %c0_40 = arith.constant 0 : index
    %51 = vector.load %arg6[%c0_39, %c0_40] : memref<64x4xf32, #tpu.memory_space<vmem>>, vector<64x4xf32>
    %cst_41 = arith.constant dense<0.000000e+00> : vector<1x4xf32>
    %52 = tpu.matmul %50, %51, %cst_41 {dimension_numbers = #tpu.dot_dimension_numbers<[1], [0], [0], [1], [0, 0, 1, 1], [], []>} : vector<1x64xf32>, vector<64x4xf32>, vector<1x4xf32> -> vector<1x4xf32>
    %c0_42 = arith.constant 0 : index
    %c0_43 = arith.constant 0 : index
    %53 = vector.load %arg7[%c0_42, %c0_43] : memref<1x4xf32, #tpu.memory_space<vmem>>, vector<1x4xf32>
    %54 = vector.shape_cast %53 : vector<1x4xf32> to vector<4xf32>
    %55 = vector.shape_cast %54 : vector<4xf32> to vector<1x4xf32>
    %56 = arith.addf %52, %55 : vector<1x4xf32>
    %57 = arith.negf %56 : vector<1x4xf32>
    %58 = math.exp %57 : vector<1x4xf32>
    %cst_44 = arith.constant 1.000000e+00 : f32
    %59 = vector.broadcast %cst_44 : f32 to vector<1x4xf32>
    %60 = arith.addf %59, %58 : vector<1x4xf32>
    %61 = arith.divf %59, %60 : vector<1x4xf32>
    %62 = arith.mulf %56, %61 : vector<1x4xf32>
    %c0_45 = arith.constant 0 : index
    %c0_46 = arith.constant 0 : index
    %63 = vector.load %arg8[%c0_45, %c0_46] : memref<4x64xf32, #tpu.memory_space<vmem>>, vector<4x64xf32>
    %cst_47 = arith.constant dense<0.000000e+00> : vector<1x64xf32>
    %64 = tpu.matmul %62, %63, %cst_47 {dimension_numbers = #tpu.dot_dimension_numbers<[1], [0], [0], [1], [0, 0, 1, 1], [], []>} : vector<1x4xf32>, vector<4x64xf32>, vector<1x64xf32> -> vector<1x64xf32>
    %c0_48 = arith.constant 0 : index
    %c0_49 = arith.constant 0 : index
    %65 = vector.load %arg9[%c0_48, %c0_49] : memref<1x64xf32, #tpu.memory_space<vmem>>, vector<1x64xf32>
    %66 = vector.shape_cast %65 : vector<1x64xf32> to vector<64xf32>
    %67 = vector.shape_cast %66 : vector<64xf32> to vector<1x64xf32>
    %68 = arith.addf %64, %67 : vector<1x64xf32>
    %69 = arith.negf %68 : vector<1x64xf32>
    %70 = math.exp %69 : vector<1x64xf32>
    %cst_50 = arith.constant 1.000000e+00 : f32
    %71 = vector.broadcast %cst_50 : f32 to vector<1x64xf32>
    %72 = arith.addf %71, %70 : vector<1x64xf32>
    %73 = arith.divf %71, %72 : vector<1x64xf32>
    %c0_51 = arith.constant 0 : index
    %c0_52 = arith.constant 0 : index
    %c0_53 = arith.constant 0 : index
    %c0_54 = arith.constant 0 : index
    %74 = vector.load %arg14[%c0_51, %c0_52, %c0_53, %c0_54] : memref<1x16x16x64xbf16, #tpu.memory_space<vmem>>, vector<1x16x16x64xbf16>
    %75 = vector.shape_cast %74 : vector<1x16x16x64xbf16> to vector<1x256x64xbf16>
    %76 = arith.truncf %73 : vector<1x64xf32> to vector<1x64xbf16>
    %77 = vector.shape_cast %76 : vector<1x64xbf16> to vector<1x1x64xbf16>
    %78 = vector.broadcast %77 : vector<1x1x64xbf16> to vector<1x256x64xbf16>
    %79 = arith.mulf %75, %78 : vector<1x256x64xbf16>
    %80 = vector.shape_cast %79 : vector<1x256x64xbf16> to vector<256x64xbf16>
    %c0_55 = arith.constant 0 : index
    %c0_56 = arith.constant 0 : index
    %81 = vector.load %arg10[%c0_55, %c0_56] : memref<64x16xbf16, #tpu.memory_space<vmem>>, vector<64x16xbf16>
    %cst_57 = arith.constant dense<0.000000e+00> : vector<256x16xf32>
    %82 = tpu.matmul %80, %81, %cst_57 {dimension_numbers = #tpu.dot_dimension_numbers<[1], [0], [0], [1], [0, 0, 1, 1], [], []>} : vector<256x64xbf16>, vector<64x16xbf16>, vector<256x16xf32> -> vector<256x16xf32>
    %c0_58 = arith.constant 0 : index
    %c0_59 = arith.constant 0 : index
    %83 = vector.load %arg11[%c0_58, %c0_59] : memref<1x16xf32, #tpu.memory_space<vmem>>, vector<1x16xf32>
    %84 = vector.shape_cast %83 : vector<1x16xf32> to vector<16xf32>
    %85 = vector.shape_cast %84 : vector<16xf32> to vector<1x16xf32>
    %86 = vector.broadcast %85 : vector<1x16xf32> to vector<256x16xf32>
    %87 = arith.addf %82, %86 : vector<256x16xf32>
    %88 = vector.shape_cast %87 : vector<256x16xf32> to vector<1x16x16x16xf32>
    %89 = arith.extf %0 : vector<1x16x16x16xbf16> to vector<1x16x16x16xf32>
    %90 = arith.addf %88, %89 : vector<1x16x16x16xf32>
    %91 = arith.truncf %90 : vector<1x16x16x16xf32> to vector<1x16x16x16xbf16>
    %92 = vector.shape_cast %91 : vector<1x16x16x16xbf16> to vector<1x16x256xbf16>
    %c0_60 = arith.constant 0 : index
    %c0_61 = arith.constant 0 : index
    %c0_62 = arith.constant 0 : index
    %93 = vector.load %arg12[%c0_60, %c0_61, %c0_62] : memref<1x16x256xbf16, #tpu.memory_space<vmem>>, vector<1x16x256xbf16>
    tpu.vector_store %arg12[%c0_60, %c0_61, %c0_62], %92 {strides = array<i32>} : memref<1x16x256xbf16, #tpu.memory_space<vmem>>, vector<1x16x256xbf16>,
    return
  }
  func.func @transform_0(%arg0: i32) -> (i32, i32, i32, i32) {
    %c0_i32 = arith.constant 0 : i32
    %c0_i32_0 = arith.constant 0 : i32
    %c0_i32_1 = arith.constant 0 : i32
    %c0_i32_2 = arith.constant 0 : i32
    return %arg0, %c0_i32, %c0_i32_0, %c0_i32_1 : i32, i32, i32, i32
  }
  func.func @transform_1(%arg0: i32) -> (i32, i32) {
    %c0_i32 = arith.constant 0 : i32
    %c0_i32_0 = arith.constant 0 : i32
    %c0_i32_1 = arith.constant 0 : i32
    return %c0_i32, %c0_i32_0 : i32, i32
  }
  func.func @transform_2(%arg0: i32) -> (i32, i32) {
    %c0_i32 = arith.constant 0 : i32
    %c0_i32_0 = arith.constant 0 : i32
    %c0_i32_1 = arith.constant 0 : i32
    return %c0_i32, %c0_i32_0 : i32, i32
  }
  func.func @transform_3(%arg0: i32) -> (i32, i32) {
    %c0_i32 = arith.constant 0 : i32
    %c0_i32_0 = arith.constant 0 : i32
    %c0_i32_1 = arith.constant 0 : i32
    return %c0_i32, %c0_i32_0 : i32, i32
  }
  func.func @transform_4(%arg0: i32) -> (i32, i32) {
    %c0_i32 = arith.constant 0 : i32
    %c0_i32_0 = arith.constant 0 : i32
    %c0_i32_1 = arith.constant 0 : i32
    return %c0_i32, %c0_i32_0 : i32, i32
  }
  func.func @transform_5(%arg0: i32) -> (i32, i32) {
    %c0_i32 = arith.constant 0 : i32
    %c0_i32_0 = arith.constant 0 : i32
    %c0_i32_1 = arith.constant 0 : i32
    return %c0_i32, %c0_i32_0 : i32, i32
  }
  func.func @transform_6(%arg0: i32) -> (i32, i32) {
    %c0_i32 = arith.constant 0 : i32
    %c0_i32_0 = arith.constant 0 : i32
    %c0_i32_1 = arith.constant 0 : i32
    return %c0_i32, %c0_i32_0 : i32, i32
  }
  func.func @transform_7(%arg0: i32) -> (i32, i32) {
    %c0_i32 = arith.constant 0 : i32
    %c0_i32_0 = arith.constant 0 : i32
    %c0_i32_1 = arith.constant 0 : i32
    return %c0_i32, %c0_i32_0 : i32, i32
  }
  func.func @transform_8(%arg0: i32) -> (i32, i32) {
    %c0_i32 = arith.constant 0 : i32
    %c0_i32_0 = arith.constant 0 : i32
    %c0_i32_1 = arith.constant 0 : i32
    return %c0_i32, %c0_i32_0 : i32, i32
  }
  func.func @transform_9(%arg0: i32) -> (i32, i32) {
    %c0_i32 = arith.constant 0 : i32
    %c0_i32_0 = arith.constant 0 : i32
    %c0_i32_1 = arith.constant 0 : i32
    return %c0_i32, %c0_i32_0 : i32, i32
  }
  func.func @transform_10(%arg0: i32) -> (i32, i32) {
    %c0_i32 = arith.constant 0 : i32
    %c0_i32_0 = arith.constant 0 : i32
    %c0_i32_1 = arith.constant 0 : i32
    return %c0_i32, %c0_i32_0 : i32, i32
  }
  func.func @transform_11(%arg0: i32) -> (i32, i32, i32) {
    %c0_i32 = arith.constant 0 : i32
    %c0_i32_0 = arith.constant 0 : i32
    %c0_i32_1 = arith.constant 0 : i32
    return %arg0, %c0_i32, %c0_i32_0 : i32, i32, i32
  }
}

</mosaic_0001>

<llo_original>
// kernel: tpu_custom_call.1
$region0: #{tpu_custom_call.1}
  #allocation0 [shape = 'u32[]', space=smem, size = 0x4, offset = 0x4, fixed_abs, tag = 'smem constant byte address 0x4 - core index']
  #allocation1 [shape = 'u32[72,128]{1,0:T(1,128)}', space=vmem, size = 0x9000, scoped, tag = 'internal scratch']
  #allocation2 [shape = 'bf16[1,18,18,64]{3,2,1,0:T(8,128)(2,1)}', space=vmem, size = 0x1b000, scoped, tag = 'scratch operand']
  #allocation3 [shape = 'bf16[1,16,16,64]{3,2,1,0:T(8,128)(2,1)}', space=vmem, size = 0x10000, scoped, tag = 'scratch operand']
  #allocation4 [shape = 'f32[1,64]{1,0:T(1,128)}', space=vmem, size = 0x200, scoped, tag = 'scratch operand']
  %s0 = inlined_call_operand.hbm [shape: bf16[2,16,16,16], index: 0, kind: input, shape index: {}]
  %s1 = inlined_call_operand.vmem [shape: bf16[16,64], index: 1, kind: input, shape index: {}]
  %s2 = inlined_call_operand.vmem [shape: f32[1,64], index: 2, kind: input, shape index: {}]
  %s3 = inlined_call_operand.vmem [shape: f32[9,64], index: 3, kind: input, shape index: {}]
  %s4 = inlined_call_operand.vmem [shape: f32[1,64], index: 4, kind: input, shape index: {}]
  %s5 = inlined_call_operand.vmem [shape: f32[64,4], index: 5, kind: input, shape index: {}]
  %s6 = inlined_call_operand.vmem [shape: f32[1,4], index: 6, kind: input, shape index: {}]
  %s7 = inlined_call_operand.vmem [shape: f32[4,64], index: 7, kind: input, shape index: {}]
  %s8 = inlined_call_operand.vmem [shape: f32[1,64], index: 8, kind: input, shape index: {}]
  %s9 = inlined_call_operand.vmem [shape: bf16[64,16], index: 9, kind: input, shape index: {}]
  %s10 = inlined_call_operand.vmem [shape: f32[1,16], index: 10, kind: input, shape index: {}]
  %s11 = inlined_call_operand.hbm [shape: bf16[2,16,256], index: 11, kind: output, shape index: {}]
  %s12 = sld [smem:[#allocation0]]
  $region88: #{tpu_custom_call.1} parent=0
    _
  %s14 = ssub.s32 1, %s12
  %s15 = scalar_select 0, %s14, %s12
  $region1: #{tpu_custom_call.1} parent=0
    #allocation5 [shape = 'u8[131072]{0}', space=vmem, size = 0x20000, scoped, tag = 'input window, operand 0']
    #allocation6 [shape = 's32[2]{0}', space=sflag, size = 0x8, scoped, tag = 'scoped memory for tpu_custom_call.1']
    #allocation7 [shape = 's32[2]{0}', space=sflag, size = 0x8, scoped, tag = 'scoped memory for tpu_custom_call.1']
    #allocation8 [shape = 'u8[16384]{0}', space=vmem, size = 0x4000, scoped, tag = 'output window, operand 0']
    %16 = vsyncpa [#allocation6], 0
    %s17 = scalar_lea.sflag [#allocation6], 1
    %18 = vsyncpa %s17, 0
    %19 = vsyncpa [#allocation7], 0
    %s20 = scalar_lea.sflag [#allocation7], 1
    %21 = vsyncpa %s20, 0
    loop: start=0, step=1, limit=4
    $region2: #{tpu_custom_call.1} parent=1 // loop_pre_header
      _
    $region3: #{tpu_custom_call.1} parent=1 // loop_header
      %s23 = sphi 0, %s27
      %p24 = scmp.ge.s32.totalorder %s23, 4
      %s33 = sphi 0, %s35
      %s36 = sphi 0, %s33
      %s37 = sphi 0, %s36
      %s53 = sphi 0, %s37
      %s57 = sphi 0, %s57
      %s59 = sphi 0, %s57
      %s60 = sphi 0, %s59
      %s74 = sphi 0, %s60
      %s78 = sphi 0, %s78
      %s80 = sphi 0, %s78
      %s81 = sphi 0, %s80
      %s95 = sphi 0, %s81
      %s99 = sphi 0, %s99
      %s101 = sphi 0, %s99
      %s102 = sphi 0, %s101
      %s116 = sphi 0, %s102
      %s120 = sphi 0, %s120
      %s122 = sphi 0, %s120
      %s123 = sphi 0, %s122
      %s137 = sphi 0, %s123
      %s141 = sphi 0, %s141
      %s143 = sphi 0, %s141
      %s144 = sphi 0, %s143
      %s158 = sphi 0, %s144
      %s162 = sphi 0, %s162
      %s164 = sphi 0, %s162
      %s165 = sphi 0, %s164
      %s179 = sphi 0, %s165
      %s183 = sphi 0, %s183
      %s185 = sphi 0, %s183
      %s186 = sphi 0, %s185
      %s200 = sphi 0, %s186
      %s204 = sphi 0, %s204
      %s206 = sphi 0, %s204
      %s207 = sphi 0, %s206
      %s221 = sphi 0, %s207
      %s225 = sphi 0, %s225
      %s227 = sphi 0, %s225
      %s228 = sphi 0, %s227
      %s242 = sphi 0, %s228
      %s246 = sphi 0, %s246
      %s248 = sphi 0, %s246
      %s249 = sphi 0, %s248
      %s263 = sphi 0, %s249
      %s269 = sphi 0, %s271
      %s272 = sphi 0, %s269
      %s273 = sphi 0, %s272
      %s289 = sphi 0, %s273
    $region4: #{tpu_custom_call.1} parent=1 // loop_header_branch
      %26 = sbr.rel (%p24) target = $region8
    $region5: #{tpu_custom_call.1} parent=1 // loop_body
      %s28 = ssub.s32 %s23, 1
      %s29 = ssub.s32 %s23, 2
      %s30 = sadd.s32 %s23, 1
      %s31 = ssub.s32 %s23, %s30
      %p32 = scmp.eq.s32.totalorder %s31, 0
      %s34 = sadd.s32 %s33, 1
      %s35 = scalar_select %p32, %s33, %s34
      %p38 = pneg %p32
      %p39 = scmp.eq.s32.totalorder %s23, 1
      %p40 = por %p38, %p39
      %p41 = scmp.ne.s32.totalorder %s33, %s36
      %p42 = scmp.eq.s32.totalorder %s23, 0
      %p43 = por %p41, %p42
      %p44 = scmp.ne.s32.totalorder %s33, %s36
      %p45 = scmp.eq.s32.totalorder %s28, 1
      %p46 = por %p44, %p45
      %p47 = scmp.ne.s32.totalorder %s36, %s37
      %p48 = scmp.eq.s32.totalorder %s28, 0
      %p49 = por %p47, %p48
      %p50 = scmp.ne.s32.totalorder %s36, %s37
      %p51 = scmp.eq.s32.totalorder %s29, 1
      %p52 = por %p50, %p51
      %p54 = scmp.ne.s32.totalorder %s37, %s53
      %p55 = scmp.eq.s32.totalorder %s29, 0
      %p56 = por %p54, %p55
      %s58 = sadd.s32 %s57, 1
      %p61 = scmp.eq.s32.totalorder %s23, 1
      %p62 = scmp.ne.s32.totalorder %s57, %s59
      %p63 = scmp.eq.s32.totalorder %s23, 0
      %p64 = por %p62, %p63
      %p65 = scmp.ne.s32.totalorder %s57, %s59
      %p66 = scmp.eq.s32.totalorder %s28, 1
      %p67 = por %p65, %p66
      %p68 = scmp.ne.s32.totalorder %s59, %s60
      %p69 = scmp.eq.s32.totalorder %s28, 0
      %p70 = por %p68, %p69
      %p71 = scmp.ne.s32.totalorder %s59, %s60
      %p72 = scmp.eq.s32.totalorder %s29, 1
      %p73 = por %p71, %p72
      %p75 = scmp.ne.s32.totalorder %s60, %s74
      %p76 = scmp.eq.s32.totalorder %s29, 0
      %p77 = por %p75, %p76
      %s79 = sadd.s32 %s78, 1
      %p82 = scmp.eq.s32.totalorder %s23, 1
      %p83 = scmp.ne.s32.totalorder %s78, %s80
      %p84 = scmp.eq.s32.totalorder %s23, 0
      %p85 = por %p83, %p84
      %p86 = scmp.ne.s32.totalorder %s78, %s80
      %p87 = scmp.eq.s32.totalorder %s28, 1
      %p88 = por %p86, %p87
      %p89 = scmp.ne.s32.totalorder %s80, %s81
      %p90 = scmp.eq.s32.totalorder %s28, 0
      %p91 = por %p89, %p90
      %p92 = scmp.ne.s32.totalorder %s80, %s81
      %p93 = scmp.eq.s32.totalorder %s29, 1
      %p94 = por %p92, %p93
      %p96 = scmp.ne.s32.totalorder %s81, %s95
      %p97 = scmp.eq.s32.totalorder %s29, 0
      %p98 = por %p96, %p97
      %s100 = sadd.s32 %s99, 1
      %p103 = scmp.eq.s32.totalorder %s23, 1
      %p104 = scmp.ne.s32.totalorder %s99, %s101
      %p105 = scmp.eq.s32.totalorder %s23, 0
      %p106 = por %p104, %p105
      %p107 = scmp.ne.s32.totalorder %s99, %s101
      %p108 = scmp.eq.s32.totalorder %s28, 1
      %p109 = por %p107, %p108
      %p110 = scmp.ne.s32.totalorder %s101, %s102
      %p111 = scmp.eq.s32.totalorder %s28, 0
      %p112 = por %p110, %p111
      %p113 = scmp.ne.s32.totalorder %s101, %s102
      %p114 = scmp.eq.s32.totalorder %s29, 1
      %p115 = por %p113, %p114
      %p117 = scmp.ne.s32.totalorder %s102, %s116
      %p118 = scmp.eq.s32.totalorder %s29, 0
      %p119 = por %p117, %p118
      %s121 = sadd.s32 %s120, 1
      %p124 = scmp.eq.s32.totalorder %s23, 1
      %p125 = scmp.ne.s32.totalorder %s120, %s122
      %p126 = scmp.eq.s32.totalorder %s23, 0
      %p127 = por %p125, %p126
      %p128 = scmp.ne.s32.totalorder %s120, %s122
      %p129 = scmp.eq.s32.totalorder %s28, 1
      %p130 = por %p128, %p129
      %p131 = scmp.ne.s32.totalorder %s122, %s123
      %p132 = scmp.eq.s32.totalorder %s28, 0
      %p133 = por %p131, %p132
      %p134 = scmp.ne.s32.totalorder %s122, %s123
      %p135 = scmp.eq.s32.totalorder %s29, 1
      %p136 = por %p134, %p135
      %p138 = scmp.ne.s32.totalorder %s123, %s137
      %p139 = scmp.eq.s32.totalorder %s29, 0
      %p140 = por %p138, %p139
      %s142 = sadd.s32 %s141, 1
      %p145 = scmp.eq.s32.totalorder %s23, 1
      %p146 = scmp.ne.s32.totalorder %s141, %s143
      %p147 = scmp.eq.s32.totalorder %s23, 0
      %p148 = por %p146, %p147
      %p149 = scmp.ne.s32.totalorder %s141, %s143
      %p150 = scmp.eq.s32.totalorder %s28, 1
      %p151 = por %p149, %p150
      %p152 = scmp.ne.s32.totalorder %s143, %s144
      %p153 = scmp.eq.s32.totalorder %s28, 0
      %p154 = por %p152, %p153
      %p155 = scmp.ne.s32.totalorder %s143, %s144
      %p156 = scmp.eq.s32.totalorder %s29, 1
      %p157 = por %p155, %p156
      %p159 = scmp.ne.s32.totalorder %s144, %s158
      %p160 = scmp.eq.s32.totalorder %s29, 0
      %p161 = por %p159, %p160
      %s163 = sadd.s32 %s162, 1
      %p166 = scmp.eq.s32.totalorder %s23, 1
      %p167 = scmp.ne.s32.totalorder %s162, %s164
      %p168 = scmp.eq.s32.totalorder %s23, 0
      %p169 = por %p167, %p168
      %p170 = scmp.ne.s32.totalorder %s162, %s164
      %p171 = scmp.eq.s32.totalorder %s28, 1
      %p172 = por %p170, %p171
      %p173 = scmp.ne.s32.totalorder %s164, %s165
      %p174 = scmp.eq.s32.totalorder %s28, 0
      %p175 = por %p173, %p174
      %p176 = scmp.ne.s32.totalorder %s164, %s165
      %p177 = scmp.eq.s32.totalorder %s29, 1
      %p178 = por %p176, %p177
      %p180 = scmp.ne.s32.totalorder %s165, %s179
      %p181 = scmp.eq.s32.totalorder %s29, 0
      %p182 = por %p180, %p181
      %s184 = sadd.s32 %s183, 1
      %p187 = scmp.eq.s32.totalorder %s23, 1
      %p188 = scmp.ne.s32.totalorder %s183, %s185
      %p189 = scmp.eq.s32.totalorder %s23, 0
      %p190 = por %p188, %p189
      %p191 = scmp.ne.s32.totalorder %s183, %s185
      %p192 = scmp.eq.s32.totalorder %s28, 1
      %p193 = por %p191, %p192
      %p194 = scmp.ne.s32.totalorder %s185, %s186
      %p195 = scmp.eq.s32.totalorder %s28, 0
      %p196 = por %p194, %p195
      %p197 = scmp.ne.s32.totalorder %s185, %s186
      %p198 = scmp.eq.s32.totalorder %s29, 1
      %p199 = por %p197, %p198
      %p201 = scmp.ne.s32.totalorder %s186, %s200
      %p202 = scmp.eq.s32.totalorder %s29, 0
      %p203 = por %p201, %p202
      %s205 = sadd.s32 %s204, 1
      %p208 = scmp.eq.s32.totalorder %s23, 1
      %p209 = scmp.ne.s32.totalorder %s204, %s206
      %p210 = scmp.eq.s32.totalorder %s23, 0
      %p211 = por %p209, %p210
      %p212 = scmp.ne.s32.totalorder %s204, %s206
      %p213 = scmp.eq.s32.totalorder %s28, 1
      %p214 = por %p212, %p213
      %p215 = scmp.ne.s32.totalorder %s206, %s207
      %p216 = scmp.eq.s32.totalorder %s28, 0
      %p217 = por %p215, %p216
      %p218 = scmp.ne.s32.totalorder %s206, %s207
      %p219 = scmp.eq.s32.totalorder %s29, 1
      %p220 = por %p218, %p219
      %p222 = scmp.ne.s32.totalorder %s207, %s221
      %p223 = scmp.eq.s32.totalorder %s29, 0
      %p224 = por %p222, %p223
      %s226 = sadd.s32 %s225, 1
      %p229 = scmp.eq.s32.totalorder %s23, 1
      %p230 = scmp.ne.s32.totalorder %s225, %s227
      %p231 = scmp.eq.s32.totalorder %s23, 0
      %p232 = por %p230, %p231
      %p233 = scmp.ne.s32.totalorder %s225, %s227
      %p234 = scmp.eq.s32.totalorder %s28, 1
      %p235 = por %p233, %p234
      %p236 = scmp.ne.s32.totalorder %s227, %s228
      %p237 = scmp.eq.s32.totalorder %s28, 0
      %p238 = por %p236, %p237
      %p239 = scmp.ne.s32.totalorder %s227, %s228
      %p240 = scmp.eq.s32.totalorder %s29, 1
      %p241 = por %p239, %p240
      %p243 = scmp.ne.s32.totalorder %s228, %s242
      %p244 = scmp.eq.s32.totalorder %s29, 0
      %p245 = por %p243, %p244
      %s247 = sadd.s32 %s246, 1
      %p250 = scmp.eq.s32.totalorder %s23, 1
      %p251 = scmp.ne.s32.totalorder %s246, %s248
      %p252 = scmp.eq.s32.totalorder %s23, 0
      %p253 = por %p251, %p252
      %p254 = scmp.ne.s32.totalorder %s246, %s248
      %p255 = scmp.eq.s32.totalorder %s28, 1
      %p256 = por %p254, %p255
      %p257 = scmp.ne.s32.totalorder %s248, %s249
      %p258 = scmp.eq.s32.totalorder %s28, 0
      %p259 = por %p257, %p258
      %p260 = scmp.ne.s32.totalorder %s248, %s249
      %p261 = scmp.eq.s32.totalorder %s29, 1
      %p262 = por %p260, %p261
      %p264 = scmp.ne.s32.totalorder %s249, %s263
      %p265 = scmp.eq.s32.totalorder %s29, 0
      %p266 = por %p264, %p265
      %s267 = ssub.s32 %s23, %s30
      %p268 = scmp.eq.s32.totalorder %s267, 0
      %s270 = sadd.s32 %s269, 1
      %s271 = scalar_select %p268, %s269, %s270
      %p274 = pneg %p268
      %p275 = scmp.eq.s32.totalorder %s23, 1
      %p276 = por %p274, %p275
      %p277 = scmp.ne.s32.totalorder %s269, %s272
      %p278 = scmp.eq.s32.totalorder %s23, 0
      %p279 = por %p277, %p278
      %p280 = scmp.ne.s32.totalorder %s269, %s272
      %p281 = scmp.eq.s32.totalorder %s28, 1
      %p282 = por %p280, %p281
      %p283 = scmp.ne.s32.totalorder %s272, %s273
      %p284 = scmp.eq.s32.totalorder %s28, 0
      %p285 = por %p283, %p284
      %p286 = scmp.ne.s32.totalorder %s272, %s273
      %p287 = scmp.eq.s32.totalorder %s29, 1
      %p288 = por %p286, %p287
      %p290 = scmp.ne.s32.totalorder %s273, %s289
      %p291 = scmp.eq.s32.totalorder %s29, 0
      %p292 = por %p290, %p291
      %p293 = scmp.le.s32.totalorder 1, %s23
      %p294 = scmp.lt.s32.totalorder %s23, 3
      %p295 = pnand %p293, %p294
      %p296 = pneg %p295
      // Predicated region
      $region9: #{tpu_custom_call.1} parent=5 // pred_check
        _
      $region10: #{tpu_custom_call.1} parent=5 // pred_check_branch
        %298 = sbr.rel (%p295) target = $region12
      $region11: #{tpu_custom_call.1} parent=5 // pred_region
        %s299 = ssub.s32 %s23, 1
        // Predicated region
        $region13: #{tpu_custom_call.1} parent=11 // pred_check
          %p300 = pneg %p70
        $region14: #{tpu_custom_call.1} parent=11 // pred_check_branch
          %302 = sbr.rel (%p300) target = $region16
        $region15: #{tpu_custom_call.1} parent=11 // pred_region
          _
        $region16: #{tpu_custom_call.1} parent=11 // pred_fallthru
          _
        // Predicated region
        $region17: #{tpu_custom_call.1} parent=11 // pred_check
          %p303 = pneg %p91
        $region18: #{tpu_custom_call.1} parent=11 // pred_check_branch
          %305 = sbr.rel (%p303) target = $region20
        $region19: #{tpu_custom_call.1} parent=11 // pred_region
          _
        $region20: #{tpu_custom_call.1} parent=11 // pred_fallthru
          _
        // Predicated region
        $region21: #{tpu_custom_call.1} parent=11 // pred_check
          %p306 = pneg %p112
        $region22: #{tpu_custom_call.1} parent=11 // pred_check_branch
          %308 = sbr.rel (%p306) target = $region24
        $region23: #{tpu_custom_call.1} parent=11 // pred_region
          _
        $region24: #{tpu_custom_call.1} parent=11 // pred_fallthru
          _
        // Predicated region
        $region25: #{tpu_custom_call.1} parent=11 // pred_check
          %p309 = pneg %p133
        $region26: #{tpu_custom_call.1} parent=11 // pred_check_branch
          %311 = sbr.rel (%p309) target = $region28
        $region27: #{tpu_custom_call.1} parent=11 // pred_region
          _
        $region28: #{tpu_custom_call.1} parent=11 // pred_fallthru
          _
        // Predicated region
        $region29: #{tpu_custom_call.1} parent=11 // pred_check
          %p312 = pneg %p154
        $region30: #{tpu_custom_call.1} parent=11 // pred_check_branch
          %314 = sbr.rel (%p312) target = $region32
        $region31: #{tpu_custom_call.1} parent=11 // pred_region
          _
        $region32: #{tpu_custom_call.1} parent=11 // pred_fallthru
          _
        // Predicated region
        $region33: #{tpu_custom_call.1} parent=11 // pred_check
          %p315 = pneg %p175
        $region34: #{tpu_custom_call.1} parent=11 // pred_check_branch
          %317 = sbr.rel (%p315) target = $region36
        $region35: #{tpu_custom_call.1} parent=11 // pred_region
          _
        $region36: #{tpu_custom_call.1} parent=11 // pred_fallthru
          _
        // Predicated region
        $region37: #{tpu_custom_call.1} parent=11 // pred_check
          %p318 = pneg %p196
        $region38: #{tpu_custom_call.1} parent=11 // pred_check_branch
          %320 = sbr.rel (%p318) target = $region40
        $region39: #{tpu_custom_call.1} parent=11 // pred_region
          _
        $region40: #{tpu_custom_call.1} parent=11 // pred_fallthru
          _
        // Predicated region
        $region41: #{tpu_custom_call.1} parent=11 // pred_check
          %p321 = pneg %p217
        $region42: #{tpu_custom_call.1} parent=11 // pred_check_branch
          %323 = sbr.rel (%p321) target = $region44
        $region43: #{tpu_custom_call.1} parent=11 // pred_region
          _
        $region44: #{tpu_custom_call.1} parent=11 // pred_fallthru
          _
        // Predicated region
        $region45: #{tpu_custom_call.1} parent=11 // pred_check
          %p324 = pneg %p238
        $region46: #{tpu_custom_call.1} parent=11 // pred_check_branch
          %326 = sbr.rel (%p324) target = $region48
        $region47: #{tpu_custom_call.1} parent=11 // pred_region
          _
        $region48: #{tpu_custom_call.1} parent=11 // pred_fallthru
          _
        // Predicated region
        $region49: #{tpu_custom_call.1} parent=11 // pred_check
          %p327 = pneg %p259
        $region50: #{tpu_custom_call.1} parent=11 // pred_check_branch
          %329 = sbr.rel (%p327) target = $region52
        $region51: #{tpu_custom_call.1} parent=11 // pred_region
          _
        $region52: #{tpu_custom_call.1} parent=11 // pred_fallthru
          _
      $region12: #{tpu_custom_call.1} parent=5 // pred_fallthru
        _
      %p330 = scmp.lt.s32.totalorder %s23, 2
      // Predicated region
      $region53: #{tpu_custom_call.1} parent=5 // pred_check
        %p331 = pneg %p330
      $region54: #{tpu_custom_call.1} parent=5 // pred_check_branch
        %333 = sbr.rel (%p331) target = $region56
      $region55: #{tpu_custom_call.1} parent=5 // pred_region
        // Predicated region
        $region57: #{tpu_custom_call.1} parent=55 // pred_check
          %p334 = pneg %p43
        $region58: #{tpu_custom_call.1} parent=55 // pred_check_branch
          %336 = sbr.rel (%p334) target = $region60
        $region59: #{tpu_custom_call.1} parent=55 // pred_region
          %s337 = sand.u32 %s33, 1
          %s338 = scalar_lea.sflag [#allocation6], %s337
          %s339 = sand.u32 %s33, 1
          %s340 = smul.addr %s339, 128
          %s341 = scalar_lea.vmem [#allocation5], %s340
          %343 = vsyncadd %s338, 0
          %s344 = smul.addr %s23, 32
          %s345 = smul.addr %s344, 4
          %s346 = scalar_lea.hbm %s0, %s345
          %s347 = sshll.u32 %s346, 4
          %s348 = int_to_ptr.hbm [resolvable:$true] %s347
          %s349 = sshll.u32 %s341, 4
          %s350 = int_to_ptr.vmem [resolvable:$true] %s349
          %355 = dma.hbm_to_vmem [thread:$0]  %s348, 2048, %s350, %s338, 64, 64, 4
        $region60: #{tpu_custom_call.1} parent=55 // pred_fallthru
          _
      $region56: #{tpu_custom_call.1} parent=5 // pred_fallthru
        _
      %p356 = scmp.le.s32.totalorder 1, %s23
      %p357 = scmp.lt.s32.totalorder %s23, 3
      %p358 = pnand %p356, %p357
      %p359 = pneg %p358
      // Predicated region
      $region61: #{tpu_custom_call.1} parent=5 // pred_check
        _
      $region62: #{tpu_custom_call.1} parent=5 // pred_check_branch
        %361 = sbr.rel (%p358) target = $region64
      $region63: #{tpu_custom_call.1} parent=5 // pred_region
        %s362 = ssub.s32 %s23, 1
        %s363 = sand.u32 %s36, 1
        %s364 = scalar_lea.sflag [#allocation6], %s363
        %s365 = sand.u32 %s36, 1
        %s366 = smul.addr %s365, 128
        %s367 = scalar_lea.vmem [#allocation5], %s366
        // Predicated region
        $region65: #{tpu_custom_call.1} parent=63 // pred_check
          %p368 = pneg %p49
        $region66: #{tpu_custom_call.1} parent=63 // pred_check_branch
          %370 = sbr.rel (%p368) target = $region68
        $region67: #{tpu_custom_call.1} parent=63 // pred_region
          %372 = dma.done %s364, 2048
        $region68: #{tpu_custom_call.1} parent=63 // pred_fallthru
          _
        %s373 = sand.u32 %s36, 1
        %s374 = scalar_lea.sflag [#allocation6], %s373
        %s375 = sand.u32 %s36, 1
        %s376 = smul.addr %s375, 128
        %s377 = scalar_lea.vmem [#allocation5], %s376
        %p378 = pneg %p49
        %p379 = pneg %p46
        %p380 = pneg %p70
        %p381 = pneg %p67
        %p382 = pneg %p91
        %p383 = pneg %p88
        %p384 = pneg %p112
        %p385 = pneg %p109
        %p386 = pneg %p133
        %p387 = pneg %p130
        %p388 = pneg %p154
        %p389 = pneg %p151
        %p390 = pneg %p175
        %p391 = pneg %p172
        %p392 = pneg %p196
        %p393 = pneg %p193
        %p394 = pneg %p217
        %p395 = pneg %p214
        %p396 = pneg %p238
        %p397 = pneg %p235
        %p398 = pneg %p259
        %p399 = pneg %p256
        %p400 = pneg %p285
        %p401 = pneg %p282
        %s402 = sand.u32 %s272, 1
        %s403 = scalar_lea.sflag [#allocation7], %s402
        %s404 = sand.u32 %s272, 1
        %s405 = smul.addr %s404, 16
        %s406 = scalar_lea.vmem [#allocation8], %s405
        %v408 = vld [vmem:[%s367] sm:$0xf]
        %v409 = vld [vmem:[%s367 + $0x4] sm:$0xf]
        %v410 = vld [vmem:[%s367 + $0x8] sm:$0xf]
        %v411 = vld [vmem:[%s367 + $0xc] sm:$0xf]
        %v412 = vld [vmem:[%s367 + $0x10] sm:$0xf]
        %v413 = vld [vmem:[%s367 + $0x14] sm:$0xf]
        %v414 = vld [vmem:[%s367 + $0x18] sm:$0xf]
        %v415 = vld [vmem:[%s367 + $0x1c] sm:$0xf]
        %v416 = vld [vmem:[%s367 + $0x20] sm:$0xf]
        %v417 = vld [vmem:[%s367 + $0x24] sm:$0xf]
        %v418 = vld [vmem:[%s367 + $0x28] sm:$0xf]
        %v419 = vld [vmem:[%s367 + $0x2c] sm:$0xf]
        %v420 = vld [vmem:[%s367 + $0x30] sm:$0xf]
        %v421 = vld [vmem:[%s367 + $0x34] sm:$0xf]
        %v422 = vld [vmem:[%s367 + $0x38] sm:$0xf]
        %v423 = vld [vmem:[%s367 + $0x3c] sm:$0xf]
        %v424 = vld [vmem:[%s367 + $0x40] sm:$0xf]
        %v425 = vld [vmem:[%s367 + $0x44] sm:$0xf]
        %v426 = vld [vmem:[%s367 + $0x48] sm:$0xf]
        %v427 = vld [vmem:[%s367 + $0x4c] sm:$0xf]
        %v428 = vld [vmem:[%s367 + $0x50] sm:$0xf]
        %v429 = vld [vmem:[%s367 + $0x54] sm:$0xf]
        %v430 = vld [vmem:[%s367 + $0x58] sm:$0xf]
        %v431 = vld [vmem:[%s367 + $0x5c] sm:$0xf]
        %v432 = vld [vmem:[%s367 + $0x60] sm:$0xf]
        %v433 = vld [vmem:[%s367 + $0x64] sm:$0xf]
        %v434 = vld [vmem:[%s367 + $0x68] sm:$0xf]
        %v435 = vld [vmem:[%s367 + $0x6c] sm:$0xf]
        %v436 = vld [vmem:[%s367 + $0x70] sm:$0xf]
        %v437 = vld [vmem:[%s367 + $0x74] sm:$0xf]
        %v438 = vld [vmem:[%s367 + $0x78] sm:$0xf]
        %v439 = vld [vmem:[%s367 + $0x7c] sm:$0xf]
        %v440 = vld [vmem:[%s1] sm:$0xf]
        %v441 = vld [vmem:[%s1 + $0x4] sm:$0xf]
        %v442 = vld [vmem:[%s2] sm:$0x1]
        %v444 = vperm.slane %v442, 0
        %v478 = vunpack.c.l.b16 %v408
        %v479 = vunpack.c.l.b16 %v409
        %v480 = vunpack.c.l.b16 %v410
        %v481 = vunpack.c.l.b16 %v411
        %v482 = vunpack.c.l.b16 %v412
        %v483 = vunpack.c.l.b16 %v413
        %v484 = vunpack.c.l.b16 %v414
        %v485 = vunpack.c.l.b16 %v415
        %v486 = vunpack.c.l.b16 %v416
        %v487 = vunpack.c.l.b16 %v417
        %v488 = vunpack.c.l.b16 %v418
        %v489 = vunpack.c.l.b16 %v419
        %v490 = vunpack.c.l.b16 %v420
        %v491 = vunpack.c.l.b16 %v421
        %v492 = vunpack.c.l.b16 %v422
        %v493 = vunpack.c.l.b16 %v423
        %v494 = vunpack.c.l.b16 %v424
        %v495 = vunpack.c.l.b16 %v425
        %v496 = vunpack.c.l.b16 %v426
        %v497 = vunpack.c.l.b16 %v427
        %v498 = vunpack.c.l.b16 %v428
        %v499 = vunpack.c.l.b16 %v429
        %v500 = vunpack.c.l.b16 %v430
        %v501 = vunpack.c.l.b16 %v431
        %v502 = vunpack.c.l.b16 %v432
        %v503 = vunpack.c.l.b16 %v433
        %v504 = vunpack.c.l.b16 %v434
        %v505 = vunpack.c.l.b16 %v435
        %v506 = vunpack.c.l.b16 %v436
        %v507 = vunpack.c.l.b16 %v437
        %v508 = vunpack.c.l.b16 %v438
        %v509 = vunpack.c.l.b16 %v439
        %v510 = vpack.c.b16 %v479, %v478
        %v511 = vpack.c.b16 %v481, %v480
        %v512 = vpack.c.b16 %v483, %v482
        %v513 = vpack.c.b16 %v485, %v484
        %v514 = vpack.c.b16 %v487, %v486
        %v515 = vpack.c.b16 %v489, %v488
        %v516 = vpack.c.b16 %v491, %v490
        %v517 = vpack.c.b16 %v493, %v492
        %v518 = vpack.c.b16 %v495, %v494
        %v519 = vpack.c.b16 %v497, %v496
        %v520 = vpack.c.b16 %v499, %v498
        %v521 = vpack.c.b16 %v501, %v500
        %v522 = vpack.c.b16 %v503, %v502
        %v523 = vpack.c.b16 %v505, %v504
        %v524 = vpack.c.b16 %v507, %v506
        %v525 = vpack.c.b16 %v509, %v508
        %v528 = vunpack.c.l.b16 %v440
        %v529 = vunpack.c.l.b16 %v441
        %v530 = vpack.c.b16 %v529, %v528
        %vm532 = vcmask 130048
        %v534 = vsel %vm532, %v510, 0
        %v537 = vsel %vm532, %v511, 0
        %v540 = vsel %vm532, %v512, 0
        %v543 = vsel %vm532, %v513, 0
        %v546 = vsel %vm532, %v514, 0
        %v549 = vsel %vm532, %v515, 0
        %v552 = vsel %vm532, %v516, 0
        %v555 = vsel %vm532, %v517, 0
        %v558 = vsel %vm532, %v518, 0
        %v561 = vsel %vm532, %v519, 0
        %v564 = vsel %vm532, %v520, 0
        %v567 = vsel %vm532, %v521, 0
        %v570 = vsel %vm532, %v522, 0
        %v573 = vsel %vm532, %v523, 0
        %v576 = vsel %vm532, %v524, 0
        %v579 = vsel %vm532, %v525, 0
        %581 = vmatpush.bf16.msra.mxu0 0
        %582 = vmatpush.bf16.msra.mxu0 0
        %583 = vmatpush.bf16.msra.mxu0 0
        %584 = vmatpush.bf16.msra.mxu0 0
        %585 = vmatpush.bf16.msra.mxu0 0
        %586 = vmatpush.bf16.msra.mxu0 0
        %587 = vmatpush.bf16.msra.mxu0 0
        %588 = vmatpush.bf16.msra.mxu0 %v530
        %589 = vmatmul.bf16.gmra.mxu0 %v534
        %v590 = vpop.f32.mrf.mxu0
        %v591 = vadd.f32 %v444, %v590
        %v592 = vpop.f32.mrf.mxu0
        %v593 = vadd.f32 %v444, %v592
        %594 = vmatmul.bf16.gmra.mxu0 %v537
        %v595 = vpop.f32.mrf.mxu0
        %v596 = vadd.f32 %v444, %v595
        %v597 = vpop.f32.mrf.mxu0
        %v598 = vadd.f32 %v444, %v597
        %599 = vmatmul.bf16.gmra.mxu0 %v540
        %v600 = vpop.f32.mrf.mxu0
        %v601 = vadd.f32 %v444, %v600
        %v602 = vpop.f32.mrf.mxu0
        %v603 = vadd.f32 %v444, %v602
        %604 = vmatmul.bf16.gmra.mxu0 %v543
        %v605 = vpop.f32.mrf.mxu0
        %v606 = vadd.f32 %v444, %v605
        %v607 = vpop.f32.mrf.mxu0
        %v608 = vadd.f32 %v444, %v607
        %609 = vmatmul.bf16.gmra.mxu0 %v546
        %v610 = vpop.f32.mrf.mxu0
        %v611 = vadd.f32 %v444, %v610
        %v612 = vpop.f32.mrf.mxu0
        %v613 = vadd.f32 %v444, %v612
        %614 = vmatmul.bf16.gmra.mxu0 %v549
        %v615 = vpop.f32.mrf.mxu0
        %v616 = vadd.f32 %v444, %v615
        %v617 = vpop.f32.mrf.mxu0
        %v618 = vadd.f32 %v444, %v617
        %619 = vmatmul.bf16.gmra.mxu0 %v552
        %v620 = vpop.f32.mrf.mxu0
        %v621 = vadd.f32 %v444, %v620
        %v622 = vpop.f32.mrf.mxu0
        %v623 = vadd.f32 %v444, %v622
        %624 = vmatmul.bf16.gmra.mxu0 %v555
        %v625 = vpop.f32.mrf.mxu0
        %v626 = vadd.f32 %v444, %v625
        %v627 = vpop.f32.mrf.mxu0
        %v628 = vadd.f32 %v444, %v627
        %629 = vmatmul.bf16.gmra.mxu0 %v558
        %v630 = vpop.f32.mrf.mxu0
        %v631 = vadd.f32 %v444, %v630
        %v632 = vpop.f32.mrf.mxu0
        %v633 = vadd.f32 %v444, %v632
        %634 = vmatmul.bf16.gmra.mxu0 %v561
        %v635 = vpop.f32.mrf.mxu0
        %v636 = vadd.f32 %v444, %v635
        %v637 = vpop.f32.mrf.mxu0
        %v638 = vadd.f32 %v444, %v637
        %639 = vmatmul.bf16.gmra.mxu0 %v564
        %v640 = vpop.f32.mrf.mxu0
        %v641 = vadd.f32 %v444, %v640
        %v642 = vpop.f32.mrf.mxu0
        %v643 = vadd.f32 %v444, %v642
        %644 = vmatmul.bf16.gmra.mxu0 %v567
        %v645 = vpop.f32.mrf.mxu0
        %v646 = vadd.f32 %v444, %v645
        %v647 = vpop.f32.mrf.mxu0
        %v648 = vadd.f32 %v444, %v647
        %649 = vmatmul.bf16.gmra.mxu0 %v570
        %v650 = vpop.f32.mrf.mxu0
        %v651 = vadd.f32 %v444, %v650
        %v652 = vpop.f32.mrf.mxu0
        %v653 = vadd.f32 %v444, %v652
        %654 = vmatmul.bf16.gmra.mxu0 %v573
        %v655 = vpop.f32.mrf.mxu0
        %v656 = vadd.f32 %v444, %v655
        %v657 = vpop.f32.mrf.mxu0
        %v658 = vadd.f32 %v444, %v657
        %659 = vmatmul.bf16.gmra.mxu0 %v576
        %v660 = vpop.f32.mrf.mxu0
        %v661 = vadd.f32 %v444, %v660
        %v662 = vpop.f32.mrf.mxu0
        %v663 = vadd.f32 %v444, %v662
        %664 = vmatmul.bf16.gmra.mxu0 %v579
        %v665 = vpop.f32.mrf.mxu0
        %v666 = vadd.f32 %v444, %v665
        %v667 = vpop.f32.mrf.mxu0
        %v668 = vadd.f32 %v444, %v667
        %669 = vdwg.mxu0
        %v670 = vxor.u32 %v591, 2147483648
        %v671 = vxor.u32 %v593, 2147483648
        %v672 = vxor.u32 %v596, 2147483648
        %v673 = vxor.u32 %v598, 2147483648
        %v674 = vxor.u32 %v601, 2147483648
        %v675 = vxor.u32 %v603, 2147483648
        %v676 = vxor.u32 %v606, 2147483648
        %v677 = vxor.u32 %v608, 2147483648
        %v678 = vxor.u32 %v611, 2147483648
        %v679 = vxor.u32 %v613, 2147483648
        %v680 = vxor.u32 %v616, 2147483648
        %v681 = vxor.u32 %v618, 2147483648
        %v682 = vxor.u32 %v621, 2147483648
        %v683 = vxor.u32 %v623, 2147483648
        %v684 = vxor.u32 %v626, 2147483648
        %v685 = vxor.u32 %v628, 2147483648
        %v686 = vxor.u32 %v631, 2147483648
        %v687 = vxor.u32 %v633, 2147483648
        %v688 = vxor.u32 %v636, 2147483648
        %v689 = vxor.u32 %v638, 2147483648
        %v690 = vxor.u32 %v641, 2147483648
        %v691 = vxor.u32 %v643, 2147483648
        %v692 = vxor.u32 %v646, 2147483648
        %v693 = vxor.u32 %v648, 2147483648
        %v694 = vxor.u32 %v651, 2147483648
        %v695 = vxor.u32 %v653, 2147483648
        %v696 = vxor.u32 %v656, 2147483648
        %v697 = vxor.u32 %v658, 2147483648
        %v698 = vxor.u32 %v661, 2147483648
        %v699 = vxor.u32 %v663, 2147483648
        %v700 = vxor.u32 %v666, 2147483648
        %v701 = vxor.u32 %v668, 2147483648
        %v702 = vmul.f32 %v670, 1.442695
        %v703 = vpow.pop %v702
        %v704 = vmul.f32 %v671, 1.442695
        %v705 = vpow.pop %v704
        %v706 = vmul.f32 %v672, 1.442695
        %v707 = vpow.pop %v706
        %v708 = vmul.f32 %v673, 1.442695
        %v709 = vpow.pop %v708
        %v710 = vmul.f32 %v674, 1.442695
        %v711 = vpow.pop %v710
        %v712 = vmul.f32 %v675, 1.442695
        %v713 = vpow.pop %v712
        %v714 = vmul.f32 %v676, 1.442695
        %v715 = vpow.pop %v714
        %v716 = vmul.f32 %v677, 1.442695
        %v717 = vpow.pop %v716
        %v718 = vmul.f32 %v678, 1.442695
        %v719 = vpow.pop %v718
        %v720 = vmul.f32 %v679, 1.442695
        %v721 = vpow.pop %v720
        %v722 = vmul.f32 %v680, 1.442695
        %v723 = vpow.pop %v722
        %v724 = vmul.f32 %v681, 1.442695
        %v725 = vpow.pop %v724
        %v726 = vmul.f32 %v682, 1.442695
        %v727 = vpow.pop %v726
        %v728 = vmul.f32 %v683, 1.442695
        %v729 = vpow.pop %v728
        %v730 = vmul.f32 %v684, 1.442695
        %v731 = vpow.pop %v730
        %v732 = vmul.f32 %v685, 1.442695
        %v733 = vpow.pop %v732
        %v734 = vmul.f32 %v686, 1.442695
        %v735 = vpow.pop %v734
        %v736 = vmul.f32 %v687, 1.442695
        %v737 = vpow.pop %v736
        %v738 = vmul.f32 %v688, 1.442695
        %v739 = vpow.pop %v738
        %v740 = vmul.f32 %v689, 1.442695
        %v741 = vpow.pop %v740
        %v742 = vmul.f32 %v690, 1.442695
        %v743 = vpow.pop %v742
        %v744 = vmul.f32 %v691, 1.442695
        %v745 = vpow.pop %v744
        %v746 = vmul.f32 %v692, 1.442695
        %v747 = vpow.pop %v746
        %v748 = vmul.f32 %v693, 1.442695
        %v749 = vpow.pop %v748
        %v750 = vmul.f32 %v694, 1.442695
        %v751 = vpow.pop %v750
        %v752 = vmul.f32 %v695, 1.442695
        %v753 = vpow.pop %v752
        %v754 = vmul.f32 %v696, 1.442695
        %v755 = vpow.pop %v754
        %v756 = vmul.f32 %v697, 1.442695
        %v757 = vpow.pop %v756
        %v758 = vmul.f32 %v698, 1.442695
        %v759 = vpow.pop %v758
        %v760 = vmul.f32 %v699, 1.442695
        %v761 = vpow.pop %v760
        %v762 = vmul.f32 %v700, 1.442695
        %v763 = vpow.pop %v762
        %v764 = vmul.f32 %v701, 1.442695
        %v765 = vpow.pop %v764
        %v766 = vadd.f32 %v703, 1.0
        %v767 = vadd.f32 %v705, 1.0
        %v768 = vadd.f32 %v707, 1.0
        %v769 = vadd.f32 %v709, 1.0
        %v770 = vadd.f32 %v711, 1.0
        %v771 = vadd.f32 %v713, 1.0
        %v772 = vadd.f32 %v715, 1.0
        %v773 = vadd.f32 %v717, 1.0
        %v774 = vadd.f32 %v719, 1.0
        %v775 = vadd.f32 %v721, 1.0
        %v776 = vadd.f32 %v723, 1.0
        %v777 = vadd.f32 %v725, 1.0
        %v778 = vadd.f32 %v727, 1.0
        %v779 = vadd.f32 %v729, 1.0
        %v780 = vadd.f32 %v731, 1.0
        %v781 = vadd.f32 %v733, 1.0
        %v782 = vadd.f32 %v735, 1.0
        %v783 = vadd.f32 %v737, 1.0
        %v784 = vadd.f32 %v739, 1.0
        %v785 = vadd.f32 %v741, 1.0
        %v786 = vadd.f32 %v743, 1.0
        %v787 = vadd.f32 %v745, 1.0
        %v788 = vadd.f32 %v747, 1.0
        %v789 = vadd.f32 %v749, 1.0
        %v790 = vadd.f32 %v751, 1.0
        %v791 = vadd.f32 %v753, 1.0
        %v792 = vadd.f32 %v755, 1.0
        %v793 = vadd.f32 %v757, 1.0
        %v794 = vadd.f32 %v759, 1.0
        %v795 = vadd.f32 %v761, 1.0
        %v796 = vadd.f32 %v763, 1.0
        %v797 = vadd.f32 %v765, 1.0
        %v798 = vrcp.pop %v766
        %v799 = vmul.f32 %v766, %v798
        %v800 = vsub.f32 1.0, %v799
        %v801 = vmul.f32 %v798, %v800
        %v802 = vadd.f32 %v798, %v801
        %vm803 = vweird.f32 %v766
        %vm804 = vweird.f32 %v798
        %vm805 = vmor %vm803, %vm804
        %v806 = vsel %vm805, %v798, %v802
        %v807 = vand.u32 2147483647, %v766
        %vm808 = vcmp.eq.f32.partialorder %v807, 8.507059e+37
        %v809 = vand.u32 %v766, 2147483648
        %v810 = vor.u32 1.1754944e-38, %v809
        %v811 = vsel %vm808, %v810, %v806
        %v812 = vmul.f32 1.0, %v811
        %v813 = vrcp.pop %v767
        %v814 = vmul.f32 %v767, %v813
        %v815 = vsub.f32 1.0, %v814
        %v816 = vmul.f32 %v813, %v815
        %v817 = vadd.f32 %v813, %v816
        %vm818 = vweird.f32 %v767
        %vm819 = vweird.f32 %v813
        %vm820 = vmor %vm818, %vm819
        %v821 = vsel %vm820, %v813, %v817
        %v822 = vand.u32 2147483647, %v767
        %vm823 = vcmp.eq.f32.partialorder %v822, 8.507059e+37
        %v824 = vand.u32 %v767, 2147483648
        %v825 = vor.u32 1.1754944e-38, %v824
        %v826 = vsel %vm823, %v825, %v821
        %v827 = vmul.f32 1.0, %v826
        %v828 = vrcp.pop %v768
        %v829 = vmul.f32 %v768, %v828
        %v830 = vsub.f32 1.0, %v829
        %v831 = vmul.f32 %v828, %v830
        %v832 = vadd.f32 %v828, %v831
        %vm833 = vweird.f32 %v768
        %vm834 = vweird.f32 %v828
        %vm835 = vmor %vm833, %vm834
        %v836 = vsel %vm835, %v828, %v832
        %v837 = vand.u32 2147483647, %v768
        %vm838 = vcmp.eq.f32.partialorder %v837, 8.507059e+37
        %v839 = vand.u32 %v768, 2147483648
        %v840 = vor.u32 1.1754944e-38, %v839
        %v841 = vsel %vm838, %v840, %v836
        %v842 = vmul.f32 1.0, %v841
        %v843 = vrcp.pop %v769
        %v844 = vmul.f32 %v769, %v843
        %v845 = vsub.f32 1.0, %v844
        %v846 = vmul.f32 %v843, %v845
        %v847 = vadd.f32 %v843, %v846
        %vm848 = vweird.f32 %v769
        %vm849 = vweird.f32 %v843
        %vm850 = vmor %vm848, %vm849
        %v851 = vsel %vm850, %v843, %v847
        %v852 = vand.u32 2147483647, %v769
        %vm853 = vcmp.eq.f32.partialorder %v852, 8.507059e+37
        %v854 = vand.u32 %v769, 2147483648
        %v855 = vor.u32 1.1754944e-38, %v854
        %v856 = vsel %vm853, %v855, %v851
        %v857 = vmul.f32 1.0, %v856
        %v858 = vrcp.pop %v770
        %v859 = vmul.f32 %v770, %v858
        %v860 = vsub.f32 1.0, %v859
        %v861 = vmul.f32 %v858, %v860
        %v862 = vadd.f32 %v858, %v861
        %vm863 = vweird.f32 %v770
        %vm864 = vweird.f32 %v858
        %vm865 = vmor %vm863, %vm864
        %v866 = vsel %vm865, %v858, %v862
        %v867 = vand.u32 2147483647, %v770
        %vm868 = vcmp.eq.f32.partialorder %v867, 8.507059e+37
        %v869 = vand.u32 %v770, 2147483648
        %v870 = vor.u32 1.1754944e-38, %v869
        %v871 = vsel %vm868, %v870, %v866
        %v872 = vmul.f32 1.0, %v871
        %v873 = vrcp.pop %v771
        %v874 = vmul.f32 %v771, %v873
        %v875 = vsub.f32 1.0, %v874
        %v876 = vmul.f32 %v873, %v875
        %v877 = vadd.f32 %v873, %v876
        %vm878 = vweird.f32 %v771
        %vm879 = vweird.f32 %v873
        %vm880 = vmor %vm878, %vm879
        %v881 = vsel %vm880, %v873, %v877
        %v882 = vand.u32 2147483647, %v771
        %vm883 = vcmp.eq.f32.partialorder %v882, 8.507059e+37
        %v884 = vand.u32 %v771, 2147483648
        %v885 = vor.u32 1.1754944e-38, %v884
        %v886 = vsel %vm883, %v885, %v881
        %v887 = vmul.f32 1.0, %v886
        %v888 = vrcp.pop %v772
        %v889 = vmul.f32 %v772, %v888
        %v890 = vsub.f32 1.0, %v889
        %v891 = vmul.f32 %v888, %v890
        %v892 = vadd.f32 %v888, %v891
        %vm893 = vweird.f32 %v772
        %vm894 = vweird.f32 %v888
        %vm895 = vmor %vm893, %vm894
        %v896 = vsel %vm895, %v888, %v892
        %v897 = vand.u32 2147483647, %v772
        %vm898 = vcmp.eq.f32.partialorder %v897, 8.507059e+37
        %v899 = vand.u32 %v772, 2147483648
        %v900 = vor.u32 1.1754944e-38, %v899
        %v901 = vsel %vm898, %v900, %v896
        %v902 = vmul.f32 1.0, %v901
        %v903 = vrcp.pop %v773
        %v904 = vmul.f32 %v773, %v903
        %v905 = vsub.f32 1.0, %v904
        %v906 = vmul.f32 %v903, %v905
        %v907 = vadd.f32 %v903, %v906
        %vm908 = vweird.f32 %v773
        %vm909 = vweird.f32 %v903
        %vm910 = vmor %vm908, %vm909
        %v911 = vsel %vm910, %v903, %v907
        %v912 = vand.u32 2147483647, %v773
        %vm913 = vcmp.eq.f32.partialorder %v912, 8.507059e+37
        %v914 = vand.u32 %v773, 2147483648
        %v915 = vor.u32 1.1754944e-38, %v914
        %v916 = vsel %vm913, %v915, %v911
        %v917 = vmul.f32 1.0, %v916
        %v918 = vrcp.pop %v774
        %v919 = vmul.f32 %v774, %v918
        %v920 = vsub.f32 1.0, %v919
        %v921 = vmul.f32 %v918, %v920
        %v922 = vadd.f32 %v918, %v921
        %vm923 = vweird.f32 %v774
        %vm924 = vweird.f32 %v918
        %vm925 = vmor %vm923, %vm924
        %v926 = vsel %vm925, %v918, %v922
        %v927 = vand.u32 2147483647, %v774
        %vm928 = vcmp.eq.f32.partialorder %v927, 8.507059e+37
        %v929 = vand.u32 %v774, 2147483648
        %v930 = vor.u32 1.1754944e-38, %v929
        %v931 = vsel %vm928, %v930, %v926
        %v932 = vmul.f32 1.0, %v931
        %v933 = vrcp.pop %v775
        %v934 = vmul.f32 %v775, %v933
        %v935 = vsub.f32 1.0, %v934
        %v936 = vmul.f32 %v933, %v935
        %v937 = vadd.f32 %v933, %v936
        %vm938 = vweird.f32 %v775
        %vm939 = vweird.f32 %v933
        %vm940 = vmor %vm938, %vm939
        %v941 = vsel %vm940, %v933, %v937
        %v942 = vand.u32 2147483647, %v775
        %vm943 = vcmp.eq.f32.partialorder %v942, 8.507059e+37
        %v944 = vand.u32 %v775, 2147483648
        %v945 = vor.u32 1.1754944e-38, %v944
        %v946 = vsel %vm943, %v945, %v941
        %v947 = vmul.f32 1.0, %v946
        %v948 = vrcp.pop %v776
        %v949 = vmul.f32 %v776, %v948
        %v950 = vsub.f32 1.0, %v949
        %v951 = vmul.f32 %v948, %v950
        %v952 = vadd.f32 %v948, %v951
        %vm953 = vweird.f32 %v776
        %vm954 = vweird.f32 %v948
        %vm955 = vmor %vm953, %vm954
        %v956 = vsel %vm955, %v948, %v952
        %v957 = vand.u32 2147483647, %v776
        %vm958 = vcmp.eq.f32.partialorder %v957, 8.507059e+37
        %v959 = vand.u32 %v776, 2147483648
        %v960 = vor.u32 1.1754944e-38, %v959
        %v961 = vsel %vm958, %v960, %v956
        %v962 = vmul.f32 1.0, %v961
        %v963 = vrcp.pop %v777
        %v964 = vmul.f32 %v777, %v963
        %v965 = vsub.f32 1.0, %v964
        %v966 = vmul.f32 %v963, %v965
        %v967 = vadd.f32 %v963, %v966
        %vm968 = vweird.f32 %v777
        %vm969 = vweird.f32 %v963
        %vm970 = vmor %vm968, %vm969
        %v971 = vsel %vm970, %v963, %v967
        %v972 = vand.u32 2147483647, %v777
        %vm973 = vcmp.eq.f32.partialorder %v972, 8.507059e+37
        %v974 = vand.u32 %v777, 2147483648
        %v975 = vor.u32 1.1754944e-38, %v974
        %v976 = vsel %vm973, %v975, %v971
        %v977 = vmul.f32 1.0, %v976
        %v978 = vrcp.pop %v778
        %v979 = vmul.f32 %v778, %v978
        %v980 = vsub.f32 1.0, %v979
        %v981 = vmul.f32 %v978, %v980
        %v982 = vadd.f32 %v978, %v981
        %vm983 = vweird.f32 %v778
        %vm984 = vweird.f32 %v978
        %vm985 = vmor %vm983, %vm984
        %v986 = vsel %vm985, %v978, %v982
        %v987 = vand.u32 2147483647, %v778
        %vm988 = vcmp.eq.f32.partialorder %v987, 8.507059e+37
        %v989 = vand.u32 %v778, 2147483648
        %v990 = vor.u32 1.1754944e-38, %v989
        %v991 = vsel %vm988, %v990, %v986
        %v992 = vmul.f32 1.0, %v991
        %v993 = vrcp.pop %v779
        %v994 = vmul.f32 %v779, %v993
        %v995 = vsub.f32 1.0, %v994
        %v996 = vmul.f32 %v993, %v995
        %v997 = vadd.f32 %v993, %v996
        %vm998 = vweird.f32 %v779
        %vm999 = vweird.f32 %v993
        %vm1000 = vmor %vm998, %vm999
        %v1001 = vsel %vm1000, %v993, %v997
        %v1002 = vand.u32 2147483647, %v779
        %vm1003 = vcmp.eq.f32.partialorder %v1002, 8.507059e+37
        %v1004 = vand.u32 %v779, 2147483648
        %v1005 = vor.u32 1.1754944e-38, %v1004
        %v1006 = vsel %vm1003, %v1005, %v1001
        %v1007 = vmul.f32 1.0, %v1006
        %v1008 = vrcp.pop %v780
        %v1009 = vmul.f32 %v780, %v1008
        %v1010 = vsub.f32 1.0, %v1009
        %v1011 = vmul.f32 %v1008, %v1010
        %v1012 = vadd.f32 %v1008, %v1011
        %vm1013 = vweird.f32 %v780
        %vm1014 = vweird.f32 %v1008
        %vm1015 = vmor %vm1013, %vm1014
        %v1016 = vsel %vm1015, %v1008, %v1012
        %v1017 = vand.u32 2147483647, %v780
        %vm1018 = vcmp.eq.f32.partialorder %v1017, 8.507059e+37
        %v1019 = vand.u32 %v780, 2147483648
        %v1020 = vor.u32 1.1754944e-38, %v1019
        %v1021 = vsel %vm1018, %v1020, %v1016
        %v1022 = vmul.f32 1.0, %v1021
        %v1023 = vrcp.pop %v781
        %v1024 = vmul.f32 %v781, %v1023
        %v1025 = vsub.f32 1.0, %v1024
        %v1026 = vmul.f32 %v1023, %v1025
        %v1027 = vadd.f32 %v1023, %v1026
        %vm1028 = vweird.f32 %v781
        %vm1029 = vweird.f32 %v1023
        %vm1030 = vmor %vm1028, %vm1029
        %v1031 = vsel %vm1030, %v1023, %v1027
        %v1032 = vand.u32 2147483647, %v781
        %vm1033 = vcmp.eq.f32.partialorder %v1032, 8.507059e+37
        %v1034 = vand.u32 %v781, 2147483648
        %v1035 = vor.u32 1.1754944e-38, %v1034
        %v1036 = vsel %vm1033, %v1035, %v1031
        %v1037 = vmul.f32 1.0, %v1036
        %v1038 = vrcp.pop %v782
        %v1039 = vmul.f32 %v782, %v1038
        %v1040 = vsub.f32 1.0, %v1039
        %v1041 = vmul.f32 %v1038, %v1040
        %v1042 = vadd.f32 %v1038, %v1041
        %vm1043 = vweird.f32 %v782
        %vm1044 = vweird.f32 %v1038
        %vm1045 = vmor %vm1043, %vm1044
        %v1046 = vsel %vm1045, %v1038, %v1042
        %v1047 = vand.u32 2147483647, %v782
        %vm1048 = vcmp.eq.f32.partialorder %v1047, 8.507059e+37
        %v1049 = vand.u32 %v782, 2147483648
        %v1050 = vor.u32 1.1754944e-38, %v1049
        %v1051 = vsel %vm1048, %v1050, %v1046
        %v1052 = vmul.f32 1.0, %v1051
        %v1053 = vrcp.pop %v783
        %v1054 = vmul.f32 %v783, %v1053
        %v1055 = vsub.f32 1.0, %v1054
        %v1056 = vmul.f32 %v1053, %v1055
        %v1057 = vadd.f32 %v1053, %v1056
        %vm1058 = vweird.f32 %v783
        %vm1059 = vweird.f32 %v1053
        %vm1060 = vmor %vm1058, %vm1059
        %v1061 = vsel %vm1060, %v1053, %v1057
        %v1062 = vand.u32 2147483647, %v783
        %vm1063 = vcmp.eq.f32.partialorder %v1062, 8.507059e+37
        %v1064 = vand.u32 %v783, 2147483648
        %v1065 = vor.u32 1.1754944e-38, %v1064
        %v1066 = vsel %vm1063, %v1065, %v1061
        %v1067 = vmul.f32 1.0, %v1066
        %v1068 = vrcp.pop %v784
        %v1069 = vmul.f32 %v784, %v1068
        %v1070 = vsub.f32 1.0, %v1069
        %v1071 = vmul.f32 %v1068, %v1070
        %v1072 = vadd.f32 %v1068, %v1071
        %vm1073 = vweird.f32 %v784
        %vm1074 = vweird.f32 %v1068
        %vm1075 = vmor %vm1073, %vm1074
        %v1076 = vsel %vm1075, %v1068, %v1072
        %v1077 = vand.u32 2147483647, %v784
        %vm1078 = vcmp.eq.f32.partialorder %v1077, 8.507059e+37
        %v1079 = vand.u32 %v784, 2147483648
        %v1080 = vor.u32 1.1754944e-38, %v1079
        %v1081 = vsel %vm1078, %v1080, %v1076
        %v1082 = vmul.f32 1.0, %v1081
        %v1083 = vrcp.pop %v785
        %v1084 = vmul.f32 %v785, %v1083
        %v1085 = vsub.f32 1.0, %v1084
        %v1086 = vmul.f32 %v1083, %v1085
        %v1087 = vadd.f32 %v1083, %v1086
        %vm1088 = vweird.f32 %v785
        %vm1089 = vweird.f32 %v1083
        %vm1090 = vmor %vm1088, %vm1089
        %v1091 = vsel %vm1090, %v1083, %v1087
        %v1092 = vand.u32 2147483647, %v785
        %vm1093 = vcmp.eq.f32.partialorder %v1092, 8.507059e+37
        %v1094 = vand.u32 %v785, 2147483648
        %v1095 = vor.u32 1.1754944e-38, %v1094
        %v1096 = vsel %vm1093, %v1095, %v1091
        %v1097 = vmul.f32 1.0, %v1096
        %v1098 = vrcp.pop %v786
        %v1099 = vmul.f32 %v786, %v1098
        %v1100 = vsub.f32 1.0, %v1099
        %v1101 = vmul.f32 %v1098, %v1100
        %v1102 = vadd.f32 %v1098, %v1101
        %vm1103 = vweird.f32 %v786
        %vm1104 = vweird.f32 %v1098
        %vm1105 = vmor %vm1103, %vm1104
        %v1106 = vsel %vm1105, %v1098, %v1102
        %v1107 = vand.u32 2147483647, %v786
        %vm1108 = vcmp.eq.f32.partialorder %v1107, 8.507059e+37
        %v1109 = vand.u32 %v786, 2147483648
        %v1110 = vor.u32 1.1754944e-38, %v1109
        %v1111 = vsel %vm1108, %v1110, %v1106
        %v1112 = vmul.f32 1.0, %v1111
        %v1113 = vrcp.pop %v787
        %v1114 = vmul.f32 %v787, %v1113
        %v1115 = vsub.f32 1.0, %v1114
        %v1116 = vmul.f32 %v1113, %v1115
        %v1117 = vadd.f32 %v1113, %v1116
        %vm1118 = vweird.f32 %v787
        %vm1119 = vweird.f32 %v1113
        %vm1120 = vmor %vm1118, %vm1119
        %v1121 = vsel %vm1120, %v1113, %v1117
        %v1122 = vand.u32 2147483647, %v787
        %vm1123 = vcmp.eq.f32.partialorder %v1122, 8.507059e+37
        %v1124 = vand.u32 %v787, 2147483648
        %v1125 = vor.u32 1.1754944e-38, %v1124
        %v1126 = vsel %vm1123, %v1125, %v1121
        %v1127 = vmul.f32 1.0, %v1126
        %v1128 = vrcp.pop %v788
        %v1129 = vmul.f32 %v788, %v1128
        %v1130 = vsub.f32 1.0, %v1129
        %v1131 = vmul.f32 %v1128, %v1130
        %v1132 = vadd.f32 %v1128, %v1131
        %vm1133 = vweird.f32 %v788
        %vm1134 = vweird.f32 %v1128
        %vm1135 = vmor %vm1133, %vm1134
        %v1136 = vsel %vm1135, %v1128, %v1132
        %v1137 = vand.u32 2147483647, %v788
        %vm1138 = vcmp.eq.f32.partialorder %v1137, 8.507059e+37
        %v1139 = vand.u32 %v788, 2147483648
        %v1140 = vor.u32 1.1754944e-38, %v1139
        %v1141 = vsel %vm1138, %v1140, %v1136
        %v1142 = vmul.f32 1.0, %v1141
        %v1143 = vrcp.pop %v789
        %v1144 = vmul.f32 %v789, %v1143
        %v1145 = vsub.f32 1.0, %v1144
        %v1146 = vmul.f32 %v1143, %v1145
        %v1147 = vadd.f32 %v1143, %v1146
        %vm1148 = vweird.f32 %v789
        %vm1149 = vweird.f32 %v1143
        %vm1150 = vmor %vm1148, %vm1149
        %v1151 = vsel %vm1150, %v1143, %v1147
        %v1152 = vand.u32 2147483647, %v789
        %vm1153 = vcmp.eq.f32.partialorder %v1152, 8.507059e+37
        %v1154 = vand.u32 %v789, 2147483648
        %v1155 = vor.u32 1.1754944e-38, %v1154
        %v1156 = vsel %vm1153, %v1155, %v1151
        %v1157 = vmul.f32 1.0, %v1156
        %v1158 = vrcp.pop %v790
        %v1159 = vmul.f32 %v790, %v1158
        %v1160 = vsub.f32 1.0, %v1159
        %v1161 = vmul.f32 %v1158, %v1160
        %v1162 = vadd.f32 %v1158, %v1161
        %vm1163 = vweird.f32 %v790
        %vm1164 = vweird.f32 %v1158
        %vm1165 = vmor %vm1163, %vm1164
        %v1166 = vsel %vm1165, %v1158, %v1162
        %v1167 = vand.u32 2147483647, %v790
        %vm1168 = vcmp.eq.f32.partialorder %v1167, 8.507059e+37
        %v1169 = vand.u32 %v790, 2147483648
        %v1170 = vor.u32 1.1754944e-38, %v1169
        %v1171 = vsel %vm1168, %v1170, %v1166
        %v1172 = vmul.f32 1.0, %v1171
        %v1173 = vrcp.pop %v791
        %v1174 = vmul.f32 %v791, %v1173
        %v1175 = vsub.f32 1.0, %v1174
        %v1176 = vmul.f32 %v1173, %v1175
        %v1177 = vadd.f32 %v1173, %v1176
        %vm1178 = vweird.f32 %v791
        %vm1179 = vweird.f32 %v1173
        %vm1180 = vmor %vm1178, %vm1179
        %v1181 = vsel %vm1180, %v1173, %v1177
        %v1182 = vand.u32 2147483647, %v791
        %vm1183 = vcmp.eq.f32.partialorder %v1182, 8.507059e+37
        %v1184 = vand.u32 %v791, 2147483648
        %v1185 = vor.u32 1.1754944e-38, %v1184
        %v1186 = vsel %vm1183, %v1185, %v1181
        %v1187 = vmul.f32 1.0, %v1186
        %v1188 = vrcp.pop %v792
        %v1189 = vmul.f32 %v792, %v1188
        %v1190 = vsub.f32 1.0, %v1189
        %v1191 = vmul.f32 %v1188, %v1190
        %v1192 = vadd.f32 %v1188, %v1191
        %vm1193 = vweird.f32 %v792
        %vm1194 = vweird.f32 %v1188
        %vm1195 = vmor %vm1193, %vm1194
        %v1196 = vsel %vm1195, %v1188, %v1192
        %v1197 = vand.u32 2147483647, %v792
        %vm1198 = vcmp.eq.f32.partialorder %v1197, 8.507059e+37
        %v1199 = vand.u32 %v792, 2147483648
        %v1200 = vor.u32 1.1754944e-38, %v1199
        %v1201 = vsel %vm1198, %v1200, %v1196
        %v1202 = vmul.f32 1.0, %v1201
        %v1203 = vrcp.pop %v793
        %v1204 = vmul.f32 %v793, %v1203
        %v1205 = vsub.f32 1.0, %v1204
        %v1206 = vmul.f32 %v1203, %v1205
        %v1207 = vadd.f32 %v1203, %v1206
        %vm1208 = vweird.f32 %v793
        %vm1209 = vweird.f32 %v1203
        %vm1210 = vmor %vm1208, %vm1209
        %v1211 = vsel %vm1210, %v1203, %v1207
        %v1212 = vand.u32 2147483647, %v793
        %vm1213 = vcmp.eq.f32.partialorder %v1212, 8.507059e+37
        %v1214 = vand.u32 %v793, 2147483648
        %v1215 = vor.u32 1.1754944e-38, %v1214
        %v1216 = vsel %vm1213, %v1215, %v1211
        %v1217 = vmul.f32 1.0, %v1216
        %v1218 = vrcp.pop %v794
        %v1219 = vmul.f32 %v794, %v1218
        %v1220 = vsub.f32 1.0, %v1219
        %v1221 = vmul.f32 %v1218, %v1220
        %v1222 = vadd.f32 %v1218, %v1221
        %vm1223 = vweird.f32 %v794
        %vm1224 = vweird.f32 %v1218
        %vm1225 = vmor %vm1223, %vm1224
        %v1226 = vsel %vm1225, %v1218, %v1222
        %v1227 = vand.u32 2147483647, %v794
        %vm1228 = vcmp.eq.f32.partialorder %v1227, 8.507059e+37
        %v1229 = vand.u32 %v794, 2147483648
        %v1230 = vor.u32 1.1754944e-38, %v1229
        %v1231 = vsel %vm1228, %v1230, %v1226
        %v1232 = vmul.f32 1.0, %v1231
        %v1233 = vrcp.pop %v795
        %v1234 = vmul.f32 %v795, %v1233
        %v1235 = vsub.f32 1.0, %v1234
        %v1236 = vmul.f32 %v1233, %v1235
        %v1237 = vadd.f32 %v1233, %v1236
        %vm1238 = vweird.f32 %v795
        %vm1239 = vweird.f32 %v1233
        %vm1240 = vmor %vm1238, %vm1239
        %v1241 = vsel %vm1240, %v1233, %v1237
        %v1242 = vand.u32 2147483647, %v795
        %vm1243 = vcmp.eq.f32.partialorder %v1242, 8.507059e+37
        %v1244 = vand.u32 %v795, 2147483648
        %v1245 = vor.u32 1.1754944e-38, %v1244
        %v1246 = vsel %vm1243, %v1245, %v1241
        %v1247 = vmul.f32 1.0, %v1246
        %v1248 = vrcp.pop %v796
        %v1249 = vmul.f32 %v796, %v1248
        %v1250 = vsub.f32 1.0, %v1249
        %v1251 = vmul.f32 %v1248, %v1250
        %v1252 = vadd.f32 %v1248, %v1251
        %vm1253 = vweird.f32 %v796
        %vm1254 = vweird.f32 %v1248
        %vm1255 = vmor %vm1253, %vm1254
        %v1256 = vsel %vm1255, %v1248, %v1252
        %v1257 = vand.u32 2147483647, %v796
        %vm1258 = vcmp.eq.f32.partialorder %v1257, 8.507059e+37
        %v1259 = vand.u32 %v796, 2147483648
        %v1260 = vor.u32 1.1754944e-38, %v1259
        %v1261 = vsel %vm1258, %v1260, %v1256
        %v1262 = vmul.f32 1.0, %v1261
        %v1263 = vrcp.pop %v797
        %v1264 = vmul.f32 %v797, %v1263
        %v1265 = vsub.f32 1.0, %v1264
        %v1266 = vmul.f32 %v1263, %v1265
        %v1267 = vadd.f32 %v1263, %v1266
        %vm1268 = vweird.f32 %v797
        %vm1269 = vweird.f32 %v1263
        %vm1270 = vmor %vm1268, %vm1269
        %v1271 = vsel %vm1270, %v1263, %v1267
        %v1272 = vand.u32 2147483647, %v797
        %vm1273 = vcmp.eq.f32.partialorder %v1272, 8.507059e+37
        %v1274 = vand.u32 %v797, 2147483648
        %v1275 = vor.u32 1.1754944e-38, %v1274
        %v1276 = vsel %vm1273, %v1275, %v1271
        %v1277 = vmul.f32 1.0, %v1276
        %v1278 = vmul.f32 %v591, %v812
        %v1279 = vmul.f32 %v593, %v827
        %v1280 = vmul.f32 %v596, %v842
        %v1281 = vmul.f32 %v598, %v857
        %v1282 = vmul.f32 %v601, %v872
        %v1283 = vmul.f32 %v603, %v887
        %v1284 = vmul.f32 %v606, %v902
        %v1285 = vmul.f32 %v608, %v917
        %v1286 = vmul.f32 %v611, %v932
        %v1287 = vmul.f32 %v613, %v947
        %v1288 = vmul.f32 %v616, %v962
        %v1289 = vmul.f32 %v618, %v977
        %v1290 = vmul.f32 %v621, %v992
        %v1291 = vmul.f32 %v623, %v1007
        %v1292 = vmul.f32 %v626, %v1022
        %v1293 = vmul.f32 %v628, %v1037
        %v1294 = vmul.f32 %v631, %v1052
        %v1295 = vmul.f32 %v633, %v1067
        %v1296 = vmul.f32 %v636, %v1082
        %v1297 = vmul.f32 %v638, %v1097
        %v1298 = vmul.f32 %v641, %v1112
        %v1299 = vmul.f32 %v643, %v1127
        %v1300 = vmul.f32 %v646, %v1142
        %v1301 = vmul.f32 %v648, %v1157
        %v1302 = vmul.f32 %v651, %v1172
        %v1303 = vmul.f32 %v653, %v1187
        %v1304 = vmul.f32 %v656, %v1202
        %v1305 = vmul.f32 %v658, %v1217
        %v1306 = vmul.f32 %v661, %v1232
        %v1307 = vmul.f32 %v663, %v1247
        %v1308 = vmul.f32 %v666, %v1262
        %v1309 = vmul.f32 %v668, %v1277
        %vm1310 = vcmask 519168
        %1311 = vst.msk [vmem:[#allocation2] sm:$0xf] %vm1310, 0
        %1312 = vst.msk [vmem:[#allocation2 + $0x4] sm:$0xf] %vm1310, 0
        %vm1313 = vcmask 516096
        %1314 = vst.msk [vmem:[#allocation2 + $0x8] sm:$0x1] %vm1313, 0
        %s1315 = scalar_lea.vmem [#allocation2], 204
        %1316 = vst.msk [vmem:[%s1315] sm:$0xf] %vm1310, 0
        %1317 = vst.msk [vmem:[%s1315 + $0x4] sm:$0xf] %vm1310, 0
        %1318 = vst.msk [vmem:[%s1315 + $0x8] sm:$0x1] %vm1313, 0
        %s1319 = scalar_lea.vmem [#allocation2], 12
        %vm1320 = vcmask 516096
        %vm1321 = vsmask.f32 256
        %vm1322 = vmand %vm1320, %vm1321
        %v1323 = vld [vmem:[%s1319] sm:$0x1]
        %v1324 = vsel %vm1322, 0, %v1323
        %1325 = vst [vmem:[%s1319] sm:$0x1] %v1324
        %v1326 = vld [vmem:[%s1319 + $0xc] sm:$0x1]
        %v1327 = vsel %vm1322, 0, %v1326
        %1328 = vst [vmem:[%s1319 + $0xc] sm:$0x1] %v1327
        %v1329 = vld [vmem:[%s1319 + $0x18] sm:$0x1]
        %v1330 = vsel %vm1322, 0, %v1329
        %1331 = vst [vmem:[%s1319 + $0x18] sm:$0x1] %v1330
        %v1332 = vld [vmem:[%s1319 + $0x24] sm:$0x1]
        %v1333 = vsel %vm1322, 0, %v1332
        %1334 = vst [vmem:[%s1319 + $0x24] sm:$0x1] %v1333
        %v1335 = vld [vmem:[%s1319 + $0x30] sm:$0x1]
        %v1336 = vsel %vm1322, 0, %v1335
        %1337 = vst [vmem:[%s1319 + $0x30] sm:$0x1] %v1336
        %v1338 = vld [vmem:[%s1319 + $0x3c] sm:$0x1]
        %v1339 = vsel %vm1322, 0, %v1338
        %1340 = vst [vmem:[%s1319 + $0x3c] sm:$0x1] %v1339
        %v1341 = vld [vmem:[%s1319 + $0x48] sm:$0x1]
        %v1342 = vsel %vm1322, 0, %v1341
        %1343 = vst [vmem:[%s1319 + $0x48] sm:$0x1] %v1342
        %v1344 = vld [vmem:[%s1319 + $0x54] sm:$0x1]
        %v1345 = vsel %vm1322, 0, %v1344
        %1346 = vst [vmem:[%s1319 + $0x54] sm:$0x1] %v1345
        %v1347 = vld [vmem:[%s1319 + $0x60] sm:$0x1]
        %v1348 = vsel %vm1322, 0, %v1347
        %1349 = vst [vmem:[%s1319 + $0x60] sm:$0x1] %v1348
        %v1350 = vld [vmem:[%s1319 + $0x6c] sm:$0x1]
        %v1351 = vsel %vm1322, 0, %v1350
        %1352 = vst [vmem:[%s1319 + $0x6c] sm:$0x1] %v1351
        %v1353 = vld [vmem:[%s1319 + $0x78] sm:$0x1]
        %v1354 = vsel %vm1322, 0, %v1353
        %1355 = vst [vmem:[%s1319 + $0x78] sm:$0x1] %v1354
        %v1356 = vld [vmem:[%s1319 + $0x84] sm:$0x1]
        %v1357 = vsel %vm1322, 0, %v1356
        %1358 = vst [vmem:[%s1319 + $0x84] sm:$0x1] %v1357
        %v1359 = vld [vmem:[%s1319 + $0x90] sm:$0x1]
        %v1360 = vsel %vm1322, 0, %v1359
        %1361 = vst [vmem:[%s1319 + $0x90] sm:$0x1] %v1360
        %v1362 = vld [vmem:[%s1319 + $0x9c] sm:$0x1]
        %v1363 = vsel %vm1322, 0, %v1362
        %1364 = vst [vmem:[%s1319 + $0x9c] sm:$0x1] %v1363
        %v1365 = vld [vmem:[%s1319 + $0xa8] sm:$0x1]
        %v1366 = vsel %vm1322, 0, %v1365
        %1367 = vst [vmem:[%s1319 + $0xa8] sm:$0x1] %v1366
        %v1368 = vld [vmem:[%s1319 + $0xb4] sm:$0x1]
        %v1369 = vsel %vm1322, 0, %v1368
        %1370 = vst [vmem:[%s1319 + $0xb4] sm:$0x1] %v1369
        %vm1371 = vsmask.f32 7938
        %vm1372 = vmand %vm1320, %vm1371
        %v1373 = vld [vmem:[%s1319 + $0x8] sm:$0x1]
        %v1374 = vsel %vm1372, 0, %v1373
        %1375 = vst [vmem:[%s1319 + $0x8] sm:$0x1] %v1374
        %v1376 = vld [vmem:[%s1319 + $0x14] sm:$0x1]
        %v1377 = vsel %vm1372, 0, %v1376
        %1378 = vst [vmem:[%s1319 + $0x14] sm:$0x1] %v1377
        %v1379 = vld [vmem:[%s1319 + $0x20] sm:$0x1]
        %v1380 = vsel %vm1372, 0, %v1379
        %1381 = vst [vmem:[%s1319 + $0x20] sm:$0x1] %v1380
        %v1382 = vld [vmem:[%s1319 + $0x2c] sm:$0x1]
        %v1383 = vsel %vm1372, 0, %v1382
        %1384 = vst [vmem:[%s1319 + $0x2c] sm:$0x1] %v1383
        %v1385 = vld [vmem:[%s1319 + $0x38] sm:$0x1]
        %v1386 = vsel %vm1372, 0, %v1385
        %1387 = vst [vmem:[%s1319 + $0x38] sm:$0x1] %v1386
        %v1388 = vld [vmem:[%s1319 + $0x44] sm:$0x1]
        %v1389 = vsel %vm1372, 0, %v1388
        %1390 = vst [vmem:[%s1319 + $0x44] sm:$0x1] %v1389
        %v1391 = vld [vmem:[%s1319 + $0x50] sm:$0x1]
        %v1392 = vsel %vm1372, 0, %v1391
        %1393 = vst [vmem:[%s1319 + $0x50] sm:$0x1] %v1392
        %v1394 = vld [vmem:[%s1319 + $0x5c] sm:$0x1]
        %v1395 = vsel %vm1372, 0, %v1394
        %1396 = vst [vmem:[%s1319 + $0x5c] sm:$0x1] %v1395
        %v1397 = vld [vmem:[%s1319 + $0x68] sm:$0x1]
        %v1398 = vsel %vm1372, 0, %v1397
        %1399 = vst [vmem:[%s1319 + $0x68] sm:$0x1] %v1398
        %v1400 = vld [vmem:[%s1319 + $0x74] sm:$0x1]
        %v1401 = vsel %vm1372, 0, %v1400
        %1402 = vst [vmem:[%s1319 + $0x74] sm:$0x1] %v1401
        %v1403 = vld [vmem:[%s1319 + $0x80] sm:$0x1]
        %v1404 = vsel %vm1372, 0, %v1403
        %1405 = vst [vmem:[%s1319 + $0x80] sm:$0x1] %v1404
        %v1406 = vld [vmem:[%s1319 + $0x8c] sm:$0x1]
        %v1407 = vsel %vm1372, 0, %v1406
        %1408 = vst [vmem:[%s1319 + $0x8c] sm:$0x1] %v1407
        %v1409 = vld [vmem:[%s1319 + $0x98] sm:$0x1]
        %v1410 = vsel %vm1372, 0, %v1409
        %1411 = vst [vmem:[%s1319 + $0x98] sm:$0x1] %v1410
        %v1412 = vld [vmem:[%s1319 + $0xa4] sm:$0x1]
        %v1413 = vsel %vm1372, 0, %v1412
        %1414 = vst [vmem:[%s1319 + $0xa4] sm:$0x1] %v1413
        %v1415 = vld [vmem:[%s1319 + $0xb0] sm:$0x1]
        %v1416 = vsel %vm1372, 0, %v1415
        %1417 = vst [vmem:[%s1319 + $0xb0] sm:$0x1] %v1416
        %v1418 = vld [vmem:[%s1319 + $0xbc] sm:$0x1]
        %v1419 = vsel %vm1372, 0, %v1418
        %1420 = vst [vmem:[%s1319 + $0xbc] sm:$0x1] %v1419
        %v1421 = vpack.c.bf16 %v1278, %v1278
        %v1422 = vpack.c.bf16 %v1279, %v1279
        %v1423 = vpack.c.bf16 %v1280, %v1280
        %v1424 = vpack.c.bf16 %v1281, %v1281
        %v1425 = vpack.c.bf16 %v1282, %v1282
        %v1426 = vpack.c.bf16 %v1283, %v1283
        %v1427 = vpack.c.bf16 %v1284, %v1284
        %v1428 = vpack.c.bf16 %v1285, %v1285
        %v1429 = vpack.c.bf16 %v1286, %v1286
        %v1430 = vpack.c.bf16 %v1287, %v1287
        %v1431 = vpack.c.bf16 %v1288, %v1288
        %v1432 = vpack.c.bf16 %v1289, %v1289
        %v1433 = vpack.c.bf16 %v1290, %v1290
        %v1434 = vpack.c.bf16 %v1291, %v1291
        %v1435 = vpack.c.bf16 %v1292, %v1292
        %v1436 = vpack.c.bf16 %v1293, %v1293
        %v1437 = vpack.c.bf16 %v1294, %v1294
        %v1438 = vpack.c.bf16 %v1295, %v1295
        %v1439 = vpack.c.bf16 %v1296, %v1296
        %v1440 = vpack.c.bf16 %v1297, %v1297
        %v1441 = vpack.c.bf16 %v1298, %v1298
        %v1442 = vpack.c.bf16 %v1299, %v1299
        %v1443 = vpack.c.bf16 %v1300, %v1300
        %v1444 = vpack.c.bf16 %v1301, %v1301
        %v1445 = vpack.c.bf16 %v1302, %v1302
        %v1446 = vpack.c.bf16 %v1303, %v1303
        %v1447 = vpack.c.bf16 %v1304, %v1304
        %v1448 = vpack.c.bf16 %v1305, %v1305
        %v1449 = vpack.c.bf16 %v1306, %v1306
        %v1450 = vpack.c.bf16 %v1307, %v1307
        %v1451 = vpack.c.bf16 %v1308, %v1308
        %v1452 = vpack.c.bf16 %v1309, %v1309
        %vm1453 = vsmask.f32 4368
        %vm1454 = vmor %vm1321, %vm1453
        %v1456 = vshrl.u32 %v1421, 16
        %v1458 = vrot.slane %v1456, 7
        %v1459 = vshll.u32 %v1421, 16
        %v1461 = vor.u32 %v1458, %v1459
        %v1462 = vrot.slane %v1458, 4
        %v1464 = vshrl.u32 %v1422, 16
        %v1466 = vrot.slane %v1464, 7
        %v1467 = vshll.u32 %v1422, 16
        %v1469 = vor.u32 %v1466, %v1467
        %v1470 = vsel %vm1454, %v1462, %v1469
        %v1471 = vrot.slane %v1466, 4
        %v1473 = vshrl.u32 %v1423, 16
        %v1475 = vrot.slane %v1473, 7
        %v1476 = vshll.u32 %v1423, 16
        %v1478 = vor.u32 %v1475, %v1476
        %v1479 = vrot.slane %v1475, 4
        %v1481 = vshrl.u32 %v1424, 16
        %v1483 = vrot.slane %v1481, 7
        %v1484 = vshll.u32 %v1424, 16
        %v1486 = vor.u32 %v1483, %v1484
        %v1487 = vsel %vm1454, %v1479, %v1486
        %v1488 = vrot.slane %v1483, 4
        %v1490 = vshrl.u32 %v1425, 16
        %v1492 = vrot.slane %v1490, 7
        %v1493 = vshll.u32 %v1425, 16
        %v1495 = vor.u32 %v1492, %v1493
        %v1496 = vrot.slane %v1492, 4
        %v1498 = vshrl.u32 %v1426, 16
        %v1500 = vrot.slane %v1498, 7
        %v1501 = vshll.u32 %v1426, 16
        %v1503 = vor.u32 %v1500, %v1501
        %v1504 = vsel %vm1454, %v1496, %v1503
        %v1505 = vrot.slane %v1500, 4
        %v1507 = vshrl.u32 %v1427, 16
        %v1509 = vrot.slane %v1507, 7
        %v1510 = vshll.u32 %v1427, 16
        %v1512 = vor.u32 %v1509, %v1510
        %v1513 = vrot.slane %v1509, 4
        %v1515 = vshrl.u32 %v1428, 16
        %v1517 = vrot.slane %v1515, 7
        %v1518 = vshll.u32 %v1428, 16
        %v1520 = vor.u32 %v1517, %v1518
        %v1521 = vsel %vm1454, %v1513, %v1520
        %v1522 = vrot.slane %v1517, 4
        %v1524 = vshrl.u32 %v1429, 16
        %v1526 = vrot.slane %v1524, 7
        %v1527 = vshll.u32 %v1429, 16
        %v1529 = vor.u32 %v1526, %v1527
        %v1530 = vrot.slane %v1526, 4
        %v1532 = vshrl.u32 %v1430, 16
        %v1534 = vrot.slane %v1532, 7
        %v1535 = vshll.u32 %v1430, 16
        %v1537 = vor.u32 %v1534, %v1535
        %v1538 = vsel %vm1454, %v1530, %v1537
        %v1539 = vrot.slane %v1534, 4
        %v1541 = vshrl.u32 %v1431, 16
        %v1543 = vrot.slane %v1541, 7
        %v1544 = vshll.u32 %v1431, 16
        %v1546 = vor.u32 %v1543, %v1544
        %v1547 = vrot.slane %v1543, 4
        %v1549 = vshrl.u32 %v1432, 16
        %v1551 = vrot.slane %v1549, 7
        %v1552 = vshll.u32 %v1432, 16
        %v1554 = vor.u32 %v1551, %v1552
        %v1555 = vsel %vm1454, %v1547, %v1554
        %v1556 = vrot.slane %v1551, 4
        %v1558 = vshrl.u32 %v1433, 16
        %v1560 = vrot.slane %v1558, 7
        %v1561 = vshll.u32 %v1433, 16
        %v1563 = vor.u32 %v1560, %v1561
        %v1564 = vrot.slane %v1560, 4
        %v1566 = vshrl.u32 %v1434, 16
        %v1568 = vrot.slane %v1566, 7
        %v1569 = vshll.u32 %v1434, 16
        %v1571 = vor.u32 %v1568, %v1569
        %v1572 = vsel %vm1454, %v1564, %v1571
        %v1573 = vrot.slane %v1568, 4
        %v1575 = vshrl.u32 %v1435, 16
        %v1577 = vrot.slane %v1575, 7
        %v1578 = vshll.u32 %v1435, 16
        %v1580 = vor.u32 %v1577, %v1578
        %v1581 = vrot.slane %v1577, 4
        %v1583 = vshrl.u32 %v1436, 16
        %v1585 = vrot.slane %v1583, 7
        %v1586 = vshll.u32 %v1436, 16
        %v1588 = vor.u32 %v1585, %v1586
        %v1589 = vsel %vm1454, %v1581, %v1588
        %v1590 = vrot.slane %v1585, 4
        %v1592 = vshrl.u32 %v1437, 16
        %v1594 = vrot.slane %v1592, 7
        %v1595 = vshll.u32 %v1437, 16
        %v1597 = vor.u32 %v1594, %v1595
        %v1598 = vrot.slane %v1594, 4
        %v1600 = vshrl.u32 %v1438, 16
        %v1602 = vrot.slane %v1600, 7
        %v1603 = vshll.u32 %v1438, 16
        %v1605 = vor.u32 %v1602, %v1603
        %v1606 = vsel %vm1454, %v1598, %v1605
        %v1607 = vrot.slane %v1602, 4
        %v1609 = vshrl.u32 %v1439, 16
        %v1611 = vrot.slane %v1609, 7
        %v1612 = vshll.u32 %v1439, 16
        %v1614 = vor.u32 %v1611, %v1612
        %v1615 = vrot.slane %v1611, 4
        %v1617 = vshrl.u32 %v1440, 16
        %v1619 = vrot.slane %v1617, 7
        %v1620 = vshll.u32 %v1440, 16
        %v1622 = vor.u32 %v1619, %v1620
        %v1623 = vsel %vm1454, %v1615, %v1622
        %v1624 = vrot.slane %v1619, 4
        %v1626 = vshrl.u32 %v1441, 16
        %v1628 = vrot.slane %v1626, 7
        %v1629 = vshll.u32 %v1441, 16
        %v1631 = vor.u32 %v1628, %v1629
        %v1632 = vrot.slane %v1628, 4
        %v1634 = vshrl.u32 %v1442, 16
        %v1636 = vrot.slane %v1634, 7
        %v1637 = vshll.u32 %v1442, 16
        %v1639 = vor.u32 %v1636, %v1637
        %v1640 = vsel %vm1454, %v1632, %v1639
        %v1641 = vrot.slane %v1636, 4
        %v1643 = vshrl.u32 %v1443, 16
        %v1645 = vrot.slane %v1643, 7
        %v1646 = vshll.u32 %v1443, 16
        %v1648 = vor.u32 %v1645, %v1646
        %v1649 = vrot.slane %v1645, 4
        %v1651 = vshrl.u32 %v1444, 16
        %v1653 = vrot.slane %v1651, 7
        %v1654 = vshll.u32 %v1444, 16
        %v1656 = vor.u32 %v1653, %v1654
        %v1657 = vsel %vm1454, %v1649, %v1656
        %v1658 = vrot.slane %v1653, 4
        %v1660 = vshrl.u32 %v1445, 16
        %v1662 = vrot.slane %v1660, 7
        %v1663 = vshll.u32 %v1445, 16
        %v1665 = vor.u32 %v1662, %v1663
        %v1666 = vrot.slane %v1662, 4
        %v1668 = vshrl.u32 %v1446, 16
        %v1670 = vrot.slane %v1668, 7
        %v1671 = vshll.u32 %v1446, 16
        %v1673 = vor.u32 %v1670, %v1671
        %v1674 = vsel %vm1454, %v1666, %v1673
        %v1675 = vrot.slane %v1670, 4
        %v1677 = vshrl.u32 %v1447, 16
        %v1679 = vrot.slane %v1677, 7
        %v1680 = vshll.u32 %v1447, 16
        %v1682 = vor.u32 %v1679, %v1680
        %v1683 = vrot.slane %v1679, 4
        %v1685 = vshrl.u32 %v1448, 16
        %v1687 = vrot.slane %v1685, 7
        %v1688 = vshll.u32 %v1448, 16
        %v1690 = vor.u32 %v1687, %v1688
        %v1691 = vsel %vm1454, %v1683, %v1690
        %v1692 = vrot.slane %v1687, 4
        %v1694 = vshrl.u32 %v1449, 16
        %v1696 = vrot.slane %v1694, 7
        %v1697 = vshll.u32 %v1449, 16
        %v1699 = vor.u32 %v1696, %v1697
        %v1700 = vrot.slane %v1696, 4
        %v1702 = vshrl.u32 %v1450, 16
        %v1704 = vrot.slane %v1702, 7
        %v1705 = vshll.u32 %v1450, 16
        %v1707 = vor.u32 %v1704, %v1705
        %v1708 = vsel %vm1454, %v1700, %v1707
        %v1709 = vrot.slane %v1704, 4
        %v1711 = vshrl.u32 %v1451, 16
        %v1713 = vrot.slane %v1711, 7
        %v1714 = vshll.u32 %v1451, 16
        %v1716 = vor.u32 %v1713, %v1714
        %v1717 = vrot.slane %v1713, 4
        %v1719 = vshrl.u32 %v1452, 16
        %v1721 = vrot.slane %v1719, 7
        %v1722 = vshll.u32 %v1452, 16
        %v1724 = vor.u32 %v1721, %v1722
        %v1725 = vsel %vm1454, %v1717, %v1724
        %v1726 = vrot.slane %v1721, 4
        %vm1775 = vcmask 519168
        %vm1776 = vmand %vm1775, %vm1371
        %v1777 = vld [vmem:[%s1319] sm:$0xf]
        %v1778 = vsel %vm1776, %v1461, %v1777
        %1779 = vst [vmem:[%s1319] sm:$0xf] %v1778
        %1780 = vst.msk [vmem:[%s1319 + $0x4] sm:$0xf] %vm1310, %v1470
        %v1781 = vld [vmem:[%s1319 + $0x8] sm:$0x1]
        %v1782 = vsel %vm1322, %v1471, %v1781
        %1783 = vst [vmem:[%s1319 + $0x8] sm:$0x1] %v1782
        %v1784 = vld [vmem:[%s1319 + $0xc] sm:$0xf]
        %v1785 = vsel %vm1776, %v1478, %v1784
        %1786 = vst [vmem:[%s1319 + $0xc] sm:$0xf] %v1785
        %1787 = vst.msk [vmem:[%s1319 + $0x10] sm:$0xf] %vm1310, %v1487
        %v1788 = vld [vmem:[%s1319 + $0x14] sm:$0x1]
        %v1789 = vsel %vm1322, %v1488, %v1788
        %1790 = vst [vmem:[%s1319 + $0x14] sm:$0x1] %v1789
        %v1791 = vld [vmem:[%s1319 + $0x18] sm:$0xf]
        %v1792 = vsel %vm1776, %v1495, %v1791
        %1793 = vst [vmem:[%s1319 + $0x18] sm:$0xf] %v1792
        %1794 = vst.msk [vmem:[%s1319 + $0x1c] sm:$0xf] %vm1310, %v1504
        %v1795 = vld [vmem:[%s1319 + $0x20] sm:$0x1]
        %v1796 = vsel %vm1322, %v1505, %v1795
        %1797 = vst [vmem:[%s1319 + $0x20] sm:$0x1] %v1796
        %v1798 = vld [vmem:[%s1319 + $0x24] sm:$0xf]
        %v1799 = vsel %vm1776, %v1512, %v1798
        %1800 = vst [vmem:[%s1319 + $0x24] sm:$0xf] %v1799
        %1801 = vst.msk [vmem:[%s1319 + $0x28] sm:$0xf] %vm1310, %v1521
        %v1802 = vld [vmem:[%s1319 + $0x2c] sm:$0x1]
        %v1803 = vsel %vm1322, %v1522, %v1802
        %1804 = vst [vmem:[%s1319 + $0x2c] sm:$0x1] %v1803
        %v1805 = vld [vmem:[%s1319 + $0x30] sm:$0xf]
        %v1806 = vsel %vm1776, %v1529, %v1805
        %1807 = vst [vmem:[%s1319 + $0x30] sm:$0xf] %v1806
        %1808 = vst.msk [vmem:[%s1319 + $0x34] sm:$0xf] %vm1310, %v1538
        %v1809 = vld [vmem:[%s1319 + $0x38] sm:$0x1]
        %v1810 = vsel %vm1322, %v1539, %v1809
        %1811 = vst [vmem:[%s1319 + $0x38] sm:$0x1] %v1810
        %v1812 = vld [vmem:[%s1319 + $0x3c] sm:$0xf]
        %v1813 = vsel %vm1776, %v1546, %v1812
        %1814 = vst [vmem:[%s1319 + $0x3c] sm:$0xf] %v1813
        %1815 = vst.msk [vmem:[%s1319 + $0x40] sm:$0xf] %vm1310, %v1555
        %v1816 = vld [vmem:[%s1319 + $0x44] sm:$0x1]
        %v1817 = vsel %vm1322, %v1556, %v1816
        %1818 = vst [vmem:[%s1319 + $0x44] sm:$0x1] %v1817
        %v1819 = vld [vmem:[%s1319 + $0x48] sm:$0xf]
        %v1820 = vsel %vm1776, %v1563, %v1819
        %1821 = vst [vmem:[%s1319 + $0x48] sm:$0xf] %v1820
        %1822 = vst.msk [vmem:[%s1319 + $0x4c] sm:$0xf] %vm1310, %v1572
        %v1823 = vld [vmem:[%s1319 + $0x50] sm:$0x1]
        %v1824 = vsel %vm1322, %v1573, %v1823
        %1825 = vst [vmem:[%s1319 + $0x50] sm:$0x1] %v1824
        %v1826 = vld [vmem:[%s1319 + $0x54] sm:$0xf]
        %v1827 = vsel %vm1776, %v1580, %v1826
        %1828 = vst [vmem:[%s1319 + $0x54] sm:$0xf] %v1827
        %1829 = vst.msk [vmem:[%s1319 + $0x58] sm:$0xf] %vm1310, %v1589
        %v1830 = vld [vmem:[%s1319 + $0x5c] sm:$0x1]
        %v1831 = vsel %vm1322, %v1590, %v1830
        %1832 = vst [vmem:[%s1319 + $0x5c] sm:$0x1] %v1831
        %v1833 = vld [vmem:[%s1319 + $0x60] sm:$0xf]
        %v1834 = vsel %vm1776, %v1597, %v1833
        %1835 = vst [vmem:[%s1319 + $0x60] sm:$0xf] %v1834
        %1836 = vst.msk [vmem:[%s1319 + $0x64] sm:$0xf] %vm1310, %v1606
        %v1837 = vld [vmem:[%s1319 + $0x68] sm:$0x1]
        %v1838 = vsel %vm1322, %v1607, %v1837
        %1839 = vst [vmem:[%s1319 + $0x68] sm:$0x1] %v1838
        %v1840 = vld [vmem:[%s1319 + $0x6c] sm:$0xf]
        %v1841 = vsel %vm1776, %v1614, %v1840
        %1842 = vst [vmem:[%s1319 + $0x6c] sm:$0xf] %v1841
        %1843 = vst.msk [vmem:[%s1319 + $0x70] sm:$0xf] %vm1310, %v1623
        %v1844 = vld [vmem:[%s1319 + $0x74] sm:$0x1]
        %v1845 = vsel %vm1322, %v1624, %v1844
        %1846 = vst [vmem:[%s1319 + $0x74] sm:$0x1] %v1845
        %v1847 = vld [vmem:[%s1319 + $0x78] sm:$0xf]
        %v1848 = vsel %vm1776, %v1631, %v1847
        %1849 = vst [vmem:[%s1319 + $0x78] sm:$0xf] %v1848
        %1850 = vst.msk [vmem:[%s1319 + $0x7c] sm:$0xf] %vm1310, %v1640
        %v1851 = vld [vmem:[%s1319 + $0x80] sm:$0x1]
        %v1852 = vsel %vm1322, %v1641, %v1851
        %1853 = vst [vmem:[%s1319 + $0x80] sm:$0x1] %v1852
        %v1854 = vld [vmem:[%s1319 + $0x84] sm:$0xf]
        %v1855 = vsel %vm1776, %v1648, %v1854
        %1856 = vst [vmem:[%s1319 + $0x84] sm:$0xf] %v1855
        %1857 = vst.msk [vmem:[%s1319 + $0x88] sm:$0xf] %vm1310, %v1657
        %v1858 = vld [vmem:[%s1319 + $0x8c] sm:$0x1]
        %v1859 = vsel %vm1322, %v1658, %v1858
        %1860 = vst [vmem:[%s1319 + $0x8c] sm:$0x1] %v1859
        %v1861 = vld [vmem:[%s1319 + $0x90] sm:$0xf]
        %v1862 = vsel %vm1776, %v1665, %v1861
        %1863 = vst [vmem:[%s1319 + $0x90] sm:$0xf] %v1862
        %1864 = vst.msk [vmem:[%s1319 + $0x94] sm:$0xf] %vm1310, %v1674
        %v1865 = vld [vmem:[%s1319 + $0x98] sm:$0x1]
        %v1866 = vsel %vm1322, %v1675, %v1865
        %1867 = vst [vmem:[%s1319 + $0x98] sm:$0x1] %v1866
        %v1868 = vld [vmem:[%s1319 + $0x9c] sm:$0xf]
        %v1869 = vsel %vm1776, %v1682, %v1868
        %1870 = vst [vmem:[%s1319 + $0x9c] sm:$0xf] %v1869
        %1871 = vst.msk [vmem:[%s1319 + $0xa0] sm:$0xf] %vm1310, %v1691
        %v1872 = vld [vmem:[%s1319 + $0xa4] sm:$0x1]
        %v1873 = vsel %vm1322, %v1692, %v1872
        %1874 = vst [vmem:[%s1319 + $0xa4] sm:$0x1] %v1873
        %v1875 = vld [vmem:[%s1319 + $0xa8] sm:$0xf]
        %v1876 = vsel %vm1776, %v1699, %v1875
        %1877 = vst [vmem:[%s1319 + $0xa8] sm:$0xf] %v1876
        %1878 = vst.msk [vmem:[%s1319 + $0xac] sm:$0xf] %vm1310, %v1708
        %v1879 = vld [vmem:[%s1319 + $0xb0] sm:$0x1]
        %v1880 = vsel %vm1322, %v1709, %v1879
        %1881 = vst [vmem:[%s1319 + $0xb0] sm:$0x1] %v1880
        %v1882 = vld [vmem:[%s1319 + $0xb4] sm:$0xf]
        %v1883 = vsel %vm1776, %v1716, %v1882
        %1884 = vst [vmem:[%s1319 + $0xb4] sm:$0xf] %v1883
        %1885 = vst.msk [vmem:[%s1319 + $0xb8] sm:$0xf] %vm1310, %v1725
        %v1886 = vld [vmem:[%s1319 + $0xbc] sm:$0x1]
        %v1887 = vsel %vm1322, %v1726, %v1886
        %1888 = vst [vmem:[%s1319 + $0xbc] sm:$0x1] %v1887
        %v1889 = vld [vmem:[%s3] sm:$0xff]
        %v1890 = vld [vmem:[%s3 + $0x8] sm:$0x1]
        %v1891 = vld [vmem:[%s4] sm:$0x1]
        %1892 = vst.msk [vmem:[#allocation4] sm:$0x1] %vm1313, 0.0
        loop: start=0, step=1, limit=2
        $region69: #{tpu_custom_call.1} parent=63 // loop_pre_header
          _
        $region70: #{tpu_custom_call.1} parent=63 // loop_header
          %s1894 = sphi 0, %s1898
          %p1895 = scmp.ge.s32.totalorder %s1894, 2
        $region71: #{tpu_custom_call.1} parent=63 // loop_header_branch
          %1897 = sbr.rel (%p1895) target = $region75
        $region72: #{tpu_custom_call.1} parent=63 // loop_body
          %s1899 = smul.u32 %s1894, 8
          %s1900 = smul.u32 %s1899, 3
          %s1901 = smul.addr %s1900, 4
          %s1902 = scalar_lea.vmem [#allocation2], %s1901
          %v1903 = vld [vmem:[%s1902] sm:$0xf]
          %v1904 = vld [vmem:[%s1902 + $0x4] sm:$0xf]
          %v1905 = vld [vmem:[%s1902 + $0x8] sm:$0x1]
          %v1906 = vld [vmem:[%s1902 + $0xc] sm:$0xf]
          %v1907 = vld [vmem:[%s1902 + $0x10] sm:$0xf]
          %v1908 = vld [vmem:[%s1902 + $0x14] sm:$0x1]
          %v1909 = vld [vmem:[%s1902 + $0x18] sm:$0xf]
          %v1910 = vld [vmem:[%s1902 + $0x1c] sm:$0xf]
          %v1911 = vld [vmem:[%s1902 + $0x20] sm:$0x1]
          %v1912 = vld [vmem:[%s1902 + $0x24] sm:$0xf]
          %v1913 = vld [vmem:[%s1902 + $0x28] sm:$0xf]
          %v1914 = vld [vmem:[%s1902 + $0x2c] sm:$0x1]
          %v1915 = vld [vmem:[%s1902 + $0x30] sm:$0xf]
          %v1916 = vld [vmem:[%s1902 + $0x34] sm:$0xf]
          %v1917 = vld [vmem:[%s1902 + $0x38] sm:$0x1]
          %v1918 = vld [vmem:[%s1902 + $0x3c] sm:$0xf]
          %v1919 = vld [vmem:[%s1902 + $0x40] sm:$0xf]
          %v1920 = vld [vmem:[%s1902 + $0x44] sm:$0x1]
          %v1921 = vld [vmem:[%s1902 + $0x48] sm:$0xf]
          %v1922 = vld [vmem:[%s1902 + $0x4c] sm:$0xf]
          %v1923 = vld [vmem:[%s1902 + $0x50] sm:$0x1]
          %v1924 = vld [vmem:[%s1902 + $0x54] sm:$0xf]
          %v1925 = vld [vmem:[%s1902 + $0x58] sm:$0xf]
          %v1926 = vld [vmem:[%s1902 + $0x5c] sm:$0x1]
          %v1927 = vunpack.c.l.bf16 %v1903
          %v1928 = vunpack.c.l.bf16 %v1904
          %v1929 = vunpack.c.l.bf16 %v1905
          %v1930 = vunpack.c.l.bf16 %v1906
          %v1931 = vunpack.c.l.bf16 %v1907
          %v1932 = vunpack.c.l.bf16 %v1908
          %v1933 = vunpack.c.l.bf16 %v1909
          %v1934 = vunpack.c.l.bf16 %v1910
          %v1935 = vunpack.c.l.bf16 %v1911
          %v1936 = vunpack.c.l.bf16 %v1912
          %v1937 = vunpack.c.l.bf16 %v1913
          %v1938 = vunpack.c.l.bf16 %v1914
          %v1939 = vunpack.c.l.bf16 %v1915
          %v1940 = vunpack.c.l.bf16 %v1916
          %v1941 = vunpack.c.l.bf16 %v1917
          %v1942 = vunpack.c.l.bf16 %v1918
          %v1943 = vunpack.c.l.bf16 %v1919
          %v1944 = vunpack.c.l.bf16 %v1920
          %v1945 = vunpack.c.l.bf16 %v1921
          %v1946 = vunpack.c.l.bf16 %v1922
          %v1947 = vunpack.c.l.bf16 %v1923
          %v1948 = vunpack.c.l.bf16 %v1924
          %v1949 = vunpack.c.l.bf16 %v1925
          %v1950 = vunpack.c.l.bf16 %v1926
          %v1951 = vperm.slane %v1889, 0
          %v1952 = vmul.f32 %v1927, %v1951
          %v1953 = vmul.f32 %v1928, %v1951
          %v1954 = vmul.f32 %v1930, %v1951
          %v1955 = vmul.f32 %v1931, %v1951
          %v1956 = vmul.f32 %v1933, %v1951
          %v1957 = vmul.f32 %v1934, %v1951
          %v1958 = vmul.f32 %v1936, %v1951
          %v1959 = vmul.f32 %v1937, %v1951
          %v1960 = vmul.f32 %v1939, %v1951
          %v1961 = vmul.f32 %v1940, %v1951
          %v1962 = vmul.f32 %v1942, %v1951
          %v1963 = vmul.f32 %v1943, %v1951
          %v1964 = vmul.f32 %v1945, %v1951
          %v1965 = vmul.f32 %v1946, %v1951
          %v1966 = vmul.f32 %v1948, %v1951
          %v1967 = vmul.f32 %v1949, %v1951
          %v1969 = vperm.slane %v1891, 0
          %v1971 = vadd.f32 %v1952, %v1969
          %v1972 = vadd.f32 %v1953, %v1969
          %v1973 = vadd.f32 %v1954, %v1969
          %v1974 = vadd.f32 %v1955, %v1969
          %v1975 = vadd.f32 %v1956, %v1969
          %v1976 = vadd.f32 %v1957, %v1969
          %v1977 = vadd.f32 %v1958, %v1969
          %v1978 = vadd.f32 %v1959, %v1969
          %v1979 = vadd.f32 %v1960, %v1969
          %v1980 = vadd.f32 %v1961, %v1969
          %v1981 = vadd.f32 %v1962, %v1969
          %v1982 = vadd.f32 %v1963, %v1969
          %v1983 = vadd.f32 %v1964, %v1969
          %v1984 = vadd.f32 %v1965, %v1969
          %v1985 = vadd.f32 %v1966, %v1969
          %v1986 = vadd.f32 %v1967, %v1969
          %v1987 = vperm.slane %v1889, 1
          %v1988 = vmul.f32 %v1927, %v1987
          %v1989 = vmul.f32 %v1928, %v1987
          %v1990 = vmul.f32 %v1929, %v1987
          %v1991 = vmul.f32 %v1930, %v1987
          %v1992 = vmul.f32 %v1931, %v1987
          %v1993 = vmul.f32 %v1932, %v1987
          %v1994 = vmul.f32 %v1933, %v1987
          %v1995 = vmul.f32 %v1934, %v1987
          %v1996 = vmul.f32 %v1935, %v1987
          %v1997 = vmul.f32 %v1936, %v1987
          %v1998 = vmul.f32 %v1937, %v1987
          %v1999 = vmul.f32 %v1938, %v1987
          %v2000 = vmul.f32 %v1939, %v1987
          %v2001 = vmul.f32 %v1940, %v1987
          %v2002 = vmul.f32 %v1941, %v1987
          %v2003 = vmul.f32 %v1942, %v1987
          %v2004 = vmul.f32 %v1943, %v1987
          %v2005 = vmul.f32 %v1944, %v1987
          %v2006 = vmul.f32 %v1945, %v1987
          %v2007 = vmul.f32 %v1946, %v1987
          %v2008 = vmul.f32 %v1947, %v1987
          %v2009 = vmul.f32 %v1948, %v1987
          %v2010 = vmul.f32 %v1949, %v1987
          %v2011 = vmul.f32 %v1950, %v1987
          %vm2036 = vcmask 1046528
          %v2037 = vrot.slane %v1988, 1
          %v2038 = vrot.slane %v1989, 1
          %v2039 = vsel %vm2036, %v2037, %v2038
          %v2040 = vrot.slane %v1990, 1
          %v2041 = vsel %vm2036, %v2038, %v2040
          %v2042 = vrot.slane %v1991, 1
          %v2043 = vrot.slane %v1992, 1
          %v2044 = vsel %vm2036, %v2042, %v2043
          %v2045 = vrot.slane %v1993, 1
          %v2046 = vsel %vm2036, %v2043, %v2045
          %v2047 = vrot.slane %v1994, 1
          %v2048 = vrot.slane %v1995, 1
          %v2049 = vsel %vm2036, %v2047, %v2048
          %v2050 = vrot.slane %v1996, 1
          %v2051 = vsel %vm2036, %v2048, %v2050
          %v2052 = vrot.slane %v1997, 1
          %v2053 = vrot.slane %v1998, 1
          %v2054 = vsel %vm2036, %v2052, %v2053
          %v2055 = vrot.slane %v1999, 1
          %v2056 = vsel %vm2036, %v2053, %v2055
          %v2057 = vrot.slane %v2000, 1
          %v2058 = vrot.slane %v2001, 1
          %v2059 = vsel %vm2036, %v2057, %v2058
          %v2060 = vrot.slane %v2002, 1
          %v2061 = vsel %vm2036, %v2058, %v2060
          %v2062 = vrot.slane %v2003, 1
          %v2063 = vrot.slane %v2004, 1
          %v2064 = vsel %vm2036, %v2062, %v2063
          %v2065 = vrot.slane %v2005, 1
          %v2066 = vsel %vm2036, %v2063, %v2065
          %v2067 = vrot.slane %v2006, 1
          %v2068 = vrot.slane %v2007, 1
          %v2069 = vsel %vm2036, %v2067, %v2068
          %v2070 = vrot.slane %v2008, 1
          %v2071 = vsel %vm2036, %v2068, %v2070
          %v2072 = vrot.slane %v2009, 1
          %v2073 = vrot.slane %v2010, 1
          %v2074 = vsel %vm2036, %v2072, %v2073
          %v2075 = vrot.slane %v2011, 1
          %v2076 = vsel %vm2036, %v2073, %v2075
          %v2093 = vadd.f32 %v1971, %v2039
          %v2094 = vadd.f32 %v1972, %v2041
          %v2095 = vadd.f32 %v1973, %v2044
          %v2096 = vadd.f32 %v1974, %v2046
          %v2097 = vadd.f32 %v1975, %v2049
          %v2098 = vadd.f32 %v1976, %v2051
          %v2099 = vadd.f32 %v1977, %v2054
          %v2100 = vadd.f32 %v1978, %v2056
          %v2101 = vadd.f32 %v1979, %v2059
          %v2102 = vadd.f32 %v1980, %v2061
          %v2103 = vadd.f32 %v1981, %v2064
          %v2104 = vadd.f32 %v1982, %v2066
          %v2105 = vadd.f32 %v1983, %v2069
          %v2106 = vadd.f32 %v1984, %v2071
          %v2107 = vadd.f32 %v1985, %v2074
          %v2108 = vadd.f32 %v1986, %v2076
          %v2109 = vperm.slane %v1889, 2
          %v2110 = vmul.f32 %v1927, %v2109
          %v2111 = vmul.f32 %v1928, %v2109
          %v2112 = vmul.f32 %v1929, %v2109
          %v2113 = vmul.f32 %v1930, %v2109
          %v2114 = vmul.f32 %v1931, %v2109
          %v2115 = vmul.f32 %v1932, %v2109
          %v2116 = vmul.f32 %v1933, %v2109
          %v2117 = vmul.f32 %v1934, %v2109
          %v2118 = vmul.f32 %v1935, %v2109
          %v2119 = vmul.f32 %v1936, %v2109
          %v2120 = vmul.f32 %v1937, %v2109
          %v2121 = vmul.f32 %v1938, %v2109
          %v2122 = vmul.f32 %v1939, %v2109
          %v2123 = vmul.f32 %v1940, %v2109
          %v2124 = vmul.f32 %v1941, %v2109
          %v2125 = vmul.f32 %v1942, %v2109
          %v2126 = vmul.f32 %v1943, %v2109
          %v2127 = vmul.f32 %v1944, %v2109
          %v2128 = vmul.f32 %v1945, %v2109
          %v2129 = vmul.f32 %v1946, %v2109
          %v2130 = vmul.f32 %v1947, %v2109
          %v2131 = vmul.f32 %v1948, %v2109
          %v2132 = vmul.f32 %v1949, %v2109
          %v2133 = vmul.f32 %v1950, %v2109
          %vm2158 = vcmask 1045504
          %v2159 = vrot.slane %v2110, 2
          %v2160 = vrot.slane %v2111, 2
          %v2161 = vsel %vm2158, %v2159, %v2160
          %v2162 = vrot.slane %v2112, 2
          %v2163 = vsel %vm2158, %v2160, %v2162
          %v2164 = vrot.slane %v2113, 2
          %v2165 = vrot.slane %v2114, 2
          %v2166 = vsel %vm2158, %v2164, %v2165
          %v2167 = vrot.slane %v2115, 2
          %v2168 = vsel %vm2158, %v2165, %v2167
          %v2169 = vrot.slane %v2116, 2
          %v2170 = vrot.slane %v2117, 2
          %v2171 = vsel %vm2158, %v2169, %v2170
          %v2172 = vrot.slane %v2118, 2
          %v2173 = vsel %vm2158, %v2170, %v2172
          %v2174 = vrot.slane %v2119, 2
          %v2175 = vrot.slane %v2120, 2
          %v2176 = vsel %vm2158, %v2174, %v2175
          %v2177 = vrot.slane %v2121, 2
          %v2178 = vsel %vm2158, %v2175, %v2177
          %v2179 = vrot.slane %v2122, 2
          %v2180 = vrot.slane %v2123, 2
          %v2181 = vsel %vm2158, %v2179, %v2180
          %v2182 = vrot.slane %v2124, 2
          %v2183 = vsel %vm2158, %v2180, %v2182
          %v2184 = vrot.slane %v2125, 2
          %v2185 = vrot.slane %v2126, 2
          %v2186 = vsel %vm2158, %v2184, %v2185
          %v2187 = vrot.slane %v2127, 2
          %v2188 = vsel %vm2158, %v2185, %v2187
          %v2189 = vrot.slane %v2128, 2
          %v2190 = vrot.slane %v2129, 2
          %v2191 = vsel %vm2158, %v2189, %v2190
          %v2192 = vrot.slane %v2130, 2
          %v2193 = vsel %vm2158, %v2190, %v2192
          %v2194 = vrot.slane %v2131, 2
          %v2195 = vrot.slane %v2132, 2
          %v2196 = vsel %vm2158, %v2194, %v2195
          %v2197 = vrot.slane %v2133, 2
          %v2198 = vsel %vm2158, %v2195, %v2197
          %v2215 = vadd.f32 %v2093, %v2161
          %v2216 = vadd.f32 %v2094, %v2163
          %v2217 = vadd.f32 %v2095, %v2166
          %v2218 = vadd.f32 %v2096, %v2168
          %v2219 = vadd.f32 %v2097, %v2171
          %v2220 = vadd.f32 %v2098, %v2173
          %v2221 = vadd.f32 %v2099, %v2176
          %v2222 = vadd.f32 %v2100, %v2178
          %v2223 = vadd.f32 %v2101, %v2181
          %v2224 = vadd.f32 %v2102, %v2183
          %v2225 = vadd.f32 %v2103, %v2186
          %v2226 = vadd.f32 %v2104, %v2188
          %v2227 = vadd.f32 %v2105, %v2191
          %v2228 = vadd.f32 %v2106, %v2193
          %v2229 = vadd.f32 %v2107, %v2196
          %v2230 = vadd.f32 %v2108, %v2198
          %s2231 = sadd.s32 %s1899, 1
          %s2232 = smul.u32 %s2231, 3
          %s2233 = smul.addr %s2232, 4
          %s2234 = scalar_lea.vmem [#allocation2], %s2233
          %v2235 = vld [vmem:[%s2234] sm:$0xf]
          %v2236 = vld [vmem:[%s2234 + $0x4] sm:$0xf]
          %v2237 = vld [vmem:[%s2234 + $0x8] sm:$0x1]
          %v2238 = vld [vmem:[%s2234 + $0xc] sm:$0xf]
          %v2239 = vld [vmem:[%s2234 + $0x10] sm:$0xf]
          %v2240 = vld [vmem:[%s2234 + $0x14] sm:$0x1]
          %v2241 = vld [vmem:[%s2234 + $0x18] sm:$0xf]
          %v2242 = vld [vmem:[%s2234 + $0x1c] sm:$0xf]
          %v2243 = vld [vmem:[%s2234 + $0x20] sm:$0x1]
          %v2244 = vld [vmem:[%s2234 + $0x24] sm:$0xf]
          %v2245 = vld [vmem:[%s2234 + $0x28] sm:$0xf]
          %v2246 = vld [vmem:[%s2234 + $0x2c] sm:$0x1]
          %v2247 = vld [vmem:[%s2234 + $0x30] sm:$0xf]
          %v2248 = vld [vmem:[%s2234 + $0x34] sm:$0xf]
          %v2249 = vld [vmem:[%s2234 + $0x38] sm:$0x1]
          %v2250 = vld [vmem:[%s2234 + $0x3c] sm:$0xf]
          %v2251 = vld [vmem:[%s2234 + $0x40] sm:$0xf]
          %v2252 = vld [vmem:[%s2234 + $0x44] sm:$0x1]
          %v2253 = vld [vmem:[%s2234 + $0x48] sm:$0xf]
          %v2254 = vld [vmem:[%s2234 + $0x4c] sm:$0xf]
          %v2255 = vld [vmem:[%s2234 + $0x50] sm:$0x1]
          %v2256 = vld [vmem:[%s2234 + $0x54] sm:$0xf]
          %v2257 = vld [vmem:[%s2234 + $0x58] sm:$0xf]
          %v2258 = vld [vmem:[%s2234 + $0x5c] sm:$0x1]
          %v2259 = vunpack.c.l.bf16 %v2235
          %v2260 = vunpack.c.l.bf16 %v2236
          %v2261 = vunpack.c.l.bf16 %v2237
          %v2262 = vunpack.c.l.bf16 %v2238
          %v2263 = vunpack.c.l.bf16 %v2239
          %v2264 = vunpack.c.l.bf16 %v2240
          %v2265 = vunpack.c.l.bf16 %v2241
          %v2266 = vunpack.c.l.bf16 %v2242
          %v2267 = vunpack.c.l.bf16 %v2243
          %v2268 = vunpack.c.l.bf16 %v2244
          %v2269 = vunpack.c.l.bf16 %v2245
          %v2270 = vunpack.c.l.bf16 %v2246
          %v2271 = vunpack.c.l.bf16 %v2247
          %v2272 = vunpack.c.l.bf16 %v2248
          %v2273 = vunpack.c.l.bf16 %v2249
          %v2274 = vunpack.c.l.bf16 %v2250
          %v2275 = vunpack.c.l.bf16 %v2251
          %v2276 = vunpack.c.l.bf16 %v2252
          %v2277 = vunpack.c.l.bf16 %v2253
          %v2278 = vunpack.c.l.bf16 %v2254
          %v2279 = vunpack.c.l.bf16 %v2255
          %v2280 = vunpack.c.l.bf16 %v2256
          %v2281 = vunpack.c.l.bf16 %v2257
          %v2282 = vunpack.c.l.bf16 %v2258
          %v2283 = vperm.slane %v1889, 3
          %v2284 = vmul.f32 %v2259, %v2283
          %v2285 = vmul.f32 %v2260, %v2283
          %v2286 = vmul.f32 %v2262, %v2283
          %v2287 = vmul.f32 %v2263, %v2283
          %v2288 = vmul.f32 %v2265, %v2283
          %v2289 = vmul.f32 %v2266, %v2283
          %v2290 = vmul.f32 %v2268, %v2283
          %v2291 = vmul.f32 %v2269, %v2283
          %v2292 = vmul.f32 %v2271, %v2283
          %v2293 = vmul.f32 %v2272, %v2283
          %v2294 = vmul.f32 %v2274, %v2283
          %v2295 = vmul.f32 %v2275, %v2283
          %v2296 = vmul.f32 %v2277, %v2283
          %v2297 = vmul.f32 %v2278, %v2283
          %v2298 = vmul.f32 %v2280, %v2283
          %v2299 = vmul.f32 %v2281, %v2283
          %v2300 = vadd.f32 %v2215, %v2284
          %v2301 = vadd.f32 %v2216, %v2285
          %v2302 = vadd.f32 %v2217, %v2286
          %v2303 = vadd.f32 %v2218, %v2287
          %v2304 = vadd.f32 %v2219, %v2288
          %v2305 = vadd.f32 %v2220, %v2289
          %v2306 = vadd.f32 %v2221, %v2290
          %v2307 = vadd.f32 %v2222, %v2291
          %v2308 = vadd.f32 %v2223, %v2292
          %v2309 = vadd.f32 %v2224, %v2293
          %v2310 = vadd.f32 %v2225, %v2294
          %v2311 = vadd.f32 %v2226, %v2295
          %v2312 = vadd.f32 %v2227, %v2296
          %v2313 = vadd.f32 %v2228, %v2297
          %v2314 = vadd.f32 %v2229, %v2298
          %v2315 = vadd.f32 %v2230, %v2299
          %v2316 = vperm.slane %v1889, 4
          %v2317 = vmul.f32 %v2259, %v2316
          %v2318 = vmul.f32 %v2260, %v2316
          %v2319 = vmul.f32 %v2261, %v2316
          %v2320 = vmul.f32 %v2262, %v2316
          %v2321 = vmul.f32 %v2263, %v2316
          %v2322 = vmul.f32 %v2264, %v2316
          %v2323 = vmul.f32 %v2265, %v2316
          %v2324 = vmul.f32 %v2266, %v2316
          %v2325 = vmul.f32 %v2267, %v2316
          %v2326 = vmul.f32 %v2268, %v2316
          %v2327 = vmul.f32 %v2269, %v2316
          %v2328 = vmul.f32 %v2270, %v2316
          %v2329 = vmul.f32 %v2271, %v2316
          %v2330 = vmul.f32 %v2272, %v2316
          %v2331 = vmul.f32 %v2273, %v2316
          %v2332 = vmul.f32 %v2274, %v2316
          %v2333 = vmul.f32 %v2275, %v2316
          %v2334 = vmul.f32 %v2276, %v2316
          %v2335 = vmul.f32 %v2277, %v2316
          %v2336 = vmul.f32 %v2278, %v2316
          %v2337 = vmul.f32 %v2279, %v2316
          %v2338 = vmul.f32 %v2280, %v2316
          %v2339 = vmul.f32 %v2281, %v2316
          %v2340 = vmul.f32 %v2282, %v2316
          %v2365 = vrot.slane %v2317, 1
          %v2366 = vrot.slane %v2318, 1
          %v2367 = vsel %vm2036, %v2365, %v2366
          %v2368 = vrot.slane %v2319, 1
          %v2369 = vsel %vm2036, %v2366, %v2368
          %v2370 = vrot.slane %v2320, 1
          %v2371 = vrot.slane %v2321, 1
          %v2372 = vsel %vm2036, %v2370, %v2371
          %v2373 = vrot.slane %v2322, 1
          %v2374 = vsel %vm2036, %v2371, %v2373
          %v2375 = vrot.slane %v2323, 1
          %v2376 = vrot.slane %v2324, 1
          %v2377 = vsel %vm2036, %v2375, %v2376
          %v2378 = vrot.slane %v2325, 1
          %v2379 = vsel %vm2036, %v2376, %v2378
          %v2380 = vrot.slane %v2326, 1
          %v2381 = vrot.slane %v2327, 1
          %v2382 = vsel %vm2036, %v2380, %v2381
          %v2383 = vrot.slane %v2328, 1
          %v2384 = vsel %vm2036, %v2381, %v2383
          %v2385 = vrot.slane %v2329, 1
          %v2386 = vrot.slane %v2330, 1
          %v2387 = vsel %vm2036, %v2385, %v2386
          %v2388 = vrot.slane %v2331, 1
          %v2389 = vsel %vm2036, %v2386, %v2388
          %v2390 = vrot.slane %v2332, 1
          %v2391 = vrot.slane %v2333, 1
          %v2392 = vsel %vm2036, %v2390, %v2391
          %v2393 = vrot.slane %v2334, 1
          %v2394 = vsel %vm2036, %v2391, %v2393
          %v2395 = vrot.slane %v2335, 1
          %v2396 = vrot.slane %v2336, 1
          %v2397 = vsel %vm2036, %v2395, %v2396
          %v2398 = vrot.slane %v2337, 1
          %v2399 = vsel %vm2036, %v2396, %v2398
          %v2400 = vrot.slane %v2338, 1
          %v2401 = vrot.slane %v2339, 1
          %v2402 = vsel %vm2036, %v2400, %v2401
          %v2403 = vrot.slane %v2340, 1
          %v2404 = vsel %vm2036, %v2401, %v2403
          %v2421 = vadd.f32 %v2300, %v2367
          %v2422 = vadd.f32 %v2301, %v2369
          %v2423 = vadd.f32 %v2302, %v2372
          %v2424 = vadd.f32 %v2303, %v2374
          %v2425 = vadd.f32 %v2304, %v2377
          %v2426 = vadd.f32 %v2305, %v2379
          %v2427 = vadd.f32 %v2306, %v2382
          %v2428 = vadd.f32 %v2307, %v2384
          %v2429 = vadd.f32 %v2308, %v2387
          %v2430 = vadd.f32 %v2309, %v2389
          %v2431 = vadd.f32 %v2310, %v2392
          %v2432 = vadd.f32 %v2311, %v2394
          %v2433 = vadd.f32 %v2312, %v2397
          %v2434 = vadd.f32 %v2313, %v2399
          %v2435 = vadd.f32 %v2314, %v2402
          %v2436 = vadd.f32 %v2315, %v2404
          %v2437 = vperm.slane %v1889, 5
          %v2438 = vmul.f32 %v2259, %v2437
          %v2439 = vmul.f32 %v2260, %v2437
          %v2440 = vmul.f32 %v2261, %v2437
          %v2441 = vmul.f32 %v2262, %v2437
          %v2442 = vmul.f32 %v2263, %v2437
          %v2443 = vmul.f32 %v2264, %v2437
          %v2444 = vmul.f32 %v2265, %v2437
          %v2445 = vmul.f32 %v2266, %v2437
          %v2446 = vmul.f32 %v2267, %v2437
          %v2447 = vmul.f32 %v2268, %v2437
          %v2448 = vmul.f32 %v2269, %v2437
          %v2449 = vmul.f32 %v2270, %v2437
          %v2450 = vmul.f32 %v2271, %v2437
          %v2451 = vmul.f32 %v2272, %v2437
          %v2452 = vmul.f32 %v2273, %v2437
          %v2453 = vmul.f32 %v2274, %v2437
          %v2454 = vmul.f32 %v2275, %v2437
          %v2455 = vmul.f32 %v2276, %v2437
          %v2456 = vmul.f32 %v2277, %v2437
          %v2457 = vmul.f32 %v2278, %v2437
          %v2458 = vmul.f32 %v2279, %v2437
          %v2459 = vmul.f32 %v2280, %v2437
          %v2460 = vmul.f32 %v2281, %v2437
          %v2461 = vmul.f32 %v2282, %v2437
          %v2486 = vrot.slane %v2438, 2
          %v2487 = vrot.slane %v2439, 2
          %v2488 = vsel %vm2158, %v2486, %v2487
          %v2489 = vrot.slane %v2440, 2
          %v2490 = vsel %vm2158, %v2487, %v2489
          %v2491 = vrot.slane %v2441, 2
          %v2492 = vrot.slane %v2442, 2
          %v2493 = vsel %vm2158, %v2491, %v2492
          %v2494 = vrot.slane %v2443, 2
          %v2495 = vsel %vm2158, %v2492, %v2494
          %v2496 = vrot.slane %v2444, 2
          %v2497 = vrot.slane %v2445, 2
          %v2498 = vsel %vm2158, %v2496, %v2497
          %v2499 = vrot.slane %v2446, 2
          %v2500 = vsel %vm2158, %v2497, %v2499
          %v2501 = vrot.slane %v2447, 2
          %v2502 = vrot.slane %v2448, 2
          %v2503 = vsel %vm2158, %v2501, %v2502
          %v2504 = vrot.slane %v2449, 2
          %v2505 = vsel %vm2158, %v2502, %v2504
          %v2506 = vrot.slane %v2450, 2
          %v2507 = vrot.slane %v2451, 2
          %v2508 = vsel %vm2158, %v2506, %v2507
          %v2509 = vrot.slane %v2452, 2
          %v2510 = vsel %vm2158, %v2507, %v2509
          %v2511 = vrot.slane %v2453, 2
          %v2512 = vrot.slane %v2454, 2
          %v2513 = vsel %vm2158, %v2511, %v2512
          %v2514 = vrot.slane %v2455, 2
          %v2515 = vsel %vm2158, %v2512, %v2514
          %v2516 = vrot.slane %v2456, 2
          %v2517 = vrot.slane %v2457, 2
          %v2518 = vsel %vm2158, %v2516, %v2517
          %v2519 = vrot.slane %v2458, 2
          %v2520 = vsel %vm2158, %v2517, %v2519
          %v2521 = vrot.slane %v2459, 2
          %v2522 = vrot.slane %v2460, 2
          %v2523 = vsel %vm2158, %v2521, %v2522
          %v2524 = vrot.slane %v2461, 2
          %v2525 = vsel %vm2158, %v2522, %v2524
          %v2542 = vadd.f32 %v2421, %v2488
          %v2543 = vadd.f32 %v2422, %v2490
          %v2544 = vadd.f32 %v2423, %v2493
          %v2545 = vadd.f32 %v2424, %v2495
          %v2546 = vadd.f32 %v2425, %v2498
          %v2547 = vadd.f32 %v2426, %v2500
          %v2548 = vadd.f32 %v2427, %v2503
          %v2549 = vadd.f32 %v2428, %v2505
          %v2550 = vadd.f32 %v2429, %v2508
          %v2551 = vadd.f32 %v2430, %v2510
          %v2552 = vadd.f32 %v2431, %v2513
          %v2553 = vadd.f32 %v2432, %v2515
          %v2554 = vadd.f32 %v2433, %v2518
          %v2555 = vadd.f32 %v2434, %v2520
          %v2556 = vadd.f32 %v2435, %v2523
          %v2557 = vadd.f32 %v2436, %v2525
          %s2558 = sadd.s32 %s1899, 2
          %s2559 = smul.u32 %s2558, 3
          %s2560 = smul.addr %s2559, 4
          %s2561 = scalar_lea.vmem [#allocation2], %s2560
          %v2562 = vld [vmem:[%s2561] sm:$0xf]
          %v2563 = vld [vmem:[%s2561 + $0x4] sm:$0xf]
          %v2564 = vld [vmem:[%s2561 + $0x8] sm:$0x1]
          %v2565 = vld [vmem:[%s2561 + $0xc] sm:$0xf]
          %v2566 = vld [vmem:[%s2561 + $0x10] sm:$0xf]
          %v2567 = vld [vmem:[%s2561 + $0x14] sm:$0x1]
          %v2568 = vld [vmem:[%s2561 + $0x18] sm:$0xf]
          %v2569 = vld [vmem:[%s2561 + $0x1c] sm:$0xf]
          %v2570 = vld [vmem:[%s2561 + $0x20] sm:$0x1]
          %v2571 = vld [vmem:[%s2561 + $0x24] sm:$0xf]
          %v2572 = vld [vmem:[%s2561 + $0x28] sm:$0xf]
          %v2573 = vld [vmem:[%s2561 + $0x2c] sm:$0x1]
          %v2574 = vld [vmem:[%s2561 + $0x30] sm:$0xf]
          %v2575 = vld [vmem:[%s2561 + $0x34] sm:$0xf]
          %v2576 = vld [vmem:[%s2561 + $0x38] sm:$0x1]
          %v2577 = vld [vmem:[%s2561 + $0x3c] sm:$0xf]
          %v2578 = vld [vmem:[%s2561 + $0x40] sm:$0xf]
          %v2579 = vld [vmem:[%s2561 + $0x44] sm:$0x1]
          %v2580 = vld [vmem:[%s2561 + $0x48] sm:$0xf]
          %v2581 = vld [vmem:[%s2561 + $0x4c] sm:$0xf]
          %v2582 = vld [vmem:[%s2561 + $0x50] sm:$0x1]
          %v2583 = vld [vmem:[%s2561 + $0x54] sm:$0xf]
          %v2584 = vld [vmem:[%s2561 + $0x58] sm:$0xf]
          %v2585 = vld [vmem:[%s2561 + $0x5c] sm:$0x1]
          %v2586 = vunpack.c.l.bf16 %v2562
          %v2587 = vunpack.c.l.bf16 %v2563
          %v2588 = vunpack.c.l.bf16 %v2564
          %v2589 = vunpack.c.l.bf16 %v2565
          %v2590 = vunpack.c.l.bf16 %v2566
          %v2591 = vunpack.c.l.bf16 %v2567
          %v2592 = vunpack.c.l.bf16 %v2568
          %v2593 = vunpack.c.l.bf16 %v2569
          %v2594 = vunpack.c.l.bf16 %v2570
          %v2595 = vunpack.c.l.bf16 %v2571
          %v2596 = vunpack.c.l.bf16 %v2572
          %v2597 = vunpack.c.l.bf16 %v2573
          %v2598 = vunpack.c.l.bf16 %v2574
          %v2599 = vunpack.c.l.bf16 %v2575
          %v2600 = vunpack.c.l.bf16 %v2576
          %v2601 = vunpack.c.l.bf16 %v2577
          %v2602 = vunpack.c.l.bf16 %v2578
          %v2603 = vunpack.c.l.bf16 %v2579
          %v2604 = vunpack.c.l.bf16 %v2580
          %v2605 = vunpack.c.l.bf16 %v2581
          %v2606 = vunpack.c.l.bf16 %v2582
          %v2607 = vunpack.c.l.bf16 %v2583
          %v2608 = vunpack.c.l.bf16 %v2584
          %v2609 = vunpack.c.l.bf16 %v2585
          %v2610 = vperm.slane %v1889, 6
          %v2611 = vmul.f32 %v2586, %v2610
          %v2612 = vmul.f32 %v2587, %v2610
          %v2613 = vmul.f32 %v2589, %v2610
          %v2614 = vmul.f32 %v2590, %v2610
          %v2615 = vmul.f32 %v2592, %v2610
          %v2616 = vmul.f32 %v2593, %v2610
          %v2617 = vmul.f32 %v2595, %v2610
          %v2618 = vmul.f32 %v2596, %v2610
          %v2619 = vmul.f32 %v2598, %v2610
          %v2620 = vmul.f32 %v2599, %v2610
          %v2621 = vmul.f32 %v2601, %v2610
          %v2622 = vmul.f32 %v2602, %v2610
          %v2623 = vmul.f32 %v2604, %v2610
          %v2624 = vmul.f32 %v2605, %v2610
          %v2625 = vmul.f32 %v2607, %v2610
          %v2626 = vmul.f32 %v2608, %v2610
          %v2627 = vadd.f32 %v2542, %v2611
          %v2628 = vadd.f32 %v2543, %v2612
          %v2629 = vadd.f32 %v2544, %v2613
          %v2630 = vadd.f32 %v2545, %v2614
          %v2631 = vadd.f32 %v2546, %v2615
          %v2632 = vadd.f32 %v2547, %v2616
          %v2633 = vadd.f32 %v2548, %v2617
          %v2634 = vadd.f32 %v2549, %v2618
          %v2635 = vadd.f32 %v2550, %v2619
          %v2636 = vadd.f32 %v2551, %v2620
          %v2637 = vadd.f32 %v2552, %v2621
          %v2638 = vadd.f32 %v2553, %v2622
          %v2639 = vadd.f32 %v2554, %v2623
          %v2640 = vadd.f32 %v2555, %v2624
          %v2641 = vadd.f32 %v2556, %v2625
          %v2642 = vadd.f32 %v2557, %v2626
          %v2643 = vperm.slane %v1889, 7
          %v2644 = vmul.f32 %v2586, %v2643
          %v2645 = vmul.f32 %v2587, %v2643
          %v2646 = vmul.f32 %v2588, %v2643
          %v2647 = vmul.f32 %v2589, %v2643
          %v2648 = vmul.f32 %v2590, %v2643
          %v2649 = vmul.f32 %v2591, %v2643
          %v2650 = vmul.f32 %v2592, %v2643
          %v2651 = vmul.f32 %v2593, %v2643
          %v2652 = vmul.f32 %v2594, %v2643
          %v2653 = vmul.f32 %v2595, %v2643
          %v2654 = vmul.f32 %v2596, %v2643
          %v2655 = vmul.f32 %v2597, %v2643
          %v2656 = vmul.f32 %v2598, %v2643
          %v2657 = vmul.f32 %v2599, %v2643
          %v2658 = vmul.f32 %v2600, %v2643
          %v2659 = vmul.f32 %v2601, %v2643
          %v2660 = vmul.f32 %v2602, %v2643
          %v2661 = vmul.f32 %v2603, %v2643
          %v2662 = vmul.f32 %v2604, %v2643
          %v2663 = vmul.f32 %v2605, %v2643
          %v2664 = vmul.f32 %v2606, %v2643
          %v2665 = vmul.f32 %v2607, %v2643
          %v2666 = vmul.f32 %v2608, %v2643
          %v2667 = vmul.f32 %v2609, %v2643
          %v2692 = vrot.slane %v2644, 1
          %v2693 = vrot.slane %v2645, 1
          %v2694 = vsel %vm2036, %v2692, %v2693
          %v2695 = vrot.slane %v2646, 1
          %v2696 = vsel %vm2036, %v2693, %v2695
          %v2697 = vrot.slane %v2647, 1
          %v2698 = vrot.slane %v2648, 1
          %v2699 = vsel %vm2036, %v2697, %v2698
          %v2700 = vrot.slane %v2649, 1
          %v2701 = vsel %vm2036, %v2698, %v2700
          %v2702 = vrot.slane %v2650, 1
          %v2703 = vrot.slane %v2651, 1
          %v2704 = vsel %vm2036, %v2702, %v2703
          %v2705 = vrot.slane %v2652, 1
          %v2706 = vsel %vm2036, %v2703, %v2705
          %v2707 = vrot.slane %v2653, 1
          %v2708 = vrot.slane %v2654, 1
          %v2709 = vsel %vm2036, %v2707, %v2708
          %v2710 = vrot.slane %v2655, 1
          %v2711 = vsel %vm2036, %v2708, %v2710
          %v2712 = vrot.slane %v2656, 1
          %v2713 = vrot.slane %v2657, 1
          %v2714 = vsel %vm2036, %v2712, %v2713
          %v2715 = vrot.slane %v2658, 1
          %v2716 = vsel %vm2036, %v2713, %v2715
          %v2717 = vrot.slane %v2659, 1
          %v2718 = vrot.slane %v2660, 1
          %v2719 = vsel %vm2036, %v2717, %v2718
          %v2720 = vrot.slane %v2661, 1
          %v2721 = vsel %vm2036, %v2718, %v2720
          %v2722 = vrot.slane %v2662, 1
          %v2723 = vrot.slane %v2663, 1
          %v2724 = vsel %vm2036, %v2722, %v2723
          %v2725 = vrot.slane %v2664, 1
          %v2726 = vsel %vm2036, %v2723, %v2725
          %v2727 = vrot.slane %v2665, 1
          %v2728 = vrot.slane %v2666, 1
          %v2729 = vsel %vm2036, %v2727, %v2728
          %v2730 = vrot.slane %v2667, 1
          %v2731 = vsel %vm2036, %v2728, %v2730
          %v2748 = vadd.f32 %v2627, %v2694
          %v2749 = vadd.f32 %v2628, %v2696
          %v2750 = vadd.f32 %v2629, %v2699
          %v2751 = vadd.f32 %v2630, %v2701
          %v2752 = vadd.f32 %v2631, %v2704
          %v2753 = vadd.f32 %v2632, %v2706
          %v2754 = vadd.f32 %v2633, %v2709
          %v2755 = vadd.f32 %v2634, %v2711
          %v2756 = vadd.f32 %v2635, %v2714
          %v2757 = vadd.f32 %v2636, %v2716
          %v2758 = vadd.f32 %v2637, %v2719
          %v2759 = vadd.f32 %v2638, %v2721
          %v2760 = vadd.f32 %v2639, %v2724
          %v2761 = vadd.f32 %v2640, %v2726
          %v2762 = vadd.f32 %v2641, %v2729
          %v2763 = vadd.f32 %v2642, %v2731
          %v2764 = vperm.slane %v1890, 0
          %v2765 = vmul.f32 %v2586, %v2764
          %v2766 = vmul.f32 %v2587, %v2764
          %v2767 = vmul.f32 %v2588, %v2764
          %v2768 = vmul.f32 %v2589, %v2764
          %v2769 = vmul.f32 %v2590, %v2764
          %v2770 = vmul.f32 %v2591, %v2764
          %v2771 = vmul.f32 %v2592, %v2764
          %v2772 = vmul.f32 %v2593, %v2764
          %v2773 = vmul.f32 %v2594, %v2764
          %v2774 = vmul.f32 %v2595, %v2764
          %v2775 = vmul.f32 %v2596, %v2764
          %v2776 = vmul.f32 %v2597, %v2764
          %v2777 = vmul.f32 %v2598, %v2764
          %v2778 = vmul.f32 %v2599, %v2764
          %v2779 = vmul.f32 %v2600, %v2764
          %v2780 = vmul.f32 %v2601, %v2764
          %v2781 = vmul.f32 %v2602, %v2764
          %v2782 = vmul.f32 %v2603, %v2764
          %v2783 = vmul.f32 %v2604, %v2764
          %v2784 = vmul.f32 %v2605, %v2764
          %v2785 = vmul.f32 %v2606, %v2764
          %v2786 = vmul.f32 %v2607, %v2764
          %v2787 = vmul.f32 %v2608, %v2764
          %v2788 = vmul.f32 %v2609, %v2764
          %v2813 = vrot.slane %v2765, 2
          %v2814 = vrot.slane %v2766, 2
          %v2815 = vsel %vm2158, %v2813, %v2814
          %v2816 = vrot.slane %v2767, 2
          %v2817 = vsel %vm2158, %v2814, %v2816
          %v2818 = vrot.slane %v2768, 2
          %v2819 = vrot.slane %v2769, 2
          %v2820 = vsel %vm2158, %v2818, %v2819
          %v2821 = vrot.slane %v2770, 2
          %v2822 = vsel %vm2158, %v2819, %v2821
          %v2823 = vrot.slane %v2771, 2
          %v2824 = vrot.slane %v2772, 2
          %v2825 = vsel %vm2158, %v2823, %v2824
          %v2826 = vrot.slane %v2773, 2
          %v2827 = vsel %vm2158, %v2824, %v2826
          %v2828 = vrot.slane %v2774, 2
          %v2829 = vrot.slane %v2775, 2
          %v2830 = vsel %vm2158, %v2828, %v2829
          %v2831 = vrot.slane %v2776, 2
          %v2832 = vsel %vm2158, %v2829, %v2831
          %v2833 = vrot.slane %v2777, 2
          %v2834 = vrot.slane %v2778, 2
          %v2835 = vsel %vm2158, %v2833, %v2834
          %v2836 = vrot.slane %v2779, 2
          %v2837 = vsel %vm2158, %v2834, %v2836
          %v2838 = vrot.slane %v2780, 2
          %v2839 = vrot.slane %v2781, 2
          %v2840 = vsel %vm2158, %v2838, %v2839
          %v2841 = vrot.slane %v2782, 2
          %v2842 = vsel %vm2158, %v2839, %v2841
          %v2843 = vrot.slane %v2783, 2
          %v2844 = vrot.slane %v2784, 2
          %v2845 = vsel %vm2158, %v2843, %v2844
          %v2846 = vrot.slane %v2785, 2
          %v2847 = vsel %vm2158, %v2844, %v2846
          %v2848 = vrot.slane %v2786, 2
          %v2849 = vrot.slane %v2787, 2
          %v2850 = vsel %vm2158, %v2848, %v2849
          %v2851 = vrot.slane %v2788, 2
          %v2852 = vsel %vm2158, %v2849, %v2851
          %v2869 = vadd.f32 %v2748, %v2815
          %v2870 = vadd.f32 %v2749, %v2817
          %v2871 = vadd.f32 %v2750, %v2820
          %v2872 = vadd.f32 %v2751, %v2822
          %v2873 = vadd.f32 %v2752, %v2825
          %v2874 = vadd.f32 %v2753, %v2827
          %v2875 = vadd.f32 %v2754, %v2830
          %v2876 = vadd.f32 %v2755, %v2832
          %v2877 = vadd.f32 %v2756, %v2835
          %v2878 = vadd.f32 %v2757, %v2837
          %v2879 = vadd.f32 %v2758, %v2840
          %v2880 = vadd.f32 %v2759, %v2842
          %v2881 = vadd.f32 %v2760, %v2845
          %v2882 = vadd.f32 %v2761, %v2847
          %v2883 = vadd.f32 %v2762, %v2850
          %v2884 = vadd.f32 %v2763, %v2852
          %v2885 = vxor.u32 %v2869, 2147483648
          %v2886 = vxor.u32 %v2870, 2147483648
          %v2887 = vxor.u32 %v2871, 2147483648
          %v2888 = vxor.u32 %v2872, 2147483648
          %v2889 = vxor.u32 %v2873, 2147483648
          %v2890 = vxor.u32 %v2874, 2147483648
          %v2891 = vxor.u32 %v2875, 2147483648
          %v2892 = vxor.u32 %v2876, 2147483648
          %v2893 = vxor.u32 %v2877, 2147483648
          %v2894 = vxor.u32 %v2878, 2147483648
          %v2895 = vxor.u32 %v2879, 2147483648
          %v2896 = vxor.u32 %v2880, 2147483648
          %v2897 = vxor.u32 %v2881, 2147483648
          %v2898 = vxor.u32 %v2882, 2147483648
          %v2899 = vxor.u32 %v2883, 2147483648
          %v2900 = vxor.u32 %v2884, 2147483648
          %v2901 = vmul.f32 %v2885, 1.442695
          %v2902 = vpow.pop %v2901
          %v2903 = vmul.f32 %v2886, 1.442695
          %v2904 = vpow.pop %v2903
          %v2905 = vmul.f32 %v2887, 1.442695
          %v2906 = vpow.pop %v2905
          %v2907 = vmul.f32 %v2888, 1.442695
          %v2908 = vpow.pop %v2907
          %v2909 = vmul.f32 %v2889, 1.442695
          %v2910 = vpow.pop %v2909
          %v2911 = vmul.f32 %v2890, 1.442695
          %v2912 = vpow.pop %v2911
          %v2913 = vmul.f32 %v2891, 1.442695
          %v2914 = vpow.pop %v2913
          %v2915 = vmul.f32 %v2892, 1.442695
          %v2916 = vpow.pop %v2915
          %v2917 = vmul.f32 %v2893, 1.442695
          %v2918 = vpow.pop %v2917
          %v2919 = vmul.f32 %v2894, 1.442695
          %v2920 = vpow.pop %v2919
          %v2921 = vmul.f32 %v2895, 1.442695
          %v2922 = vpow.pop %v2921
          %v2923 = vmul.f32 %v2896, 1.442695
          %v2924 = vpow.pop %v2923
          %v2925 = vmul.f32 %v2897, 1.442695
          %v2926 = vpow.pop %v2925
          %v2927 = vmul.f32 %v2898, 1.442695
          %v2928 = vpow.pop %v2927
          %v2929 = vmul.f32 %v2899, 1.442695
          %v2930 = vpow.pop %v2929
          %v2931 = vmul.f32 %v2900, 1.442695
          %v2932 = vpow.pop %v2931
          %v2933 = vadd.f32 %v2902, 1.0
          %v2934 = vadd.f32 %v2904, 1.0
          %v2935 = vadd.f32 %v2906, 1.0
          %v2936 = vadd.f32 %v2908, 1.0
          %v2937 = vadd.f32 %v2910, 1.0
          %v2938 = vadd.f32 %v2912, 1.0
          %v2939 = vadd.f32 %v2914, 1.0
          %v2940 = vadd.f32 %v2916, 1.0
          %v2941 = vadd.f32 %v2918, 1.0
          %v2942 = vadd.f32 %v2920, 1.0
          %v2943 = vadd.f32 %v2922, 1.0
          %v2944 = vadd.f32 %v2924, 1.0
          %v2945 = vadd.f32 %v2926, 1.0
          %v2946 = vadd.f32 %v2928, 1.0
          %v2947 = vadd.f32 %v2930, 1.0
          %v2948 = vadd.f32 %v2932, 1.0
          %v2949 = vrcp.pop %v2933
          %v2950 = vmul.f32 %v2933, %v2949
          %v2951 = vsub.f32 1.0, %v2950
          %v2952 = vmul.f32 %v2949, %v2951
          %v2953 = vadd.f32 %v2949, %v2952
          %vm2954 = vweird.f32 %v2933
          %vm2955 = vweird.f32 %v2949
          %vm2956 = vmor %vm2954, %vm2955
          %v2957 = vsel %vm2956, %v2949, %v2953
          %v2958 = vand.u32 2147483647, %v2933
          %vm2959 = vcmp.eq.f32.partialorder %v2958, 8.507059e+37
          %v2960 = vand.u32 %v2933, 2147483648
          %v2961 = vor.u32 1.1754944e-38, %v2960
          %v2962 = vsel %vm2959, %v2961, %v2957
          %v2963 = vmul.f32 1.0, %v2962
          %v2964 = vrcp.pop %v2934
          %v2965 = vmul.f32 %v2934, %v2964
          %v2966 = vsub.f32 1.0, %v2965
          %v2967 = vmul.f32 %v2964, %v2966
          %v2968 = vadd.f32 %v2964, %v2967
          %vm2969 = vweird.f32 %v2934
          %vm2970 = vweird.f32 %v2964
          %vm2971 = vmor %vm2969, %vm2970
          %v2972 = vsel %vm2971, %v2964, %v2968
          %v2973 = vand.u32 2147483647, %v2934
          %vm2974 = vcmp.eq.f32.partialorder %v2973, 8.507059e+37
          %v2975 = vand.u32 %v2934, 2147483648
          %v2976 = vor.u32 1.1754944e-38, %v2975
          %v2977 = vsel %vm2974, %v2976, %v2972
          %v2978 = vmul.f32 1.0, %v2977
          %v2979 = vrcp.pop %v2935
          %v2980 = vmul.f32 %v2935, %v2979
          %v2981 = vsub.f32 1.0, %v2980
          %v2982 = vmul.f32 %v2979, %v2981
          %v2983 = vadd.f32 %v2979, %v2982
          %vm2984 = vweird.f32 %v2935
          %vm2985 = vweird.f32 %v2979
          %vm2986 = vmor %vm2984, %vm2985
          %v2987 = vsel %vm2986, %v2979, %v2983
          %v2988 = vand.u32 2147483647, %v2935
          %vm2989 = vcmp.eq.f32.partialorder %v2988, 8.507059e+37
          %v2990 = vand.u32 %v2935, 2147483648
          %v2991 = vor.u32 1.1754944e-38, %v2990
          %v2992 = vsel %vm2989, %v2991, %v2987
          %v2993 = vmul.f32 1.0, %v2992
          %v2994 = vrcp.pop %v2936
          %v2995 = vmul.f32 %v2936, %v2994
          %v2996 = vsub.f32 1.0, %v2995
          %v2997 = vmul.f32 %v2994, %v2996
          %v2998 = vadd.f32 %v2994, %v2997
          %vm2999 = vweird.f32 %v2936
          %vm3000 = vweird.f32 %v2994
          %vm3001 = vmor %vm2999, %vm3000
          %v3002 = vsel %vm3001, %v2994, %v2998
          %v3003 = vand.u32 2147483647, %v2936
          %vm3004 = vcmp.eq.f32.partialorder %v3003, 8.507059e+37
          %v3005 = vand.u32 %v2936, 2147483648
          %v3006 = vor.u32 1.1754944e-38, %v3005
          %v3007 = vsel %vm3004, %v3006, %v3002
          %v3008 = vmul.f32 1.0, %v3007
          %v3009 = vrcp.pop %v2937
          %v3010 = vmul.f32 %v2937, %v3009
          %v3011 = vsub.f32 1.0, %v3010
          %v3012 = vmul.f32 %v3009, %v3011
          %v3013 = vadd.f32 %v3009, %v3012
          %vm3014 = vweird.f32 %v2937
          %vm3015 = vweird.f32 %v3009
          %vm3016 = vmor %vm3014, %vm3015
          %v3017 = vsel %vm3016, %v3009, %v3013
          %v3018 = vand.u32 2147483647, %v2937
          %vm3019 = vcmp.eq.f32.partialorder %v3018, 8.507059e+37
          %v3020 = vand.u32 %v2937, 2147483648
          %v3021 = vor.u32 1.1754944e-38, %v3020
          %v3022 = vsel %vm3019, %v3021, %v3017
          %v3023 = vmul.f32 1.0, %v3022
          %v3024 = vrcp.pop %v2938
          %v3025 = vmul.f32 %v2938, %v3024
          %v3026 = vsub.f32 1.0, %v3025
          %v3027 = vmul.f32 %v3024, %v3026
          %v3028 = vadd.f32 %v3024, %v3027
          %vm3029 = vweird.f32 %v2938
          %vm3030 = vweird.f32 %v3024
          %vm3031 = vmor %vm3029, %vm3030
          %v3032 = vsel %vm3031, %v3024, %v3028
          %v3033 = vand.u32 2147483647, %v2938
          %vm3034 = vcmp.eq.f32.partialorder %v3033, 8.507059e+37
          %v3035 = vand.u32 %v2938, 2147483648
          %v3036 = vor.u32 1.1754944e-38, %v3035
          %v3037 = vsel %vm3034, %v3036, %v3032
          %v3038 = vmul.f32 1.0, %v3037
          %v3039 = vrcp.pop %v2939
          %v3040 = vmul.f32 %v2939, %v3039
          %v3041 = vsub.f32 1.0, %v3040
          %v3042 = vmul.f32 %v3039, %v3041
          %v3043 = vadd.f32 %v3039, %v3042
          %vm3044 = vweird.f32 %v2939
          %vm3045 = vweird.f32 %v3039
          %vm3046 = vmor %vm3044, %vm3045
          %v3047 = vsel %vm3046, %v3039, %v3043
          %v3048 = vand.u32 2147483647, %v2939
          %vm3049 = vcmp.eq.f32.partialorder %v3048, 8.507059e+37
          %v3050 = vand.u32 %v2939, 2147483648
          %v3051 = vor.u32 1.1754944e-38, %v3050
          %v3052 = vsel %vm3049, %v3051, %v3047
          %v3053 = vmul.f32 1.0, %v3052
          %v3054 = vrcp.pop %v2940
          %v3055 = vmul.f32 %v2940, %v3054
          %v3056 = vsub.f32 1.0, %v3055
          %v3057 = vmul.f32 %v3054, %v3056
          %v3058 = vadd.f32 %v3054, %v3057
          %vm3059 = vweird.f32 %v2940
          %vm3060 = vweird.f32 %v3054
          %vm3061 = vmor %vm3059, %vm3060
          %v3062 = vsel %vm3061, %v3054, %v3058
          %v3063 = vand.u32 2147483647, %v2940
          %vm3064 = vcmp.eq.f32.partialorder %v3063, 8.507059e+37
          %v3065 = vand.u32 %v2940, 2147483648
          %v3066 = vor.u32 1.1754944e-38, %v3065
          %v3067 = vsel %vm3064, %v3066, %v3062
          %v3068 = vmul.f32 1.0, %v3067
          %v3069 = vrcp.pop %v2941
          %v3070 = vmul.f32 %v2941, %v3069
          %v3071 = vsub.f32 1.0, %v3070
          %v3072 = vmul.f32 %v3069, %v3071
          %v3073 = vadd.f32 %v3069, %v3072
          %vm3074 = vweird.f32 %v2941
          %vm3075 = vweird.f32 %v3069
          %vm3076 = vmor %vm3074, %vm3075
          %v3077 = vsel %vm3076, %v3069, %v3073
          %v3078 = vand.u32 2147483647, %v2941
          %vm3079 = vcmp.eq.f32.partialorder %v3078, 8.507059e+37
          %v3080 = vand.u32 %v2941, 2147483648
          %v3081 = vor.u32 1.1754944e-38, %v3080
          %v3082 = vsel %vm3079, %v3081, %v3077
          %v3083 = vmul.f32 1.0, %v3082
          %v3084 = vrcp.pop %v2942
          %v3085 = vmul.f32 %v2942, %v3084
          %v3086 = vsub.f32 1.0, %v3085
          %v3087 = vmul.f32 %v3084, %v3086
          %v3088 = vadd.f32 %v3084, %v3087
          %vm3089 = vweird.f32 %v2942
          %vm3090 = vweird.f32 %v3084
          %vm3091 = vmor %vm3089, %vm3090
          %v3092 = vsel %vm3091, %v3084, %v3088
          %v3093 = vand.u32 2147483647, %v2942
          %vm3094 = vcmp.eq.f32.partialorder %v3093, 8.507059e+37
          %v3095 = vand.u32 %v2942, 2147483648
          %v3096 = vor.u32 1.1754944e-38, %v3095
          %v3097 = vsel %vm3094, %v3096, %v3092
          %v3098 = vmul.f32 1.0, %v3097
          %v3099 = vrcp.pop %v2943
          %v3100 = vmul.f32 %v2943, %v3099
          %v3101 = vsub.f32 1.0, %v3100
          %v3102 = vmul.f32 %v3099, %v3101
          %v3103 = vadd.f32 %v3099, %v3102
          %vm3104 = vweird.f32 %v2943
          %vm3105 = vweird.f32 %v3099
          %vm3106 = vmor %vm3104, %vm3105
          %v3107 = vsel %vm3106, %v3099, %v3103
          %v3108 = vand.u32 2147483647, %v2943
          %vm3109 = vcmp.eq.f32.partialorder %v3108, 8.507059e+37
          %v3110 = vand.u32 %v2943, 2147483648
          %v3111 = vor.u32 1.1754944e-38, %v3110
          %v3112 = vsel %vm3109, %v3111, %v3107
          %v3113 = vmul.f32 1.0, %v3112
          %v3114 = vrcp.pop %v2944
          %v3115 = vmul.f32 %v2944, %v3114
          %v3116 = vsub.f32 1.0, %v3115
          %v3117 = vmul.f32 %v3114, %v3116
          %v3118 = vadd.f32 %v3114, %v3117
          %vm3119 = vweird.f32 %v2944
          %vm3120 = vweird.f32 %v3114
          %vm3121 = vmor %vm3119, %vm3120
          %v3122 = vsel %vm3121, %v3114, %v3118
          %v3123 = vand.u32 2147483647, %v2944
          %vm3124 = vcmp.eq.f32.partialorder %v3123, 8.507059e+37
          %v3125 = vand.u32 %v2944, 2147483648
          %v3126 = vor.u32 1.1754944e-38, %v3125
          %v3127 = vsel %vm3124, %v3126, %v3122
          %v3128 = vmul.f32 1.0, %v3127
          %v3129 = vrcp.pop %v2945
          %v3130 = vmul.f32 %v2945, %v3129
          %v3131 = vsub.f32 1.0, %v3130
          %v3132 = vmul.f32 %v3129, %v3131
          %v3133 = vadd.f32 %v3129, %v3132
          %vm3134 = vweird.f32 %v2945
          %vm3135 = vweird.f32 %v3129
          %vm3136 = vmor %vm3134, %vm3135
          %v3137 = vsel %vm3136, %v3129, %v3133
          %v3138 = vand.u32 2147483647, %v2945
          %vm3139 = vcmp.eq.f32.partialorder %v3138, 8.507059e+37
          %v3140 = vand.u32 %v2945, 2147483648
          %v3141 = vor.u32 1.1754944e-38, %v3140
          %v3142 = vsel %vm3139, %v3141, %v3137
          %v3143 = vmul.f32 1.0, %v3142
          %v3144 = vrcp.pop %v2946
          %v3145 = vmul.f32 %v2946, %v3144
          %v3146 = vsub.f32 1.0, %v3145
          %v3147 = vmul.f32 %v3144, %v3146
          %v3148 = vadd.f32 %v3144, %v3147
          %vm3149 = vweird.f32 %v2946
          %vm3150 = vweird.f32 %v3144
          %vm3151 = vmor %vm3149, %vm3150
          %v3152 = vsel %vm3151, %v3144, %v3148
          %v3153 = vand.u32 2147483647, %v2946
          %vm3154 = vcmp.eq.f32.partialorder %v3153, 8.507059e+37
          %v3155 = vand.u32 %v2946, 2147483648
          %v3156 = vor.u32 1.1754944e-38, %v3155
          %v3157 = vsel %vm3154, %v3156, %v3152
          %v3158 = vmul.f32 1.0, %v3157
          %v3159 = vrcp.pop %v2947
          %v3160 = vmul.f32 %v2947, %v3159
          %v3161 = vsub.f32 1.0, %v3160
          %v3162 = vmul.f32 %v3159, %v3161
          %v3163 = vadd.f32 %v3159, %v3162
          %vm3164 = vweird.f32 %v2947
          %vm3165 = vweird.f32 %v3159
          %vm3166 = vmor %vm3164, %vm3165
          %v3167 = vsel %vm3166, %v3159, %v3163
          %v3168 = vand.u32 2147483647, %v2947
          %vm3169 = vcmp.eq.f32.partialorder %v3168, 8.507059e+37
          %v3170 = vand.u32 %v2947, 2147483648
          %v3171 = vor.u32 1.1754944e-38, %v3170
          %v3172 = vsel %vm3169, %v3171, %v3167
          %v3173 = vmul.f32 1.0, %v3172
          %v3174 = vrcp.pop %v2948
          %v3175 = vmul.f32 %v2948, %v3174
          %v3176 = vsub.f32 1.0, %v3175
          %v3177 = vmul.f32 %v3174, %v3176
          %v3178 = vadd.f32 %v3174, %v3177
          %vm3179 = vweird.f32 %v2948
          %vm3180 = vweird.f32 %v3174
          %vm3181 = vmor %vm3179, %vm3180
          %v3182 = vsel %vm3181, %v3174, %v3178
          %v3183 = vand.u32 2147483647, %v2948
          %vm3184 = vcmp.eq.f32.partialorder %v3183, 8.507059e+37
          %v3185 = vand.u32 %v2948, 2147483648
          %v3186 = vor.u32 1.1754944e-38, %v3185
          %v3187 = vsel %vm3184, %v3186, %v3182
          %v3188 = vmul.f32 1.0, %v3187
          %v3189 = vmul.f32 %v2869, %v2963
          %v3190 = vmul.f32 %v2870, %v2978
          %v3191 = vmul.f32 %v2871, %v2993
          %v3192 = vmul.f32 %v2872, %v3008
          %v3193 = vmul.f32 %v2873, %v3023
          %v3194 = vmul.f32 %v2874, %v3038
          %v3195 = vmul.f32 %v2875, %v3053
          %v3196 = vmul.f32 %v2876, %v3068
          %v3197 = vmul.f32 %v2877, %v3083
          %v3198 = vmul.f32 %v2878, %v3098
          %v3199 = vmul.f32 %v2879, %v3113
          %v3200 = vmul.f32 %v2880, %v3128
          %v3201 = vmul.f32 %v2881, %v3143
          %v3202 = vmul.f32 %v2882, %v3158
          %v3203 = vmul.f32 %v2883, %v3173
          %v3204 = vmul.f32 %v2884, %v3188
          %v3205 = vpack.c.bf16 %v3189, %v3189
          %v3206 = vpack.c.bf16 %v3190, %v3190
          %v3207 = vpack.c.bf16 %v3191, %v3191
          %v3208 = vpack.c.bf16 %v3192, %v3192
          %v3209 = vpack.c.bf16 %v3193, %v3193
          %v3210 = vpack.c.bf16 %v3194, %v3194
          %v3211 = vpack.c.bf16 %v3195, %v3195
          %v3212 = vpack.c.bf16 %v3196, %v3196
          %v3213 = vpack.c.bf16 %v3197, %v3197
          %v3214 = vpack.c.bf16 %v3198, %v3198
          %v3215 = vpack.c.bf16 %v3199, %v3199
          %v3216 = vpack.c.bf16 %v3200, %v3200
          %v3217 = vpack.c.bf16 %v3201, %v3201
          %v3218 = vpack.c.bf16 %v3202, %v3202
          %v3219 = vpack.c.bf16 %v3203, %v3203
          %v3220 = vpack.c.bf16 %v3204, %v3204
          %s3221 = smul.u32 %s1899, 2
          %s3222 = smul.addr %s3221, 4
          %s3223 = scalar_lea.vmem [#allocation3], %s3222
          %3224 = vst.msk [vmem:[%s3223] sm:$0xf] %vm1310, %v3205
          %3225 = vst.msk [vmem:[%s3223 + $0x4] sm:$0xf] %vm1310, %v3206
          %3226 = vst.msk [vmem:[%s3223 + $0x8] sm:$0xf] %vm1310, %v3207
          %3227 = vst.msk [vmem:[%s3223 + $0xc] sm:$0xf] %vm1310, %v3208
          %3228 = vst.msk [vmem:[%s3223 + $0x10] sm:$0xf] %vm1310, %v3209
          %3229 = vst.msk [vmem:[%s3223 + $0x14] sm:$0xf] %vm1310, %v3210
          %3230 = vst.msk [vmem:[%s3223 + $0x18] sm:$0xf] %vm1310, %v3211
          %3231 = vst.msk [vmem:[%s3223 + $0x1c] sm:$0xf] %vm1310, %v3212
          %3232 = vst.msk [vmem:[%s3223 + $0x20] sm:$0xf] %vm1310, %v3213
          %3233 = vst.msk [vmem:[%s3223 + $0x24] sm:$0xf] %vm1310, %v3214
          %3234 = vst.msk [vmem:[%s3223 + $0x28] sm:$0xf] %vm1310, %v3215
          %3235 = vst.msk [vmem:[%s3223 + $0x2c] sm:$0xf] %vm1310, %v3216
          %3236 = vst.msk [vmem:[%s3223 + $0x30] sm:$0xf] %vm1310, %v3217
          %3237 = vst.msk [vmem:[%s3223 + $0x34] sm:$0xf] %vm1310, %v3218
          %3238 = vst.msk [vmem:[%s3223 + $0x38] sm:$0xf] %vm1310, %v3219
          %3239 = vst.msk [vmem:[%s3223 + $0x3c] sm:$0xf] %vm1310, %v3220
          %v3240 = vld [vmem:[#allocation4] sm:$0x1]
          %vm3241 = vcmask 523264
          %v3242 = vsel %vm3241, %v3189, 0.0
          %v3243 = vsel %vm3241, %v3190, 0.0
          %v3244 = vadd.f32 %v3242, %v3243
          %v3245 = vsel %vm3241, %v3191, 0.0
          %v3246 = vadd.f32 %v3244, %v3245
          %v3247 = vsel %vm3241, %v3192, 0.0
          %v3248 = vadd.f32 %v3246, %v3247
          %v3249 = vsel %vm3241, %v3193, 0.0
          %v3250 = vadd.f32 %v3248, %v3249
          %v3251 = vsel %vm3241, %v3194, 0.0
          %v3252 = vadd.f32 %v3250, %v3251
          %v3253 = vsel %vm3241, %v3195, 0.0
          %v3254 = vadd.f32 %v3252, %v3253
          %v3255 = vsel %vm3241, %v3196, 0.0
          %v3256 = vadd.f32 %v3254, %v3255
          %v3257 = vsel %vm3241, %v3197, 0.0
          %v3258 = vadd.f32 %v3256, %v3257
          %v3259 = vsel %vm3241, %v3198, 0.0
          %v3260 = vadd.f32 %v3258, %v3259
          %v3261 = vsel %vm3241, %v3199, 0.0
          %v3262 = vadd.f32 %v3260, %v3261
          %v3263 = vsel %vm3241, %v3200, 0.0
          %v3264 = vadd.f32 %v3262, %v3263
          %v3265 = vsel %vm3241, %v3201, 0.0
          %v3266 = vadd.f32 %v3264, %v3265
          %v3267 = vsel %vm3241, %v3202, 0.0
          %v3268 = vadd.f32 %v3266, %v3267
          %v3269 = vsel %vm3241, %v3203, 0.0
          %v3270 = vadd.f32 %v3268, %v3269
          %v3271 = vsel %vm3241, %v3204, 0.0
          %v3272 = vadd.f32 %v3270, %v3271
          %v3273 = vrot.slane %v3272, 4
          %v3274 = vadd.f32 %v3272, %v3273
          %v3275 = vrot.slane %v3274, 2
          %v3276 = vadd.f32 %v3274, %v3275
          %v3277 = vrot.slane %v3276, 1
          %v3278 = vadd.f32 %v3276, %v3277
          %v3279 = vadd.f32 %v3240, %v3278
          %3280 = vst.msk [vmem:[#allocation4] sm:$0x1] %vm1313, %v3279
        $region73: #{tpu_custom_call.1} parent=63 // loop_footer
          %s1898 = sadd.s32 1, %s1894
        $region74: #{tpu_custom_call.1} parent=63 // loop_footer_branch
          %1893 = sbr.rel target = $region70
        $region75: #{tpu_custom_call.1} parent=63 // loop_exit
          _
        %v3281 = vld [vmem:[#allocation4] sm:$0x1]
        %v3282 = vmul.f32 %v3281, 0.00390625
        %v3283 = vld [vmem:[%s5] sm:$0xff]
        %v3284 = vld [vmem:[%s5 + $0x8] sm:$0xff]
        %v3285 = vld [vmem:[%s5 + $0x10] sm:$0xff]
        %v3286 = vld [vmem:[%s5 + $0x18] sm:$0xff]
        %v3287 = vld [vmem:[%s5 + $0x20] sm:$0xff]
        %v3288 = vld [vmem:[%s5 + $0x28] sm:$0xff]
        %v3289 = vld [vmem:[%s5 + $0x30] sm:$0xff]
        %v3290 = vld [vmem:[%s5 + $0x38] sm:$0xff]
        %v3291 = vld [vmem:[%s6] sm:$0x1]
        %vm3292 = vcmask 523264
        %v3294 = vsel %vm3292, %v3282, 0
        %3296 = vmatpush.msra.mxu0 0.0
        %3297 = vmatpush.msra.mxu0 0.0
        %3298 = vmatpush.msra.mxu0 0.0
        %3299 = vmatpush.msra.mxu0 0.0
        %3300 = vmatpush.msra.mxu0 0.0
        %3301 = vmatpush.msra.mxu0 0.0
        %3302 = vmatpush.msra.mxu0 0.0
        %3303 = vmatpush.msra.mxu0 0.0
        %3304 = vmatpush.msra.mxu0 %v3290
        %3305 = vmatpush.msra.mxu0 %v3289
        %3306 = vmatpush.msra.mxu0 %v3288
        %3307 = vmatpush.msra.mxu0 %v3287
        %3308 = vmatpush.msra.mxu0 %v3286
        %3309 = vmatpush.msra.mxu0 %v3285
        %3310 = vmatpush.msra.mxu0 %v3284
        %3311 = vmatpush.msra.mxu0 %v3283
        %3312 = vmatmul.f32.gmra.mxu0 %v3294
        %v3313 = vpop.f32.mrf.mxu0
        %v3314 = vadd.f32 %v3291, %v3313
        %3315 = vdwg.mxu0
        %v3316 = vxor.u32 %v3314, 2147483648
        %v3317 = vmul.f32 %v3316, 1.442695
        %v3318 = vpow.pop %v3317
        %v3319 = vadd.f32 %v3318, 1.0
        %v3320 = vrcp.pop %v3319
        %v3321 = vmul.f32 %v3319, %v3320
        %v3322 = vsub.f32 1.0, %v3321
        %v3323 = vmul.f32 %v3320, %v3322
        %v3324 = vadd.f32 %v3320, %v3323
        %vm3325 = vweird.f32 %v3319
        %vm3326 = vweird.f32 %v3320
        %vm3327 = vmor %vm3325, %vm3326
        %v3328 = vsel %vm3327, %v3320, %v3324
        %v3329 = vand.u32 2147483647, %v3319
        %vm3330 = vcmp.eq.f32.partialorder %v3329, 8.507059e+37
        %v3331 = vand.u32 %v3319, 2147483648
        %v3332 = vor.u32 1.1754944e-38, %v3331
        %v3333 = vsel %vm3330, %v3332, %v3328
        %v3334 = vmul.f32 1.0, %v3333
        %v3335 = vmul.f32 %v3314, %v3334
        %v3336 = vld [vmem:[%s7] sm:$0xf]
        %v3337 = vld [vmem:[%s8] sm:$0x1]
        %vm3338 = vcmask 31744
        %v3340 = vsel %vm3338, %v3335, 0
        %vm3342 = vcmask 1043456
        %v3344 = vsel %vm3342, %v3336, 0
        %3346 = vmatpush.msra.mxu0 0.0
        %3347 = vmatpush.msra.mxu0 0.0
        %3348 = vmatpush.msra.mxu0 0.0
        %3349 = vmatpush.msra.mxu0 0.0
        %3350 = vmatpush.msra.mxu0 0.0
        %3351 = vmatpush.msra.mxu0 0.0
        %3352 = vmatpush.msra.mxu0 0.0
        %3353 = vmatpush.msra.mxu0 0.0
        %3354 = vmatpush.msra.mxu0 0.0
        %3355 = vmatpush.msra.mxu0 0.0
        %3356 = vmatpush.msra.mxu0 0.0
        %3357 = vmatpush.msra.mxu0 0.0
        %3358 = vmatpush.msra.mxu0 0.0
        %3359 = vmatpush.msra.mxu0 0.0
        %3360 = vmatpush.msra.mxu0 0.0
        %3361 = vmatpush.msra.mxu0 %v3344
        %3362 = vmatmul.f32.gmra.mxu0 %v3340
        %v3363 = vpop.f32.mrf.mxu0
        %v3364 = vadd.f32 %v3337, %v3363
        %3365 = vdwg.mxu0
        %v3366 = vxor.u32 %v3364, 2147483648
        %v3367 = vmul.f32 %v3366, 1.442695
        %v3368 = vpow.pop %v3367
        %v3369 = vadd.f32 %v3368, 1.0
        %v3370 = vrcp.pop %v3369
        %v3371 = vmul.f32 %v3369, %v3370
        %v3372 = vsub.f32 1.0, %v3371
        %v3373 = vmul.f32 %v3370, %v3372
        %v3374 = vadd.f32 %v3370, %v3373
        %vm3375 = vweird.f32 %v3369
        %vm3376 = vweird.f32 %v3370
        %vm3377 = vmor %vm3375, %vm3376
        %v3378 = vsel %vm3377, %v3370, %v3374
        %v3379 = vand.u32 2147483647, %v3369
        %vm3380 = vcmp.eq.f32.partialorder %v3379, 8.507059e+37
        %v3381 = vand.u32 %v3369, 2147483648
        %v3382 = vor.u32 1.1754944e-38, %v3381
        %v3383 = vsel %vm3380, %v3382, %v3378
        %v3384 = vmul.f32 1.0, %v3383
        %v3385 = vld [vmem:[#allocation3] sm:$0xf]
        %v3386 = vld [vmem:[#allocation3 + $0x4] sm:$0xf]
        %v3387 = vld [vmem:[#allocation3 + $0x8] sm:$0xf]
        %v3388 = vld [vmem:[#allocation3 + $0xc] sm:$0xf]
        %v3389 = vld [vmem:[#allocation3 + $0x10] sm:$0xf]
        %v3390 = vld [vmem:[#allocation3 + $0x14] sm:$0xf]
        %v3391 = vld [vmem:[#allocation3 + $0x18] sm:$0xf]
        %v3392 = vld [vmem:[#allocation3 + $0x1c] sm:$0xf]
        %v3393 = vld [vmem:[#allocation3 + $0x20] sm:$0xf]
        %v3394 = vld [vmem:[#allocation3 + $0x24] sm:$0xf]
        %v3395 = vld [vmem:[#allocation3 + $0x28] sm:$0xf]
        %v3396 = vld [vmem:[#allocation3 + $0x2c] sm:$0xf]
        %v3397 = vld [vmem:[#allocation3 + $0x30] sm:$0xf]
        %v3398 = vld [vmem:[#allocation3 + $0x34] sm:$0xf]
        %v3399 = vld [vmem:[#allocation3 + $0x38] sm:$0xf]
        %v3400 = vld [vmem:[#allocation3 + $0x3c] sm:$0xf]
        %v3401 = vld [vmem:[#allocation3 + $0x40] sm:$0xf]
        %v3402 = vld [vmem:[#allocation3 + $0x44] sm:$0xf]
        %v3403 = vld [vmem:[#allocation3 + $0x48] sm:$0xf]
        %v3404 = vld [vmem:[#allocation3 + $0x4c] sm:$0xf]
        %v3405 = vld [vmem:[#allocation3 + $0x50] sm:$0xf]
        %v3406 = vld [vmem:[#allocation3 + $0x54] sm:$0xf]
        %v3407 = vld [vmem:[#allocation3 + $0x58] sm:$0xf]
        %v3408 = vld [vmem:[#allocation3 + $0x5c] sm:$0xf]
        %v3409 = vld [vmem:[#allocation3 + $0x60] sm:$0xf]
        %v3410 = vld [vmem:[#allocation3 + $0x64] sm:$0xf]
        %v3411 = vld [vmem:[#allocation3 + $0x68] sm:$0xf]
        %v3412 = vld [vmem:[#allocation3 + $0x6c] sm:$0xf]
        %v3413 = vld [vmem:[#allocation3 + $0x70] sm:$0xf]
        %v3414 = vld [vmem:[#allocation3 + $0x74] sm:$0xf]
        %v3415 = vld [vmem:[#allocation3 + $0x78] sm:$0xf]
        %v3416 = vld [vmem:[#allocation3 + $0x7c] sm:$0xf]
        %v3417 = vpack.c.bf16 %v3384, %v3384
        %v3419 = vpack.i.b16 %v3417, %v3417
        %v3421 = vperm.slane %v3419, 0
        %v3422 = vunpack.c.l.bf16 %v3385
        %v3423 = vunpack.c.l.bf16 %v3386
        %v3424 = vunpack.c.l.bf16 %v3387
        %v3425 = vunpack.c.l.bf16 %v3388
        %v3426 = vunpack.c.l.bf16 %v3389
        %v3427 = vunpack.c.l.bf16 %v3390
        %v3428 = vunpack.c.l.bf16 %v3391
        %v3429 = vunpack.c.l.bf16 %v3392
        %v3430 = vunpack.c.l.bf16 %v3393
        %v3431 = vunpack.c.l.bf16 %v3394
        %v3432 = vunpack.c.l.bf16 %v3395
        %v3433 = vunpack.c.l.bf16 %v3396
        %v3434 = vunpack.c.l.bf16 %v3397
        %v3435 = vunpack.c.l.bf16 %v3398
        %v3436 = vunpack.c.l.bf16 %v3399
        %v3437 = vunpack.c.l.bf16 %v3400
        %v3438 = vunpack.c.l.bf16 %v3401
        %v3439 = vunpack.c.l.bf16 %v3402
        %v3440 = vunpack.c.l.bf16 %v3403
        %v3441 = vunpack.c.l.bf16 %v3404
        %v3442 = vunpack.c.l.bf16 %v3405
        %v3443 = vunpack.c.l.bf16 %v3406
        %v3444 = vunpack.c.l.bf16 %v3407
        %v3445 = vunpack.c.l.bf16 %v3408
        %v3446 = vunpack.c.l.bf16 %v3409
        %v3447 = vunpack.c.l.bf16 %v3410
        %v3448 = vunpack.c.l.bf16 %v3411
        %v3449 = vunpack.c.l.bf16 %v3412
        %v3450 = vunpack.c.l.bf16 %v3413
        %v3451 = vunpack.c.l.bf16 %v3414
        %v3452 = vunpack.c.l.bf16 %v3415
        %v3453 = vunpack.c.l.bf16 %v3416
        %v3454 = vunpack.c.l.bf16 %v3421
        %v3455 = vmul.f32 %v3422, %v3454
        %v3456 = vmul.f32 %v3423, %v3454
        %v3457 = vmul.f32 %v3424, %v3454
        %v3458 = vmul.f32 %v3425, %v3454
        %v3459 = vmul.f32 %v3426, %v3454
        %v3460 = vmul.f32 %v3427, %v3454
        %v3461 = vmul.f32 %v3428, %v3454
        %v3462 = vmul.f32 %v3429, %v3454
        %v3463 = vmul.f32 %v3430, %v3454
        %v3464 = vmul.f32 %v3431, %v3454
        %v3465 = vmul.f32 %v3432, %v3454
        %v3466 = vmul.f32 %v3433, %v3454
        %v3467 = vmul.f32 %v3434, %v3454
        %v3468 = vmul.f32 %v3435, %v3454
        %v3469 = vmul.f32 %v3436, %v3454
        %v3470 = vmul.f32 %v3437, %v3454
        %v3471 = vmul.f32 %v3438, %v3454
        %v3472 = vmul.f32 %v3439, %v3454
        %v3473 = vmul.f32 %v3440, %v3454
        %v3474 = vmul.f32 %v3441, %v3454
        %v3475 = vmul.f32 %v3442, %v3454
        %v3476 = vmul.f32 %v3443, %v3454
        %v3477 = vmul.f32 %v3444, %v3454
        %v3478 = vmul.f32 %v3445, %v3454
        %v3479 = vmul.f32 %v3446, %v3454
        %v3480 = vmul.f32 %v3447, %v3454
        %v3481 = vmul.f32 %v3448, %v3454
        %v3482 = vmul.f32 %v3449, %v3454
        %v3483 = vmul.f32 %v3450, %v3454
        %v3484 = vmul.f32 %v3451, %v3454
        %v3485 = vmul.f32 %v3452, %v3454
        %v3486 = vmul.f32 %v3453, %v3454
        %v3487 = vpack.c.bf16 %v3455, %v3455
        %v3488 = vpack.c.bf16 %v3456, %v3456
        %v3489 = vpack.c.bf16 %v3457, %v3457
        %v3490 = vpack.c.bf16 %v3458, %v3458
        %v3491 = vpack.c.bf16 %v3459, %v3459
        %v3492 = vpack.c.bf16 %v3460, %v3460
        %v3493 = vpack.c.bf16 %v3461, %v3461
        %v3494 = vpack.c.bf16 %v3462, %v3462
        %v3495 = vpack.c.bf16 %v3463, %v3463
        %v3496 = vpack.c.bf16 %v3464, %v3464
        %v3497 = vpack.c.bf16 %v3465, %v3465
        %v3498 = vpack.c.bf16 %v3466, %v3466
        %v3499 = vpack.c.bf16 %v3467, %v3467
        %v3500 = vpack.c.bf16 %v3468, %v3468
        %v3501 = vpack.c.bf16 %v3469, %v3469
        %v3502 = vpack.c.bf16 %v3470, %v3470
        %v3503 = vpack.c.bf16 %v3471, %v3471
        %v3504 = vpack.c.bf16 %v3472, %v3472
        %v3505 = vpack.c.bf16 %v3473, %v3473
        %v3506 = vpack.c.bf16 %v3474, %v3474
        %v3507 = vpack.c.bf16 %v3475, %v3475
        %v3508 = vpack.c.bf16 %v3476, %v3476
        %v3509 = vpack.c.bf16 %v3477, %v3477
        %v3510 = vpack.c.bf16 %v3478, %v3478
        %v3511 = vpack.c.bf16 %v3479, %v3479
        %v3512 = vpack.c.bf16 %v3480, %v3480
        %v3513 = vpack.c.bf16 %v3481, %v3481
        %v3514 = vpack.c.bf16 %v3482, %v3482
        %v3515 = vpack.c.bf16 %v3483, %v3483
        %v3516 = vpack.c.bf16 %v3484, %v3484
        %v3517 = vpack.c.bf16 %v3485, %v3485
        %v3518 = vpack.c.bf16 %v3486, %v3486
        %v3519 = vld [vmem:[%s9] sm:$0xf]
        %v3520 = vld [vmem:[%s9 + $0x4] sm:$0xf]
        %v3521 = vld [vmem:[%s9 + $0x8] sm:$0xf]
        %v3522 = vld [vmem:[%s9 + $0xc] sm:$0xf]
        %v3523 = vld [vmem:[%s9 + $0x10] sm:$0xf]
        %v3524 = vld [vmem:[%s9 + $0x14] sm:$0xf]
        %v3525 = vld [vmem:[%s9 + $0x18] sm:$0xf]
        %v3526 = vld [vmem:[%s9 + $0x1c] sm:$0xf]
        %v3527 = vld [vmem:[%s10] sm:$0x1]
        %v3529 = vperm.slane %v3527, 0
        %v3563 = vunpack.c.l.b16 %v3487
        %v3564 = vunpack.c.l.b16 %v3488
        %v3565 = vunpack.c.l.b16 %v3489
        %v3566 = vunpack.c.l.b16 %v3490
        %v3567 = vunpack.c.l.b16 %v3491
        %v3568 = vunpack.c.l.b16 %v3492
        %v3569 = vunpack.c.l.b16 %v3493
        %v3570 = vunpack.c.l.b16 %v3494
        %v3571 = vunpack.c.l.b16 %v3495
        %v3572 = vunpack.c.l.b16 %v3496
        %v3573 = vunpack.c.l.b16 %v3497
        %v3574 = vunpack.c.l.b16 %v3498
        %v3575 = vunpack.c.l.b16 %v3499
        %v3576 = vunpack.c.l.b16 %v3500
        %v3577 = vunpack.c.l.b16 %v3501
        %v3578 = vunpack.c.l.b16 %v3502
        %v3579 = vunpack.c.l.b16 %v3503
        %v3580 = vunpack.c.l.b16 %v3504
        %v3581 = vunpack.c.l.b16 %v3505
        %v3582 = vunpack.c.l.b16 %v3506
        %v3583 = vunpack.c.l.b16 %v3507
        %v3584 = vunpack.c.l.b16 %v3508
        %v3585 = vunpack.c.l.b16 %v3509
        %v3586 = vunpack.c.l.b16 %v3510
        %v3587 = vunpack.c.l.b16 %v3511
        %v3588 = vunpack.c.l.b16 %v3512
        %v3589 = vunpack.c.l.b16 %v3513
        %v3590 = vunpack.c.l.b16 %v3514
        %v3591 = vunpack.c.l.b16 %v3515
        %v3592 = vunpack.c.l.b16 %v3516
        %v3593 = vunpack.c.l.b16 %v3517
        %v3594 = vunpack.c.l.b16 %v3518
        %v3595 = vpack.c.b16 %v3564, %v3563
        %v3596 = vpack.c.b16 %v3566, %v3565
        %v3597 = vpack.c.b16 %v3568, %v3567
        %v3598 = vpack.c.b16 %v3570, %v3569
        %v3599 = vpack.c.b16 %v3572, %v3571
        %v3600 = vpack.c.b16 %v3574, %v3573
        %v3601 = vpack.c.b16 %v3576, %v3575
        %v3602 = vpack.c.b16 %v3578, %v3577
        %v3603 = vpack.c.b16 %v3580, %v3579
        %v3604 = vpack.c.b16 %v3582, %v3581
        %v3605 = vpack.c.b16 %v3584, %v3583
        %v3606 = vpack.c.b16 %v3586, %v3585
        %v3607 = vpack.c.b16 %v3588, %v3587
        %v3608 = vpack.c.b16 %v3590, %v3589
        %v3609 = vpack.c.b16 %v3592, %v3591
        %v3610 = vpack.c.b16 %v3594, %v3593
        %v3619 = vunpack.c.l.b16 %v3519
        %v3620 = vunpack.c.l.b16 %v3520
        %v3621 = vunpack.c.l.b16 %v3521
        %v3622 = vunpack.c.l.b16 %v3522
        %v3623 = vunpack.c.l.b16 %v3523
        %v3624 = vunpack.c.l.b16 %v3524
        %v3625 = vunpack.c.l.b16 %v3525
        %v3626 = vunpack.c.l.b16 %v3526
        %v3627 = vpack.c.b16 %v3620, %v3619
        %v3628 = vpack.c.b16 %v3622, %v3621
        %v3629 = vpack.c.b16 %v3624, %v3623
        %v3630 = vpack.c.b16 %v3626, %v3625
        %v3636 = vsel %vm3292, %v3595, 0
        %v3639 = vsel %vm3292, %v3596, 0
        %v3642 = vsel %vm3292, %v3597, 0
        %v3645 = vsel %vm3292, %v3598, 0
        %v3648 = vsel %vm3292, %v3599, 0
        %v3651 = vsel %vm3292, %v3600, 0
        %v3654 = vsel %vm3292, %v3601, 0
        %v3657 = vsel %vm3292, %v3602, 0
        %v3660 = vsel %vm3292, %v3603, 0
        %v3663 = vsel %vm3292, %v3604, 0
        %v3666 = vsel %vm3292, %v3605, 0
        %v3669 = vsel %vm3292, %v3606, 0
        %v3672 = vsel %vm3292, %v3607, 0
        %v3675 = vsel %vm3292, %v3608, 0
        %v3678 = vsel %vm3292, %v3609, 0
        %v3681 = vsel %vm3292, %v3610, 0
        %3683 = vmatpush.bf16.msra.mxu0 0
        %3684 = vmatpush.bf16.msra.mxu0 0
        %3685 = vmatpush.bf16.msra.mxu0 0
        %3686 = vmatpush.bf16.msra.mxu0 0
        %3687 = vmatpush.bf16.msra.mxu0 %v3630
        %3688 = vmatpush.bf16.msra.mxu0 %v3629
        %3689 = vmatpush.bf16.msra.mxu0 %v3628
        %3690 = vmatpush.bf16.msra.mxu0 %v3627
        %3691 = vmatmul.bf16.gmra.mxu0 %v3636
        %v3692 = vpop.f32.mrf.mxu0
        %v3693 = vadd.f32 %v3529, %v3692
        %v3694 = vpop.f32.mrf.mxu0
        %v3695 = vadd.f32 %v3529, %v3694
        %3696 = vmatmul.bf16.gmra.mxu0 %v3639
        %v3697 = vpop.f32.mrf.mxu0
        %v3698 = vadd.f32 %v3529, %v3697
        %v3699 = vpop.f32.mrf.mxu0
        %v3700 = vadd.f32 %v3529, %v3699
        %3701 = vmatmul.bf16.gmra.mxu0 %v3642
        %v3702 = vpop.f32.mrf.mxu0
        %v3703 = vadd.f32 %v3529, %v3702
        %v3704 = vpop.f32.mrf.mxu0
        %v3705 = vadd.f32 %v3529, %v3704
        %3706 = vmatmul.bf16.gmra.mxu0 %v3645
        %v3707 = vpop.f32.mrf.mxu0
        %v3708 = vadd.f32 %v3529, %v3707
        %v3709 = vpop.f32.mrf.mxu0
        %v3710 = vadd.f32 %v3529, %v3709
        %3711 = vmatmul.bf16.gmra.mxu0 %v3648
        %v3712 = vpop.f32.mrf.mxu0
        %v3713 = vadd.f32 %v3529, %v3712
        %v3714 = vpop.f32.mrf.mxu0
        %v3715 = vadd.f32 %v3529, %v3714
        %3716 = vmatmul.bf16.gmra.mxu0 %v3651
        %v3717 = vpop.f32.mrf.mxu0
        %v3718 = vadd.f32 %v3529, %v3717
        %v3719 = vpop.f32.mrf.mxu0
        %v3720 = vadd.f32 %v3529, %v3719
        %3721 = vmatmul.bf16.gmra.mxu0 %v3654
        %v3722 = vpop.f32.mrf.mxu0
        %v3723 = vadd.f32 %v3529, %v3722
        %v3724 = vpop.f32.mrf.mxu0
        %v3725 = vadd.f32 %v3529, %v3724
        %3726 = vmatmul.bf16.gmra.mxu0 %v3657
        %v3727 = vpop.f32.mrf.mxu0
        %v3728 = vadd.f32 %v3529, %v3727
        %v3729 = vpop.f32.mrf.mxu0
        %v3730 = vadd.f32 %v3529, %v3729
        %3731 = vmatmul.bf16.gmra.mxu0 %v3660
        %v3732 = vpop.f32.mrf.mxu0
        %v3733 = vadd.f32 %v3529, %v3732
        %v3734 = vpop.f32.mrf.mxu0
        %v3735 = vadd.f32 %v3529, %v3734
        %3736 = vmatmul.bf16.gmra.mxu0 %v3663
        %v3737 = vpop.f32.mrf.mxu0
        %v3738 = vadd.f32 %v3529, %v3737
        %v3739 = vpop.f32.mrf.mxu0
        %v3740 = vadd.f32 %v3529, %v3739
        %3741 = vmatmul.bf16.gmra.mxu0 %v3666
        %v3742 = vpop.f32.mrf.mxu0
        %v3743 = vadd.f32 %v3529, %v3742
        %v3744 = vpop.f32.mrf.mxu0
        %v3745 = vadd.f32 %v3529, %v3744
        %3746 = vmatmul.bf16.gmra.mxu0 %v3669
        %v3747 = vpop.f32.mrf.mxu0
        %v3748 = vadd.f32 %v3529, %v3747
        %v3749 = vpop.f32.mrf.mxu0
        %v3750 = vadd.f32 %v3529, %v3749
        %3751 = vmatmul.bf16.gmra.mxu0 %v3672
        %v3752 = vpop.f32.mrf.mxu0
        %v3753 = vadd.f32 %v3529, %v3752
        %v3754 = vpop.f32.mrf.mxu0
        %v3755 = vadd.f32 %v3529, %v3754
        %3756 = vmatmul.bf16.gmra.mxu0 %v3675
        %v3757 = vpop.f32.mrf.mxu0
        %v3758 = vadd.f32 %v3529, %v3757
        %v3759 = vpop.f32.mrf.mxu0
        %v3760 = vadd.f32 %v3529, %v3759
        %3761 = vmatmul.bf16.gmra.mxu0 %v3678
        %v3762 = vpop.f32.mrf.mxu0
        %v3763 = vadd.f32 %v3529, %v3762
        %v3764 = vpop.f32.mrf.mxu0
        %v3765 = vadd.f32 %v3529, %v3764
        %3766 = vmatmul.bf16.gmra.mxu0 %v3681
        %v3767 = vpop.f32.mrf.mxu0
        %v3768 = vadd.f32 %v3529, %v3767
        %v3769 = vpop.f32.mrf.mxu0
        %v3770 = vadd.f32 %v3529, %v3769
        %3771 = vdwg.mxu0
        %v3772 = vunpack.c.l.bf16 %v408
        %v3773 = vunpack.c.l.bf16 %v409
        %v3774 = vunpack.c.l.bf16 %v410
        %v3775 = vunpack.c.l.bf16 %v411
        %v3776 = vunpack.c.l.bf16 %v412
        %v3777 = vunpack.c.l.bf16 %v413
        %v3778 = vunpack.c.l.bf16 %v414
        %v3779 = vunpack.c.l.bf16 %v415
        %v3780 = vunpack.c.l.bf16 %v416
        %v3781 = vunpack.c.l.bf16 %v417
        %v3782 = vunpack.c.l.bf16 %v418
        %v3783 = vunpack.c.l.bf16 %v419
        %v3784 = vunpack.c.l.bf16 %v420
        %v3785 = vunpack.c.l.bf16 %v421
        %v3786 = vunpack.c.l.bf16 %v422
        %v3787 = vunpack.c.l.bf16 %v423
        %v3788 = vunpack.c.l.bf16 %v424
        %v3789 = vunpack.c.l.bf16 %v425
        %v3790 = vunpack.c.l.bf16 %v426
        %v3791 = vunpack.c.l.bf16 %v427
        %v3792 = vunpack.c.l.bf16 %v428
        %v3793 = vunpack.c.l.bf16 %v429
        %v3794 = vunpack.c.l.bf16 %v430
        %v3795 = vunpack.c.l.bf16 %v431
        %v3796 = vunpack.c.l.bf16 %v432
        %v3797 = vunpack.c.l.bf16 %v433
        %v3798 = vunpack.c.l.bf16 %v434
        %v3799 = vunpack.c.l.bf16 %v435
        %v3800 = vunpack.c.l.bf16 %v436
        %v3801 = vunpack.c.l.bf16 %v437
        %v3802 = vunpack.c.l.bf16 %v438
        %v3803 = vunpack.c.l.bf16 %v439
        %v3804 = vadd.f32 %v3693, %v3772
        %v3805 = vadd.f32 %v3695, %v3773
        %v3806 = vadd.f32 %v3698, %v3774
        %v3807 = vadd.f32 %v3700, %v3775
        %v3808 = vadd.f32 %v3703, %v3776
        %v3809 = vadd.f32 %v3705, %v3777
        %v3810 = vadd.f32 %v3708, %v3778
        %v3811 = vadd.f32 %v3710, %v3779
        %v3812 = vadd.f32 %v3713, %v3780
        %v3813 = vadd.f32 %v3715, %v3781
        %v3814 = vadd.f32 %v3718, %v3782
        %v3815 = vadd.f32 %v3720, %v3783
        %v3816 = vadd.f32 %v3723, %v3784
        %v3817 = vadd.f32 %v3725, %v3785
        %v3818 = vadd.f32 %v3728, %v3786
        %v3819 = vadd.f32 %v3730, %v3787
        %v3820 = vadd.f32 %v3733, %v3788
        %v3821 = vadd.f32 %v3735, %v3789
        %v3822 = vadd.f32 %v3738, %v3790
        %v3823 = vadd.f32 %v3740, %v3791
        %v3824 = vadd.f32 %v3743, %v3792
        %v3825 = vadd.f32 %v3745, %v3793
        %v3826 = vadd.f32 %v3748, %v3794
        %v3827 = vadd.f32 %v3750, %v3795
        %v3828 = vadd.f32 %v3753, %v3796
        %v3829 = vadd.f32 %v3755, %v3797
        %v3830 = vadd.f32 %v3758, %v3798
        %v3831 = vadd.f32 %v3760, %v3799
        %v3832 = vadd.f32 %v3763, %v3800
        %v3833 = vadd.f32 %v3765, %v3801
        %v3834 = vadd.f32 %v3768, %v3802
        %v3835 = vadd.f32 %v3770, %v3803
        %v3836 = vpack.c.bf16 %v3804, %v3804
        %v3837 = vpack.c.bf16 %v3805, %v3805
        %v3838 = vpack.c.bf16 %v3806, %v3806
        %v3839 = vpack.c.bf16 %v3807, %v3807
        %v3840 = vpack.c.bf16 %v3808, %v3808
        %v3841 = vpack.c.bf16 %v3809, %v3809
        %v3842 = vpack.c.bf16 %v3810, %v3810
        %v3843 = vpack.c.bf16 %v3811, %v3811
        %v3844 = vpack.c.bf16 %v3812, %v3812
        %v3845 = vpack.c.bf16 %v3813, %v3813
        %v3846 = vpack.c.bf16 %v3814, %v3814
        %v3847 = vpack.c.bf16 %v3815, %v3815
        %v3848 = vpack.c.bf16 %v3816, %v3816
        %v3849 = vpack.c.bf16 %v3817, %v3817
        %v3850 = vpack.c.bf16 %v3818, %v3818
        %v3851 = vpack.c.bf16 %v3819, %v3819
        %v3852 = vpack.c.bf16 %v3820, %v3820
        %v3853 = vpack.c.bf16 %v3821, %v3821
        %v3854 = vpack.c.bf16 %v3822, %v3822
        %v3855 = vpack.c.bf16 %v3823, %v3823
        %v3856 = vpack.c.bf16 %v3824, %v3824
        %v3857 = vpack.c.bf16 %v3825, %v3825
        %v3858 = vpack.c.bf16 %v3826, %v3826
        %v3859 = vpack.c.bf16 %v3827, %v3827
        %v3860 = vpack.c.bf16 %v3828, %v3828
        %v3861 = vpack.c.bf16 %v3829, %v3829
        %v3862 = vpack.c.bf16 %v3830, %v3830
        %v3863 = vpack.c.bf16 %v3831, %v3831
        %v3864 = vpack.c.bf16 %v3832, %v3832
        %v3865 = vpack.c.bf16 %v3833, %v3833
        %v3866 = vpack.c.bf16 %v3834, %v3834
        %v3867 = vpack.c.bf16 %v3835, %v3835
        %v3868 = vrot.slane %v3844, 4
        %vm3869 = vcmask 1047556
        %v3870 = vsel %vm3869, %v3868, %v3836
        %v3872 = vunpack.c.l.s4 1983009808
        %v3873 = vunpack.c.0.s8 %v3872
        %v3874 = vperm.slane %v3870, %v3873
        %v3875 = vrot.slane %v3848, 4
        %v3876 = vsel %vm3869, %v3875, %v3840
        %v3878 = vunpack.c.l.s4 1983009808
        %v3879 = vunpack.c.0.s8 %v3878
        %v3880 = vperm.slane %v3876, %v3879
        %v3881 = vrot.slane %v3880, 4
        %v3882 = vsel %vm3869, %v3881, %v3874
        %v3883 = vrot.slane %v3874, 4
        %v3884 = vsel %vm3869, %v3880, %v3883
        %v3886 = vunpack.c.l.s4 1934713408
        %v3887 = vunpack.c.0.s8 %v3886
        %v3888 = vperm.slane %v3882, %v3887
        %v3890 = vunpack.c.l.s4 1934713408
        %v3891 = vunpack.c.0.s8 %v3890
        %v3892 = vperm.slane %v3884, %v3891
        %v3893 = vrot.slane %v3888, 4
        %v3894 = vsel %vm3869, 0, %v3893
        %v3895 = vrot.slane %v3892, 4
        %v3896 = vsel %vm3869, 0, %v3895
        %v3897 = vrot.slane %v3846, 4
        %v3898 = vsel %vm3869, %v3897, %v3838
        %v3900 = vunpack.c.l.s4 1983009808
        %v3901 = vunpack.c.0.s8 %v3900
        %v3902 = vperm.slane %v3898, %v3901
        %v3903 = vrot.slane %v3850, 4
        %v3904 = vsel %vm3869, %v3903, %v3842
        %v3906 = vunpack.c.l.s4 1983009808
        %v3907 = vunpack.c.0.s8 %v3906
        %v3908 = vperm.slane %v3904, %v3907
        %v3909 = vrot.slane %v3908, 4
        %v3910 = vsel %vm3869, %v3909, %v3902
        %v3911 = vrot.slane %v3902, 4
        %v3912 = vsel %vm3869, %v3908, %v3911
        %v3914 = vunpack.c.l.s4 1934713408
        %v3915 = vunpack.c.0.s8 %v3914
        %v3916 = vperm.slane %v3910, %v3915
        %v3918 = vunpack.c.l.s4 1934713408
        %v3919 = vunpack.c.0.s8 %v3918
        %v3920 = vperm.slane %v3912, %v3919
        %v3921 = vrot.slane %v3916, 4
        %v3922 = vsel %vm3869, 0, %v3921
        %v3923 = vrot.slane %v3920, 4
        %v3924 = vsel %vm3869, 0, %v3923
        %v3925 = vrot.slane %v3860, 4
        %v3926 = vsel %vm3869, %v3925, %v3852
        %v3928 = vunpack.c.l.s4 1983009808
        %v3929 = vunpack.c.0.s8 %v3928
        %v3930 = vperm.slane %v3926, %v3929
        %v3931 = vrot.slane %v3864, 4
        %v3932 = vsel %vm3869, %v3931, %v3856
        %v3934 = vunpack.c.l.s4 1983009808
        %v3935 = vunpack.c.0.s8 %v3934
        %v3936 = vperm.slane %v3932, %v3935
        %v3937 = vrot.slane %v3936, 4
        %v3938 = vsel %vm3869, %v3937, %v3930
        %v3939 = vrot.slane %v3930, 4
        %v3940 = vsel %vm3869, %v3936, %v3939
        %v3942 = vunpack.c.l.s4 1934713408
        %v3943 = vunpack.c.0.s8 %v3942
        %v3944 = vperm.slane %v3938, %v3943
        %v3946 = vunpack.c.l.s4 1934713408
        %v3947 = vunpack.c.0.s8 %v3946
        %v3948 = vperm.slane %v3940, %v3947
        %v3949 = vrot.slane %v3944, 4
        %v3950 = vsel %vm3869, 0, %v3949
        %v3951 = vrot.slane %v3948, 4
        %v3952 = vsel %vm3869, 0, %v3951
        %v3953 = vrot.slane %v3862, 4
        %v3954 = vsel %vm3869, %v3953, %v3854
        %v3956 = vunpack.c.l.s4 1983009808
        %v3957 = vunpack.c.0.s8 %v3956
        %v3958 = vperm.slane %v3954, %v3957
        %v3959 = vrot.slane %v3866, 4
        %v3960 = vsel %vm3869, %v3959, %v3858
        %v3962 = vunpack.c.l.s4 1983009808
        %v3963 = vunpack.c.0.s8 %v3962
        %v3964 = vperm.slane %v3960, %v3963
        %v3965 = vrot.slane %v3964, 4
        %v3966 = vsel %vm3869, %v3965, %v3958
        %v3967 = vrot.slane %v3958, 4
        %v3968 = vsel %vm3869, %v3964, %v3967
        %v3970 = vunpack.c.l.s4 1934713408
        %v3971 = vunpack.c.0.s8 %v3970
        %v3972 = vperm.slane %v3966, %v3971
        %v3974 = vunpack.c.l.s4 1934713408
        %v3975 = vunpack.c.0.s8 %v3974
        %v3976 = vperm.slane %v3968, %v3975
        %v3977 = vrot.slane %v3972, 4
        %v3978 = vsel %vm3869, 0, %v3977
        %v3979 = vrot.slane %v3976, 4
        %v3980 = vsel %vm3869, 0, %v3979
        %v3981 = vrot.slane %v3845, 4
        %v3982 = vsel %vm3869, %v3981, %v3837
        %v3984 = vunpack.c.l.s4 1983009808
        %v3985 = vunpack.c.0.s8 %v3984
        %v3986 = vperm.slane %v3982, %v3985
        %v3987 = vrot.slane %v3849, 4
        %v3988 = vsel %vm3869, %v3987, %v3841
        %v3990 = vunpack.c.l.s4 1983009808
        %v3991 = vunpack.c.0.s8 %v3990
        %v3992 = vperm.slane %v3988, %v3991
        %v3993 = vrot.slane %v3992, 4
        %v3994 = vsel %vm3869, %v3993, %v3986
        %v3995 = vrot.slane %v3986, 4
        %v3996 = vsel %vm3869, %v3992, %v3995
        %v3998 = vunpack.c.l.s4 1934713408
        %v3999 = vunpack.c.0.s8 %v3998
        %v4000 = vperm.slane %v3994, %v3999
        %v4002 = vunpack.c.l.s4 1934713408
        %v4003 = vunpack.c.0.s8 %v4002
        %v4004 = vperm.slane %v3996, %v4003
        %v4005 = vrot.slane %v4000, 4
        %v4006 = vsel %vm3869, 0, %v4005
        %v4007 = vrot.slane %v4004, 4
        %v4008 = vsel %vm3869, 0, %v4007
        %v4009 = vrot.slane %v3847, 4
        %v4010 = vsel %vm3869, %v4009, %v3839
        %v4012 = vunpack.c.l.s4 1983009808
        %v4013 = vunpack.c.0.s8 %v4012
        %v4014 = vperm.slane %v4010, %v4013
        %v4015 = vrot.slane %v3851, 4
        %v4016 = vsel %vm3869, %v4015, %v3843
        %v4018 = vunpack.c.l.s4 1983009808
        %v4019 = vunpack.c.0.s8 %v4018
        %v4020 = vperm.slane %v4016, %v4019
        %v4021 = vrot.slane %v4020, 4
        %v4022 = vsel %vm3869, %v4021, %v4014
        %v4023 = vrot.slane %v4014, 4
        %v4024 = vsel %vm3869, %v4020, %v4023
        %v4026 = vunpack.c.l.s4 1934713408
        %v4027 = vunpack.c.0.s8 %v4026
        %v4028 = vperm.slane %v4022, %v4027
        %v4030 = vunpack.c.l.s4 1934713408
        %v4031 = vunpack.c.0.s8 %v4030
        %v4032 = vperm.slane %v4024, %v4031
        %v4033 = vrot.slane %v4028, 4
        %v4034 = vsel %vm3869, 0, %v4033
        %v4035 = vrot.slane %v4032, 4
        %v4036 = vsel %vm3869, 0, %v4035
        %v4037 = vrot.slane %v3861, 4
        %v4038 = vsel %vm3869, %v4037, %v3853
        %v4040 = vunpack.c.l.s4 1983009808
        %v4041 = vunpack.c.0.s8 %v4040
        %v4042 = vperm.slane %v4038, %v4041
        %v4043 = vrot.slane %v3865, 4
        %v4044 = vsel %vm3869, %v4043, %v3857
        %v4046 = vunpack.c.l.s4 1983009808
        %v4047 = vunpack.c.0.s8 %v4046
        %v4048 = vperm.slane %v4044, %v4047
        %v4049 = vrot.slane %v4048, 4
        %v4050 = vsel %vm3869, %v4049, %v4042
        %v4051 = vrot.slane %v4042, 4
        %v4052 = vsel %vm3869, %v4048, %v4051
        %v4054 = vunpack.c.l.s4 1934713408
        %v4055 = vunpack.c.0.s8 %v4054
        %v4056 = vperm.slane %v4050, %v4055
        %v4058 = vunpack.c.l.s4 1934713408
        %v4059 = vunpack.c.0.s8 %v4058
        %v4060 = vperm.slane %v4052, %v4059
        %v4061 = vrot.slane %v4056, 4
        %v4062 = vsel %vm3869, 0, %v4061
        %v4063 = vrot.slane %v4060, 4
        %v4064 = vsel %vm3869, 0, %v4063
        %v4065 = vrot.slane %v3863, 4
        %v4066 = vsel %vm3869, %v4065, %v3855
        %v4068 = vunpack.c.l.s4 1983009808
        %v4069 = vunpack.c.0.s8 %v4068
        %v4070 = vperm.slane %v4066, %v4069
        %v4071 = vrot.slane %v3867, 4
        %v4072 = vsel %vm3869, %v4071, %v3859
        %v4074 = vunpack.c.l.s4 1983009808
        %v4075 = vunpack.c.0.s8 %v4074
        %v4076 = vperm.slane %v4072, %v4075
        %v4077 = vrot.slane %v4076, 4
        %v4078 = vsel %vm3869, %v4077, %v4070
        %v4079 = vrot.slane %v4070, 4
        %v4080 = vsel %vm3869, %v4076, %v4079
        %v4082 = vunpack.c.l.s4 1934713408
        %v4083 = vunpack.c.0.s8 %v4082
        %v4084 = vperm.slane %v4078, %v4083
        %v4086 = vunpack.c.l.s4 1934713408
        %v4087 = vunpack.c.0.s8 %v4086
        %v4088 = vperm.slane %v4080, %v4087
        %v4089 = vrot.slane %v4084, 4
        %v4090 = vsel %vm3869, 0, %v4089
        %v4091 = vrot.slane %v4088, 4
        %v4092 = vsel %vm3869, 0, %v4091
        %v4095 = vpack.i.b16 %v3916, %v3888
        %v4096 = vshrl.u32 %v3888, 16
        %v4097 = vshrl.u32 %v3916, 16
        %v4098 = vpack.i.b16 %v4097, %v4096
        %v4101 = vpack.i.b16 %v3922, %v3894
        %v4102 = vshrl.u32 %v3894, 16
        %v4103 = vshrl.u32 %v3922, 16
        %v4104 = vpack.i.b16 %v4103, %v4102
        %v4107 = vpack.i.b16 %v3920, %v3892
        %v4108 = vshrl.u32 %v3892, 16
        %v4109 = vshrl.u32 %v3920, 16
        %v4110 = vpack.i.b16 %v4109, %v4108
        %v4113 = vpack.i.b16 %v3924, %v3896
        %v4114 = vshrl.u32 %v3896, 16
        %v4115 = vshrl.u32 %v3924, 16
        %v4116 = vpack.i.b16 %v4115, %v4114
        %v4119 = vpack.i.b16 %v4028, %v4000
        %v4120 = vshrl.u32 %v4000, 16
        %v4121 = vshrl.u32 %v4028, 16
        %v4122 = vpack.i.b16 %v4121, %v4120
        %v4125 = vpack.i.b16 %v4034, %v4006
        %v4126 = vshrl.u32 %v4006, 16
        %v4127 = vshrl.u32 %v4034, 16
        %v4128 = vpack.i.b16 %v4127, %v4126
        %v4131 = vpack.i.b16 %v4032, %v4004
        %v4132 = vshrl.u32 %v4004, 16
        %v4133 = vshrl.u32 %v4032, 16
        %v4134 = vpack.i.b16 %v4133, %v4132
        %v4137 = vpack.i.b16 %v4036, %v4008
        %v4138 = vshrl.u32 %v4008, 16
        %v4139 = vshrl.u32 %v4036, 16
        %v4140 = vpack.i.b16 %v4139, %v4138
        %v4143 = vpack.i.b16 %v3972, %v3944
        %v4144 = vshrl.u32 %v3944, 16
        %v4145 = vshrl.u32 %v3972, 16
        %v4146 = vpack.i.b16 %v4145, %v4144
        %v4149 = vpack.i.b16 %v3978, %v3950
        %v4150 = vshrl.u32 %v3950, 16
        %v4151 = vshrl.u32 %v3978, 16
        %v4152 = vpack.i.b16 %v4151, %v4150
        %v4155 = vpack.i.b16 %v3976, %v3948
        %v4156 = vshrl.u32 %v3948, 16
        %v4157 = vshrl.u32 %v3976, 16
        %v4158 = vpack.i.b16 %v4157, %v4156
        %v4161 = vpack.i.b16 %v3980, %v3952
        %v4162 = vshrl.u32 %v3952, 16
        %v4163 = vshrl.u32 %v3980, 16
        %v4164 = vpack.i.b16 %v4163, %v4162
        %v4167 = vpack.i.b16 %v4084, %v4056
        %v4168 = vshrl.u32 %v4056, 16
        %v4169 = vshrl.u32 %v4084, 16
        %v4170 = vpack.i.b16 %v4169, %v4168
        %v4173 = vpack.i.b16 %v4090, %v4062
        %v4174 = vshrl.u32 %v4062, 16
        %v4175 = vshrl.u32 %v4090, 16
        %v4176 = vpack.i.b16 %v4175, %v4174
        %v4179 = vpack.i.b16 %v4088, %v4060
        %v4180 = vshrl.u32 %v4060, 16
        %v4181 = vshrl.u32 %v4088, 16
        %v4182 = vpack.i.b16 %v4181, %v4180
        %v4185 = vpack.i.b16 %v4092, %v4064
        %v4186 = vshrl.u32 %v4064, 16
        %v4187 = vshrl.u32 %v4092, 16
        %v4188 = vpack.i.b16 %v4187, %v4186
        %v4189 = vunpack.c.l.b16 %v4095
        %v4190 = vunpack.c.l.b16 %v4143
        %v4191 = vpack.c.b16 %v4190, %v4189
        %v4192 = vunpack.c.l.b16 %v4098
        %v4193 = vunpack.c.l.b16 %v4146
        %v4194 = vpack.c.b16 %v4193, %v4192
        %4195 = vrot.lane.b32.xlu0 %v4194, 16
        %v4196 = vpop.permute.xlu0 %4195
        %v4197 = vunpack.c.l.b16 %v4101
        %v4198 = vunpack.c.l.b16 %v4149
        %v4199 = vpack.c.b16 %v4198, %v4197
        %4200 = vrot.lane.b32.xlu0 %v4199, 32
        %v4201 = vpop.permute.xlu0 %4200
        %v4202 = vunpack.c.l.b16 %v4104
        %v4203 = vunpack.c.l.b16 %v4152
        %v4204 = vpack.c.b16 %v4203, %v4202
        %4205 = vrot.lane.b32.xlu0 %v4204, 48
        %v4206 = vpop.permute.xlu0 %4205
        %v4207 = vunpack.c.l.b16 %v4107
        %v4208 = vunpack.c.l.b16 %v4155
        %v4209 = vpack.c.b16 %v4208, %v4207
        %4210 = vrot.lane.b32.xlu0 %v4209, 64
        %v4211 = vpop.permute.xlu0 %4210
        %v4212 = vunpack.c.l.b16 %v4110
        %v4213 = vunpack.c.l.b16 %v4158
        %v4214 = vpack.c.b16 %v4213, %v4212
        %4215 = vrot.lane.b32.xlu0 %v4214, 80
        %v4216 = vpop.permute.xlu0 %4215
        %v4217 = vunpack.c.l.b16 %v4113
        %v4218 = vunpack.c.l.b16 %v4161
        %v4219 = vpack.c.b16 %v4218, %v4217
        %4220 = vrot.lane.b32.xlu0 %v4219, 96
        %v4221 = vpop.permute.xlu0 %4220
        %v4222 = vunpack.c.l.b16 %v4116
        %v4223 = vunpack.c.l.b16 %v4164
        %v4224 = vpack.c.b16 %v4223, %v4222
        %4225 = vrot.lane.b32.xlu0 %v4224, 112
        %v4226 = vpop.permute.xlu0 %4225
        %v4227 = vunpack.c.l.b16 %v4119
        %v4228 = vunpack.c.l.b16 %v4167
        %v4229 = vpack.c.b16 %v4228, %v4227
        %v4230 = vunpack.c.l.b16 %v4122
        %v4231 = vunpack.c.l.b16 %v4170
        %v4232 = vpack.c.b16 %v4231, %v4230
        %4233 = vrot.lane.b32.xlu0 %v4232, 16
        %v4234 = vpop.permute.xlu0 %4233
        %v4235 = vunpack.c.l.b16 %v4125
        %v4236 = vunpack.c.l.b16 %v4173
        %v4237 = vpack.c.b16 %v4236, %v4235
        %4238 = vrot.lane.b32.xlu0 %v4237, 32
        %v4239 = vpop.permute.xlu0 %4238
        %v4240 = vunpack.c.l.b16 %v4128
        %v4241 = vunpack.c.l.b16 %v4176
        %v4242 = vpack.c.b16 %v4241, %v4240
        %4243 = vrot.lane.b32.xlu0 %v4242, 48
        %v4244 = vpop.permute.xlu0 %4243
        %v4245 = vunpack.c.l.b16 %v4131
        %v4246 = vunpack.c.l.b16 %v4179
        %v4247 = vpack.c.b16 %v4246, %v4245
        %4248 = vrot.lane.b32.xlu0 %v4247, 64
        %v4249 = vpop.permute.xlu0 %4248
        %v4250 = vunpack.c.l.b16 %v4134
        %v4251 = vunpack.c.l.b16 %v4182
        %v4252 = vpack.c.b16 %v4251, %v4250
        %4253 = vrot.lane.b32.xlu0 %v4252, 80
        %v4254 = vpop.permute.xlu0 %4253
        %v4255 = vunpack.c.l.b16 %v4137
        %v4256 = vunpack.c.l.b16 %v4185
        %v4257 = vpack.c.b16 %v4256, %v4255
        %4258 = vrot.lane.b32.xlu0 %v4257, 96
        %v4259 = vpop.permute.xlu0 %4258
        %v4260 = vunpack.c.l.b16 %v4140
        %v4261 = vunpack.c.l.b16 %v4188
        %v4262 = vpack.c.b16 %v4261, %v4260
        %4263 = vrot.lane.b32.xlu0 %v4262, 112
        %v4264 = vpop.permute.xlu0 %4263
        %v4267 = vsel %vm532, %v4191, %v4196
        %vm4268 = vcmask 261120
        %v4270 = vsel %vm4268, %v4267, %v4201
        %vm4271 = vcmask 392192
        %v4273 = vsel %vm4271, %v4270, %v4206
        %v4275 = vsel %vm3292, %v4273, %v4211
        %vm4276 = vcmask 654336
        %v4278 = vsel %vm4276, %v4275, %v4216
        %vm4279 = vcmask 785408
        %v4281 = vsel %vm4279, %v4278, %v4221
        %vm4282 = vcmask 916480
        %v4284 = vsel %vm4282, %v4281, %v4226
        %v4287 = vsel %vm532, %v4229, %v4234
        %v4289 = vsel %vm4268, %v4287, %v4239
        %v4291 = vsel %vm4271, %v4289, %v4244
        %v4293 = vsel %vm3292, %v4291, %v4249
        %v4295 = vsel %vm4276, %v4293, %v4254
        %v4297 = vsel %vm4279, %v4295, %v4259
        %v4299 = vsel %vm4282, %v4297, %v4264
        %v4302 = vunpack.c.l.b16 %v4284
        %v4303 = vunpack.c.l.b16 %v4299
        %v4304 = vunpack.c.h.b16 %v4284
        %v4305 = vunpack.c.h.b16 %v4299
        %v4306 = vpack.c.b16 %v4303, %v4302
        %v4307 = vpack.c.b16 %v4305, %v4304
        %4310 = vst [vmem:[%s406] sm:$0xff] %v4306
        %4311 = vst [vmem:[%s406 + $0x8] sm:$0xff] %v4307
        %s4312 = sand.u32 %s272, 1
        %s4313 = scalar_lea.sflag [#allocation7], %s4312
        %s4314 = sand.u32 %s272, 1
        %s4315 = smul.addr %s4314, 16
        %s4316 = scalar_lea.vmem [#allocation8], %s4315
        // Predicated region
        $region76: #{tpu_custom_call.1} parent=63 // pred_check
          %p4317 = pneg %p282
        $region77: #{tpu_custom_call.1} parent=63 // pred_check_branch
          %4319 = sbr.rel (%p4317) target = $region79
        $region78: #{tpu_custom_call.1} parent=63 // pred_region
          %4321 = vsyncadd %s4313, 0
          %s4322 = smul.addr %s28, 4
          %s4323 = smul.addr %s4322, 4
          %s4324 = scalar_lea.hbm %s11, %s4323
          %s4325 = sshll.u32 %s4316, 4
          %s4326 = int_to_ptr.vmem [resolvable:$true] %s4325
          %s4327 = sshll.u32 %s4324, 4
          %s4328 = int_to_ptr.hbm [resolvable:$true] %s4327
          %4333 = dma.vmem_to_hbm [thread:$0]  %s4326, 256, %s4328, %s4313, 128, 128, 8
        $region79: #{tpu_custom_call.1} parent=63 // pred_fallthru
          _
      $region64: #{tpu_custom_call.1} parent=5 // pred_fallthru
        _
      %p4334 = scmp.le.s32.totalorder 2, %s23
      // Predicated region
      $region80: #{tpu_custom_call.1} parent=5 // pred_check
        %p4335 = pneg %p4334
      $region81: #{tpu_custom_call.1} parent=5 // pred_check_branch
        %4337 = sbr.rel (%p4335) target = $region83
      $region82: #{tpu_custom_call.1} parent=5 // pred_region
        %s4338 = ssub.s32 %s23, 2
        // Predicated region
        $region84: #{tpu_custom_call.1} parent=82 // pred_check
          %p4339 = pneg %p288
        $region85: #{tpu_custom_call.1} parent=82 // pred_check_branch
          %4341 = sbr.rel (%p4339) target = $region87
        $region86: #{tpu_custom_call.1} parent=82 // pred_region
          %s4342 = sand.u32 %s273, 1
          %s4343 = scalar_lea.sflag [#allocation7], %s4342
          %s4344 = sand.u32 %s273, 1
          %s4345 = smul.addr %s4344, 16
          %s4346 = scalar_lea.vmem [#allocation8], %s4345
          %4348 = dma.done %s4343, 256
        $region87: #{tpu_custom_call.1} parent=82 // pred_fallthru
          _
      $region83: #{tpu_custom_call.1} parent=5 // pred_fallthru
        _
    $region6: #{tpu_custom_call.1} parent=1 // loop_footer
      %s27 = sadd.s32 1, %s23
    $region7: #{tpu_custom_call.1} parent=1 // loop_footer_branch
      %22 = sbr.rel target = $region3
    $region8: #{tpu_custom_call.1} parent=1 // loop_exit
      _
    %4349 = vsyncpa [#allocation6], 1
    %s4350 = scalar_lea.sflag [#allocation6], 1
    %4351 = vsyncpa %s4350, 1
    %4352 = vsyncpa [#allocation7], 1
    %s4353 = scalar_lea.sflag [#allocation7], 1
    %4354 = vsyncpa %s4353, 1

</llo_original>
